<compile_context>
chip_gen: v5e
topology: v5e:2x2
jax: 0.10.0
libtpu: 0.0.40
codegen_flags: <defaults>
</compile_context>

<pallas_src>
import functools
import numpy as np

import jax
import jax.numpy as jnp
from jax.experimental import pallas as pl
from jax.experimental.pallas import tpu as pltpu

C = 80          # channels (BatchNorm1d(80))
L_FUSED = 40    # Linear(40, 20) input length
L_OUT = 20      # Linear output length == noisy_phase length
N_LAYERS = 6
KSIZE = 5
PAD = 2
BN_EPS = 1e-5


def _round_up(x, m):
    return (x + m - 1) // m * m


def _build_tap_mask(batch, n_pad):
    """(KSIZE*C, n_pad) f32 validity mask, row block k belongs to conv tap k.

    Column j is valid for tap k iff j is inside the real (non-padded) region AND the
    shifted source column j + (k - PAD) stays inside the SAME length-40 batch segment
    (this also kills the circular wrap of pltpu.roll and any padded-lane leakage).
    """
    col = np.arange(n_pad)
    seg_l = col % L_FUSED
    real = col < batch * L_FUSED
    rows = []
    for k in range(KSIZE):
        src = seg_l + (k - PAD)
        ok = real & (src >= 0) & (src < L_FUSED)
        rows.append(np.repeat(ok[None, :].astype(np.float32), C, axis=0))
    return jnp.asarray(np.concatenate(rows, axis=0))


def phase_subnet_kernel(fused_ref, noisy_ref, wflat_ref, pblk_ref, pbias_ref,
                        mask_ref, out_ref, stack_ref, *, batch):
    """Single grid-less invocation, everything resident in VMEM (~1.4 MB at B=2).

    fused_ref : (80, n_pad)  f32  lane-packed, zero-padded cat([clean_magn, noisy_phase])
    noisy_ref : (80, m_pad)  f32  lane-packed, zero-padded noisy_phase
    wflat_ref : (6, 80, 400) f32  conv weights flattened as [o, k*80 + c]
    pblk_ref  : (n_pad, m_pad) f32 block-diag Linear(40,20) weight (zero lane padding)
    pbias_ref : (1, m_pad)   f32  Linear bias tiled per batch (zero lane padding)
    mask_ref  : (400, n_pad) f32  precomputed per-tap boundary masks
    out_ref   : (80, m_pad)  f32  lane-packed normalized clean_phase
    stack_ref : (400, n_pad) f32  persistent VMEM scratch for the stacked conv taps
    """
    n_layers = wflat_ref.shape[0]
    n_pad = fused_ref.shape[1]
    inv_cnt = 1.0 / float(batch * L_FUSED)

    x = fused_ref[...]                        # (80, n_pad); padded lanes are 0, stay 0

    for i in range(n_layers):
        # --- ReLU ---
        h = jnp.maximum(x, 0.0)

        # --- BatchNorm1d(80), training-mode batch stats.  Both row reductions
        #     (sum, sum of squares) fused into ONE cross-lane reduce; zero padded
        #     lanes contribute nothing so inv_cnt over the real count is exact. ---
        stats = jnp.sum(jnp.concatenate([h, h * h], axis=0),
                        axis=1, keepdims=True) * inv_cnt          # (160, 1)
        mean = stats[:C]                                          # (80, 1)
        var = jnp.maximum(stats[C:] - mean * mean, 0.0)           # clamp cancellation
        hn = (h - mean) * jax.lax.rsqrt(var + BN_EPS)             # (80, n_pad)

        # --- stack the 5 conv taps into the persistent VMEM scratch:
        #     one lane rotate (pltpu.roll == jnp.roll semantics) + one precomputed
        #     boundary mask per tap, aligned sublane-slice stores. ---
        for k in range(KSIZE):
            if k == PAD:
                rolled = hn
            else:
                shift = (PAD - k) % n_pad     # non-negative; wrap is masked out anyway
                rolled = pltpu.roll(hn, shift, axis=1)
            stack_ref[k * C:(k + 1) * C, :] = rolled * mask_ref[k * C:(k + 1) * C, :]

        # --- Conv1d(80, 80, k=5, pad=2, bias=False) as ONE MXU matmul + residual ---
        x = x + jnp.dot(wflat_ref[i], stack_ref[...],
                        preferred_element_type=jnp.float32)       # (80, n_pad)

    # --- Linear(40, 20) (block-diag over batch), add noisy_phase, L2-normalize over
    #     channels.  Real columns have sumsq > 0 so they follow torch's eps-free
    #     division exactly; the guard only keeps the zero padded lanes (sliced off in
    #     the wrapper) NaN-free. ---
    proj = jnp.dot(x, pblk_ref[...],
                   preferred_element_type=jnp.float32) + pbias_ref[...]   # (80, m_pad)
    cp = proj + noisy_ref[...]
    sumsq = jnp.sum(cp * cp, axis=0, keepdims=True)                       # (1, m_pad)
    out_ref[...] = cp * jax.lax.rsqrt(jnp.where(sumsq > 0.0, sumsq, 1.0))


def phase_subnet_forward(noisy_phase, clean_magn, params):
    # glue: concat + batch packing + lane padding + weight reshapes stay in XLA
    B = noisy_phase.shape[0]
    n_real, m_real = B * L_FUSED, B * L_OUT
    n_pad, m_pad = _round_up(n_real, 128), _round_up(m_real, 128)

    fused = jnp.concatenate([clean_magn, noisy_phase], axis=-1)            # (B, 80, 40)
    fused_p = jnp.transpose(fused, (1, 0, 2)).reshape(C, n_real)
    fused_p = jnp.pad(fused_p, ((0, 0), (0, n_pad - n_real)))              # (80, n_pad)
    noisy_p = jnp.transpose(noisy_phase, (1, 0, 2)).reshape(C, m_real)
    noisy_p = jnp.pad(noisy_p, ((0, 0), (0, m_pad - m_real)))              # (80, m_pad)

    w_flat = params["conv_w_flat"]                                         # (6, 80, 400)

    # block-diagonal projection: [b*40+l, b*20+m] = proj_w[m, l]; zero lane padding.
    # TODO(synk): O(B^2) in size -- for large per-call batch switch to a batch-chunk
    #             grid with a per-chunk projection (and two-phase BN stats for v7x's
    #             two TensorCores).  Fine at the small batches exercised here.
    p_blk = jnp.kron(jnp.eye(B, dtype=jnp.float32), params["proj_w"].T)    # (B*40, B*20)
    p_blk = jnp.pad(p_blk, ((0, n_pad - n_real), (0, m_pad - m_real)))     # (n_pad, m_pad)
    p_bias = jnp.tile(params["proj_b"], (B,)).reshape(1, m_real)
    p_bias = jnp.pad(p_bias, ((0, 0), (0, m_pad - m_real)))                # (1, m_pad)

    tap_mask = _build_tap_mask(B, n_pad)                                   # (400, n_pad)

    kernel = functools.partial(phase_subnet_kernel, batch=B)
    out_p = pl.pallas_call(
        kernel,
        out_shape=jax.ShapeDtypeStruct((C, m_pad), jnp.float32),
        in_specs=[pl.BlockSpec(memory_space=pltpu.MemorySpace.VMEM)] * 6,
        out_specs=pl.BlockSpec(memory_space=pltpu.MemorySpace.VMEM),
        scratch_shapes=[pltpu.VMEM((KSIZE * C, n_pad), jnp.float32)],
        compiler_params=pltpu.CompilerParams(vmem_limit_bytes=32 * 1024 * 1024),
    )(fused_p, noisy_p, w_flat, p_blk, p_bias, tap_mask)

    out_p = out_p[:, :m_real]                                              # drop lane pad
    return jnp.transpose(out_p.reshape(C, B, L_OUT), (1, 0, 2))            # (B, 80, 20)


# ----------------------- pure-JAX reference (for validation) -----------------------
def phase_subnet_reference(noisy_phase, clean_magn, params):
    conv_w = params["conv_w_ock"]    # (6, 80, 80, 5)  torch layout (out, in, k)
    proj_w = params["proj_w"]        # (20, 40)
    proj_b = params["proj_b"]        # (20,)

    x = jnp.concatenate([clean_magn, noisy_phase], axis=-1)                # (B, 80, 40)
    for i in range(N_LAYERS):
        h = jnp.maximum(x, 0.0)
        mean = jnp.mean(h, axis=(0, 2), keepdims=True)
        var = jnp.mean(jnp.square(h - mean), axis=(0, 2), keepdims=True)
        hn = (h - mean) / jnp.sqrt(var + BN_EPS)
        hp = jnp.pad(hn, ((0, 0), (0, 0), (PAD, PAD)))
        out = jnp.zeros_like(x)
        for k in range(KSIZE):
            out = out + jnp.einsum("oc,bcl->bol", conv_w[i, :, :, k],
                                   hp[:, :, k:k + L_FUSED],
                                   precision=jax.lax.Precision.HIGHEST)
        x = out + x
    pr = jnp.einsum("bcl,ml->bcm", x, proj_w,
                    precision=jax.lax.Precision.HIGHEST) + proj_b
    cp = pr + noisy_phase
    nrm = jnp.sqrt(jnp.sum(cp * cp, axis=1, keepdims=True))
    return cp / nrm


# ----------------------------- deterministic parameters -----------------------------
def init_params(key):
    k_conv, k_pw, k_pb = jax.random.split(key, 3)
    # Conv1d weights: kaiming normal, mode='fan_out' (fan_out = out_ch * k = 400)
    std = np.sqrt(2.0 / (C * KSIZE))
    conv_w_ock = jax.random.normal(k_conv, (N_LAYERS, C, C, KSIZE), jnp.float32) * std
    # Linear(40, 20): PyTorch default uniform(-1/sqrt(in), 1/sqrt(in))
    bound = 1.0 / np.sqrt(L_FUSED)
    proj_w = jax.random.uniform(k_pw, (L_OUT, L_FUSED), jnp.float32, -bound, bound)
    proj_b = jax.random.uniform(k_pb, (L_OUT,), jnp.float32, -bound, bound)
    # flatten conv weights for the stacked single-matmul form: [layer, o, k*80 + c]
    conv_w_flat = jnp.transpose(conv_w_ock, (0, 1, 3, 2)).reshape(N_LAYERS, C, KSIZE * C)
    return {
        "conv_w_ock": conv_w_ock,        # torch layout (for reference impl)
        "conv_w_flat": conv_w_flat,      # (6, 80, 400)  kernel layout
        "proj_w": proj_w,                # (20, 40)
        "proj_b": proj_b,                # (20,)
    }


if __name__ == "__main__":
    key = jax.random.PRNGKey(0)
    kp, kn, km = jax.random.split(key, 3)
    params = init_params(kp)

    B = 2
    noisy_phase = jax.random.normal(kn, (B, C, L_OUT), jnp.float32)          # (2, 80, 20)
    clean_magn = jnp.abs(jax.random.normal(km, (B, C, L_OUT), jnp.float32))  # (2, 80, 20)

    fwd = jax.jit(phase_subnet_forward)
    out = jax.block_until_ready(fwd(noisy_phase, clean_magn, params))
    ref = jax.block_until_ready(phase_subnet_reference(noisy_phase, clean_magn, params))

    assert out.shape == (B, C, L_OUT)
    assert bool(jnp.all(jnp.isfinite(out)))
    # channel-wise unit norm by construction
    np.testing.assert_allclose(np.asarray(jnp.sum(out * out, axis=1)), 1.0, atol=2e-3)
    np.testing.assert_allclose(np.asarray(out), np.asarray(ref), atol=1e-2, rtol=1e-2)

    print("KERNEL_OK")
</pallas_src>

<mosaic_0001>
module attributes {stable_mosaic.version = 11 : i64} {
  func.func @phase_subnet_kernel(%arg0: memref<80x128xf32, #tpu.memory_space<vmem>>, %arg1: memref<80x128xf32, #tpu.memory_space<vmem>>, %arg2: memref<6x80x400xf32, #tpu.memory_space<vmem>>, %arg3: memref<128x128xf32, #tpu.memory_space<vmem>>, %arg4: memref<1x128xf32, #tpu.memory_space<vmem>>, %arg5: memref<400x128xf32, #tpu.memory_space<vmem>>, %arg6: memref<80x128xf32, #tpu.memory_space<vmem>>, %arg7: memref<400x128xf32, #tpu.memory_space<vmem>>) attributes {dimension_semantics = [], scalar_prefetch = 0 : i64, scratch_operands = 1 : i64, tpu.core_type = #tpu.core_type<tc>} {
    %c0 = arith.constant 0 : index
    %c0_0 = arith.constant 0 : index
    %0 = vector.load %arg0[%c0, %c0_0] : memref<80x128xf32, #tpu.memory_space<vmem>>, vector<80x128xf32>
    %cst = arith.constant 0.000000e+00 : f32
    %1 = vector.broadcast %cst : f32 to vector<80x128xf32>
    %2 = arith.maximumf %0, %1 : vector<80x128xf32>
    %3 = arith.mulf %2, %2 : vector<80x128xf32>
    %4 = tpu.concatenate %2, %3 in 0 : vector<80x128xf32>, vector<80x128xf32> -> vector<160x128xf32>
    %cst_1 = arith.constant dense<0.000000e+00> : vector<160xf32>
    %5 = vector.multi_reduction <add>, %4, %cst_1 [1] : vector<160x128xf32> to vector<160xf32>
    %6 = vector.shape_cast %5 : vector<160xf32> to vector<160x1xf32>
    %cst_2 = arith.constant 1.250000e-02 : f32
    %7 = vector.broadcast %cst_2 : f32 to vector<160x1xf32>
    %8 = arith.mulf %6, %7 : vector<160x1xf32>
    %9 = vector.extract_strided_slice %8 {offsets = [0, 0], sizes = [80, 1], strides = [1, 1]} : vector<160x1xf32> to vector<80x1xf32>
    %10 = vector.extract_strided_slice %8 {offsets = [80, 0], sizes = [80, 1], strides = [1, 1]} : vector<160x1xf32> to vector<80x1xf32>
    %11 = arith.mulf %9, %9 : vector<80x1xf32>
    %12 = arith.subf %10, %11 : vector<80x1xf32>
    %cst_3 = arith.constant 0.000000e+00 : f32
    %13 = vector.broadcast %cst_3 : f32 to vector<80x1xf32>
    %14 = arith.maximumf %12, %13 : vector<80x1xf32>
    %15 = vector.broadcast %9 : vector<80x1xf32> to vector<80x128xf32>
    %16 = arith.subf %2, %15 : vector<80x128xf32>
    %cst_4 = arith.constant 9.99999974E-6 : f32
    %17 = vector.broadcast %cst_4 : f32 to vector<80x1xf32>
    %18 = arith.addf %14, %17 : vector<80x1xf32>
    %19 = math.rsqrt %18 : vector<80x1xf32>
    %20 = vector.broadcast %19 : vector<80x1xf32> to vector<80x128xf32>
    %21 = arith.mulf %16, %20 : vector<80x128xf32>
    %c2_i32 = arith.constant 2 : i32
    %22 = tpu.dynamic_rotate %21 by %c2_i32 dim 1 : vector<80x128xf32>, i32 -> vector<80x128xf32>
    %c0_5 = arith.constant 0 : index
    %c0_6 = arith.constant 0 : index
    %23 = vector.load %arg5[%c0_5, %c0_6] : memref<400x128xf32, #tpu.memory_space<vmem>>, vector<80x128xf32>
    %24 = arith.mulf %22, %23 : vector<80x128xf32>
    %c0_7 = arith.constant 0 : index
    %c0_8 = arith.constant 0 : index
    %25 = vector.load %arg7[%c0_7, %c0_8] : memref<400x128xf32, #tpu.memory_space<vmem>>, vector<80x128xf32>
    tpu.vector_store %arg7[%c0_7, %c0_8], %24 {strides = array<i32>} : memref<400x128xf32, #tpu.memory_space<vmem>>, vector<80x128xf32>,
    %c1_i32 = arith.constant 1 : i32
    %26 = tpu.dynamic_rotate %21 by %c1_i32 dim 1 : vector<80x128xf32>, i32 -> vector<80x128xf32>
    %c80 = arith.constant 80 : index
    %c0_9 = arith.constant 0 : index
    %27 = vector.load %arg5[%c80, %c0_9] : memref<400x128xf32, #tpu.memory_space<vmem>>, vector<80x128xf32>
    %28 = arith.mulf %26, %27 : vector<80x128xf32>
    %c80_10 = arith.constant 80 : index
    %c0_11 = arith.constant 0 : index
    %29 = vector.load %arg7[%c80_10, %c0_11] : memref<400x128xf32, #tpu.memory_space<vmem>>, vector<80x128xf32>
    tpu.vector_store %arg7[%c80_10, %c0_11], %28 {strides = array<i32>} : memref<400x128xf32, #tpu.memory_space<vmem>>, vector<80x128xf32>,
    %c160 = arith.constant 160 : index
    %c0_12 = arith.constant 0 : index
    %30 = vector.load %arg5[%c160, %c0_12] : memref<400x128xf32, #tpu.memory_space<vmem>>, vector<80x128xf32>
    %31 = arith.mulf %21, %30 : vector<80x128xf32>
    %c160_13 = arith.constant 160 : index
    %c0_14 = arith.constant 0 : index
    %32 = vector.load %arg7[%c160_13, %c0_14] : memref<400x128xf32, #tpu.memory_space<vmem>>, vector<80x128xf32>
    tpu.vector_store %arg7[%c160_13, %c0_14], %31 {strides = array<i32>} : memref<400x128xf32, #tpu.memory_space<vmem>>, vector<80x128xf32>,
    %c127_i32 = arith.constant 127 : i32
    %33 = tpu.dynamic_rotate %21 by %c127_i32 dim 1 : vector<80x128xf32>, i32 -> vector<80x128xf32>
    %c240 = arith.constant 240 : index
    %c0_15 = arith.constant 0 : index
    %34 = vector.load %arg5[%c240, %c0_15] : memref<400x128xf32, #tpu.memory_space<vmem>>, vector<80x128xf32>
    %35 = arith.mulf %33, %34 : vector<80x128xf32>
    %c240_16 = arith.constant 240 : index
    %c0_17 = arith.constant 0 : index
    %36 = vector.load %arg7[%c240_16, %c0_17] : memref<400x128xf32, #tpu.memory_space<vmem>>, vector<80x128xf32>
    tpu.vector_store %arg7[%c240_16, %c0_17], %35 {strides = array<i32>} : memref<400x128xf32, #tpu.memory_space<vmem>>, vector<80x128xf32>,
    %c126_i32 = arith.constant 126 : i32
    %37 = tpu.dynamic_rotate %21 by %c126_i32 dim 1 : vector<80x128xf32>, i32 -> vector<80x128xf32>
    %c320 = arith.constant 320 : index
    %c0_18 = arith.constant 0 : index
    %38 = vector.load %arg5[%c320, %c0_18] : memref<400x128xf32, #tpu.memory_space<vmem>>, vector<80x128xf32>
    %39 = arith.mulf %37, %38 : vector<80x128xf32>
    %c320_19 = arith.constant 320 : index
    %c0_20 = arith.constant 0 : index
    %40 = vector.load %arg7[%c320_19, %c0_20] : memref<400x128xf32, #tpu.memory_space<vmem>>, vector<80x128xf32>
    tpu.vector_store %arg7[%c320_19, %c0_20], %39 {strides = array<i32>} : memref<400x128xf32, #tpu.memory_space<vmem>>, vector<80x128xf32>,
    %c0_21 = arith.constant 0 : index
    %c0_22 = arith.constant 0 : index
    %c0_23 = arith.constant 0 : index
    %41 = vector.load %arg2[%c0_21, %c0_22, %c0_23] : memref<6x80x400xf32, #tpu.memory_space<vmem>>, vector<1x80x400xf32>
    %42 = vector.shape_cast %41 : vector<1x80x400xf32> to vector<80x400xf32>
    %c0_24 = arith.constant 0 : index
    %c0_25 = arith.constant 0 : index
    %43 = vector.load %arg7[%c0_24, %c0_25] : memref<400x128xf32, #tpu.memory_space<vmem>>, vector<400x128xf32>
    %cst_26 = arith.constant dense<0.000000e+00> : vector<80x128xf32>
    %44 = tpu.matmul %42, %43, %cst_26 {dimension_numbers = #tpu.dot_dimension_numbers<[1], [0], [0], [1], [0, 0, 1, 1], [], []>} : vector<80x400xf32>, vector<400x128xf32>, vector<80x128xf32> -> vector<80x128xf32>
    %45 = arith.addf %0, %44 : vector<80x128xf32>
    %cst_27 = arith.constant 0.000000e+00 : f32
    %46 = vector.broadcast %cst_27 : f32 to vector<80x128xf32>
    %47 = arith.maximumf %45, %46 : vector<80x128xf32>
    %48 = arith.mulf %47, %47 : vector<80x128xf32>
    %49 = tpu.concatenate %47, %48 in 0 : vector<80x128xf32>, vector<80x128xf32> -> vector<160x128xf32>
    %cst_28 = arith.constant dense<0.000000e+00> : vector<160xf32>
    %50 = vector.multi_reduction <add>, %49, %cst_28 [1] : vector<160x128xf32> to vector<160xf32>
    %51 = vector.shape_cast %50 : vector<160xf32> to vector<160x1xf32>
    %cst_29 = arith.constant 1.250000e-02 : f32
    %52 = vector.broadcast %cst_29 : f32 to vector<160x1xf32>
    %53 = arith.mulf %51, %52 : vector<160x1xf32>
    %54 = vector.extract_strided_slice %53 {offsets = [0, 0], sizes = [80, 1], strides = [1, 1]} : vector<160x1xf32> to vector<80x1xf32>
    %55 = vector.extract_strided_slice %53 {offsets = [80, 0], sizes = [80, 1], strides = [1, 1]} : vector<160x1xf32> to vector<80x1xf32>
    %56 = arith.mulf %54, %54 : vector<80x1xf32>
    %57 = arith.subf %55, %56 : vector<80x1xf32>
    %cst_30 = arith.constant 0.000000e+00 : f32
    %58 = vector.broadcast %cst_30 : f32 to vector<80x1xf32>
    %59 = arith.maximumf %57, %58 : vector<80x1xf32>
    %60 = vector.broadcast %54 : vector<80x1xf32> to vector<80x128xf32>
    %61 = arith.subf %47, %60 : vector<80x128xf32>
    %cst_31 = arith.constant 9.99999974E-6 : f32
    %62 = vector.broadcast %cst_31 : f32 to vector<80x1xf32>
    %63 = arith.addf %59, %62 : vector<80x1xf32>
    %64 = math.rsqrt %63 : vector<80x1xf32>
    %65 = vector.broadcast %64 : vector<80x1xf32> to vector<80x128xf32>
    %66 = arith.mulf %61, %65 : vector<80x128xf32>
    %c2_i32_32 = arith.constant 2 : i32
    %67 = tpu.dynamic_rotate %66 by %c2_i32_32 dim 1 : vector<80x128xf32>, i32 -> vector<80x128xf32>
    %c0_33 = arith.constant 0 : index
    %c0_34 = arith.constant 0 : index
    %68 = vector.load %arg5[%c0_33, %c0_34] : memref<400x128xf32, #tpu.memory_space<vmem>>, vector<80x128xf32>
    %69 = arith.mulf %67, %68 : vector<80x128xf32>
    %c0_35 = arith.constant 0 : index
    %c0_36 = arith.constant 0 : index
    %70 = vector.load %arg7[%c0_35, %c0_36] : memref<400x128xf32, #tpu.memory_space<vmem>>, vector<80x128xf32>
    tpu.vector_store %arg7[%c0_35, %c0_36], %69 {strides = array<i32>} : memref<400x128xf32, #tpu.memory_space<vmem>>, vector<80x128xf32>,
    %c1_i32_37 = arith.constant 1 : i32
    %71 = tpu.dynamic_rotate %66 by %c1_i32_37 dim 1 : vector<80x128xf32>, i32 -> vector<80x128xf32>
    %c80_38 = arith.constant 80 : index
    %c0_39 = arith.constant 0 : index
    %72 = vector.load %arg5[%c80_38, %c0_39] : memref<400x128xf32, #tpu.memory_space<vmem>>, vector<80x128xf32>
    %73 = arith.mulf %71, %72 : vector<80x128xf32>
    %c80_40 = arith.constant 80 : index
    %c0_41 = arith.constant 0 : index
    %74 = vector.load %arg7[%c80_40, %c0_41] : memref<400x128xf32, #tpu.memory_space<vmem>>, vector<80x128xf32>
    tpu.vector_store %arg7[%c80_40, %c0_41], %73 {strides = array<i32>} : memref<400x128xf32, #tpu.memory_space<vmem>>, vector<80x128xf32>,
    %c160_42 = arith.constant 160 : index
    %c0_43 = arith.constant 0 : index
    %75 = vector.load %arg5[%c160_42, %c0_43] : memref<400x128xf32, #tpu.memory_space<vmem>>, vector<80x128xf32>
    %76 = arith.mulf %66, %75 : vector<80x128xf32>
    %c160_44 = arith.constant 160 : index
    %c0_45 = arith.constant 0 : index
    %77 = vector.load %arg7[%c160_44, %c0_45] : memref<400x128xf32, #tpu.memory_space<vmem>>, vector<80x128xf32>
    tpu.vector_store %arg7[%c160_44, %c0_45], %76 {strides = array<i32>} : memref<400x128xf32, #tpu.memory_space<vmem>>, vector<80x128xf32>,
    %c127_i32_46 = arith.constant 127 : i32
    %78 = tpu.dynamic_rotate %66 by %c127_i32_46 dim 1 : vector<80x128xf32>, i32 -> vector<80x128xf32>
    %c240_47 = arith.constant 240 : index
    %c0_48 = arith.constant 0 : index
    %79 = vector.load %arg5[%c240_47, %c0_48] : memref<400x128xf32, #tpu.memory_space<vmem>>, vector<80x128xf32>
    %80 = arith.mulf %78, %79 : vector<80x128xf32>
    %c240_49 = arith.constant 240 : index
    %c0_50 = arith.constant 0 : index
    %81 = vector.load %arg7[%c240_49, %c0_50] : memref<400x128xf32, #tpu.memory_space<vmem>>, vector<80x128xf32>
    tpu.vector_store %arg7[%c240_49, %c0_50], %80 {strides = array<i32>} : memref<400x128xf32, #tpu.memory_space<vmem>>, vector<80x128xf32>,
    %c126_i32_51 = arith.constant 126 : i32
    %82 = tpu.dynamic_rotate %66 by %c126_i32_51 dim 1 : vector<80x128xf32>, i32 -> vector<80x128xf32>
    %c320_52 = arith.constant 320 : index
    %c0_53 = arith.constant 0 : index
    %83 = vector.load %arg5[%c320_52, %c0_53] : memref<400x128xf32, #tpu.memory_space<vmem>>, vector<80x128xf32>
    %84 = arith.mulf %82, %83 : vector<80x128xf32>
    %c320_54 = arith.constant 320 : index
    %c0_55 = arith.constant 0 : index
    %85 = vector.load %arg7[%c320_54, %c0_55] : memref<400x128xf32, #tpu.memory_space<vmem>>, vector<80x128xf32>
    tpu.vector_store %arg7[%c320_54, %c0_55], %84 {strides = array<i32>} : memref<400x128xf32, #tpu.memory_space<vmem>>, vector<80x128xf32>,
    %c1 = arith.constant 1 : index
    %c0_56 = arith.constant 0 : index
    %c0_57 = arith.constant 0 : index
    %86 = vector.load %arg2[%c1, %c0_56, %c0_57] : memref<6x80x400xf32, #tpu.memory_space<vmem>>, vector<1x80x400xf32>
    %87 = vector.shape_cast %86 : vector<1x80x400xf32> to vector<80x400xf32>
    %c0_58 = arith.constant 0 : index
    %c0_59 = arith.constant 0 : index
    %88 = vector.load %arg7[%c0_58, %c0_59] : memref<400x128xf32, #tpu.memory_space<vmem>>, vector<400x128xf32>
    %cst_60 = arith.constant dense<0.000000e+00> : vector<80x128xf32>
    %89 = tpu.matmul %87, %88, %cst_60 {dimension_numbers = #tpu.dot_dimension_numbers<[1], [0], [0], [1], [0, 0, 1, 1], [], []>} : vector<80x400xf32>, vector<400x128xf32>, vector<80x128xf32> -> vector<80x128xf32>
    %90 = arith.addf %45, %89 : vector<80x128xf32>
    %cst_61 = arith.constant 0.000000e+00 : f32
    %91 = vector.broadcast %cst_61 : f32 to vector<80x128xf32>
    %92 = arith.maximumf %90, %91 : vector<80x128xf32>
    %93 = arith.mulf %92, %92 : vector<80x128xf32>
    %94 = tpu.concatenate %92, %93 in 0 : vector<80x128xf32>, vector<80x128xf32> -> vector<160x128xf32>
    %cst_62 = arith.constant dense<0.000000e+00> : vector<160xf32>
    %95 = vector.multi_reduction <add>, %94, %cst_62 [1] : vector<160x128xf32> to vector<160xf32>
    %96 = vector.shape_cast %95 : vector<160xf32> to vector<160x1xf32>
    %cst_63 = arith.constant 1.250000e-02 : f32
    %97 = vector.broadcast %cst_63 : f32 to vector<160x1xf32>
    %98 = arith.mulf %96, %97 : vector<160x1xf32>
    %99 = vector.extract_strided_slice %98 {offsets = [0, 0], sizes = [80, 1], strides = [1, 1]} : vector<160x1xf32> to vector<80x1xf32>
    %100 = vector.extract_strided_slice %98 {offsets = [80, 0], sizes = [80, 1], strides = [1, 1]} : vector<160x1xf32> to vector<80x1xf32>
    %101 = arith.mulf %99, %99 : vector<80x1xf32>
    %102 = arith.subf %100, %101 : vector<80x1xf32>
    %cst_64 = arith.constant 0.000000e+00 : f32
    %103 = vector.broadcast %cst_64 : f32 to vector<80x1xf32>
    %104 = arith.maximumf %102, %103 : vector<80x1xf32>
    %105 = vector.broadcast %99 : vector<80x1xf32> to vector<80x128xf32>
    %106 = arith.subf %92, %105 : vector<80x128xf32>
    %cst_65 = arith.constant 9.99999974E-6 : f32
    %107 = vector.broadcast %cst_65 : f32 to vector<80x1xf32>
    %108 = arith.addf %104, %107 : vector<80x1xf32>
    %109 = math.rsqrt %108 : vector<80x1xf32>
    %110 = vector.broadcast %109 : vector<80x1xf32> to vector<80x128xf32>
    %111 = arith.mulf %106, %110 : vector<80x128xf32>
    %c2_i32_66 = arith.constant 2 : i32
    %112 = tpu.dynamic_rotate %111 by %c2_i32_66 dim 1 : vector<80x128xf32>, i32 -> vector<80x128xf32>
    %c0_67 = arith.constant 0 : index
    %c0_68 = arith.constant 0 : index
    %113 = vector.load %arg5[%c0_67, %c0_68] : memref<400x128xf32, #tpu.memory_space<vmem>>, vector<80x128xf32>
    %114 = arith.mulf %112, %113 : vector<80x128xf32>
    %c0_69 = arith.constant 0 : index
    %c0_70 = arith.constant 0 : index
    %115 = vector.load %arg7[%c0_69, %c0_70] : memref<400x128xf32, #tpu.memory_space<vmem>>, vector<80x128xf32>
    tpu.vector_store %arg7[%c0_69, %c0_70], %114 {strides = array<i32>} : memref<400x128xf32, #tpu.memory_space<vmem>>, vector<80x128xf32>,
    %c1_i32_71 = arith.constant 1 : i32
    %116 = tpu.dynamic_rotate %111 by %c1_i32_71 dim 1 : vector<80x128xf32>, i32 -> vector<80x128xf32>
    %c80_72 = arith.constant 80 : index
    %c0_73 = arith.constant 0 : index
    %117 = vector.load %arg5[%c80_72, %c0_73] : memref<400x128xf32, #tpu.memory_space<vmem>>, vector<80x128xf32>
    %118 = arith.mulf %116, %117 : vector<80x128xf32>
    %c80_74 = arith.constant 80 : index
    %c0_75 = arith.constant 0 : index
    %119 = vector.load %arg7[%c80_74, %c0_75] : memref<400x128xf32, #tpu.memory_space<vmem>>, vector<80x128xf32>
    tpu.vector_store %arg7[%c80_74, %c0_75], %118 {strides = array<i32>} : memref<400x128xf32, #tpu.memory_space<vmem>>, vector<80x128xf32>,
    %c160_76 = arith.constant 160 : index
    %c0_77 = arith.constant 0 : index
    %120 = vector.load %arg5[%c160_76, %c0_77] : memref<400x128xf32, #tpu.memory_space<vmem>>, vector<80x128xf32>
    %121 = arith.mulf %111, %120 : vector<80x128xf32>
    %c160_78 = arith.constant 160 : index
    %c0_79 = arith.constant 0 : index
    %122 = vector.load %arg7[%c160_78, %c0_79] : memref<400x128xf32, #tpu.memory_space<vmem>>, vector<80x128xf32>
    tpu.vector_store %arg7[%c160_78, %c0_79], %121 {strides = array<i32>} : memref<400x128xf32, #tpu.memory_space<vmem>>, vector<80x128xf32>,
    %c127_i32_80 = arith.constant 127 : i32
    %123 = tpu.dynamic_rotate %111 by %c127_i32_80 dim 1 : vector<80x128xf32>, i32 -> vector<80x128xf32>
    %c240_81 = arith.constant 240 : index
    %c0_82 = arith.constant 0 : index
    %124 = vector.load %arg5[%c240_81, %c0_82] : memref<400x128xf32, #tpu.memory_space<vmem>>, vector<80x128xf32>
    %125 = arith.mulf %123, %124 : vector<80x128xf32>
    %c240_83 = arith.constant 240 : index
    %c0_84 = arith.constant 0 : index
    %126 = vector.load %arg7[%c240_83, %c0_84] : memref<400x128xf32, #tpu.memory_space<vmem>>, vector<80x128xf32>
    tpu.vector_store %arg7[%c240_83, %c0_84], %125 {strides = array<i32>} : memref<400x128xf32, #tpu.memory_space<vmem>>, vector<80x128xf32>,
    %c126_i32_85 = arith.constant 126 : i32
    %127 = tpu.dynamic_rotate %111 by %c126_i32_85 dim 1 : vector<80x128xf32>, i32 -> vector<80x128xf32>
    %c320_86 = arith.constant 320 : index
    %c0_87 = arith.constant 0 : index
    %128 = vector.load %arg5[%c320_86, %c0_87] : memref<400x128xf32, #tpu.memory_space<vmem>>, vector<80x128xf32>
    %129 = arith.mulf %127, %128 : vector<80x128xf32>
    %c320_88 = arith.constant 320 : index
    %c0_89 = arith.constant 0 : index
    %130 = vector.load %arg7[%c320_88, %c0_89] : memref<400x128xf32, #tpu.memory_space<vmem>>, vector<80x128xf32>
    tpu.vector_store %arg7[%c320_88, %c0_89], %129 {strides = array<i32>} : memref<400x128xf32, #tpu.memory_space<vmem>>, vector<80x128xf32>,
    %c2 = arith.constant 2 : index
    %c0_90 = arith.constant 0 : index
    %c0_91 = arith.constant 0 : index
    %131 = vector.load %arg2[%c2, %c0_90, %c0_91] : memref<6x80x400xf32, #tpu.memory_space<vmem>>, vector<1x80x400xf32>
    %132 = vector.shape_cast %131 : vector<1x80x400xf32> to vector<80x400xf32>
    %c0_92 = arith.constant 0 : index
    %c0_93 = arith.constant 0 : index
    %133 = vector.load %arg7[%c0_92, %c0_93] : memref<400x128xf32, #tpu.memory_space<vmem>>, vector<400x128xf32>
    %cst_94 = arith.constant dense<0.000000e+00> : vector<80x128xf32>
    %134 = tpu.matmul %132, %133, %cst_94 {dimension_numbers = #tpu.dot_dimension_numbers<[1], [0], [0], [1], [0, 0, 1, 1], [], []>} : vector<80x400xf32>, vector<400x128xf32>, vector<80x128xf32> -> vector<80x128xf32>
    %135 = arith.addf %90, %134 : vector<80x128xf32>
    %cst_95 = arith.constant 0.000000e+00 : f32
    %136 = vector.broadcast %cst_95 : f32 to vector<80x128xf32>
    %137 = arith.maximumf %135, %136 : vector<80x128xf32>
    %138 = arith.mulf %137, %137 : vector<80x128xf32>
    %139 = tpu.concatenate %137, %138 in 0 : vector<80x128xf32>, vector<80x128xf32> -> vector<160x128xf32>
    %cst_96 = arith.constant dense<0.000000e+00> : vector<160xf32>
    %140 = vector.multi_reduction <add>, %139, %cst_96 [1] : vector<160x128xf32> to vector<160xf32>
    %141 = vector.shape_cast %140 : vector<160xf32> to vector<160x1xf32>
    %cst_97 = arith.constant 1.250000e-02 : f32
    %142 = vector.broadcast %cst_97 : f32 to vector<160x1xf32>
    %143 = arith.mulf %141, %142 : vector<160x1xf32>
    %144 = vector.extract_strided_slice %143 {offsets = [0, 0], sizes = [80, 1], strides = [1, 1]} : vector<160x1xf32> to vector<80x1xf32>
    %145 = vector.extract_strided_slice %143 {offsets = [80, 0], sizes = [80, 1], strides = [1, 1]} : vector<160x1xf32> to vector<80x1xf32>
    %146 = arith.mulf %144, %144 : vector<80x1xf32>
    %147 = arith.subf %145, %146 : vector<80x1xf32>
    %cst_98 = arith.constant 0.000000e+00 : f32
    %148 = vector.broadcast %cst_98 : f32 to vector<80x1xf32>
    %149 = arith.maximumf %147, %148 : vector<80x1xf32>
    %150 = vector.broadcast %144 : vector<80x1xf32> to vector<80x128xf32>
    %151 = arith.subf %137, %150 : vector<80x128xf32>
    %cst_99 = arith.constant 9.99999974E-6 : f32
    %152 = vector.broadcast %cst_99 : f32 to vector<80x1xf32>
    %153 = arith.addf %149, %152 : vector<80x1xf32>
    %154 = math.rsqrt %153 : vector<80x1xf32>
    %155 = vector.broadcast %154 : vector<80x1xf32> to vector<80x128xf32>
    %156 = arith.mulf %151, %155 : vector<80x128xf32>
    %c2_i32_100 = arith.constant 2 : i32
    %157 = tpu.dynamic_rotate %156 by %c2_i32_100 dim 1 : vector<80x128xf32>, i32 -> vector<80x128xf32>
    %c0_101 = arith.constant 0 : index
    %c0_102 = arith.constant 0 : index
    %158 = vector.load %arg5[%c0_101, %c0_102] : memref<400x128xf32, #tpu.memory_space<vmem>>, vector<80x128xf32>
    %159 = arith.mulf %157, %158 : vector<80x128xf32>
    %c0_103 = arith.constant 0 : index
    %c0_104 = arith.constant 0 : index
    %160 = vector.load %arg7[%c0_103, %c0_104] : memref<400x128xf32, #tpu.memory_space<vmem>>, vector<80x128xf32>
    tpu.vector_store %arg7[%c0_103, %c0_104], %159 {strides = array<i32>} : memref<400x128xf32, #tpu.memory_space<vmem>>, vector<80x128xf32>,
    %c1_i32_105 = arith.constant 1 : i32
    %161 = tpu.dynamic_rotate %156 by %c1_i32_105 dim 1 : vector<80x128xf32>, i32 -> vector<80x128xf32>
    %c80_106 = arith.constant 80 : index
    %c0_107 = arith.constant 0 : index
    %162 = vector.load %arg5[%c80_106, %c0_107] : memref<400x128xf32, #tpu.memory_space<vmem>>, vector<80x128xf32>
    %163 = arith.mulf %161, %162 : vector<80x128xf32>
    %c80_108 = arith.constant 80 : index
    %c0_109 = arith.constant 0 : index
    %164 = vector.load %arg7[%c80_108, %c0_109] : memref<400x128xf32, #tpu.memory_space<vmem>>, vector<80x128xf32>
    tpu.vector_store %arg7[%c80_108, %c0_109], %163 {strides = array<i32>} : memref<400x128xf32, #tpu.memory_space<vmem>>, vector<80x128xf32>,
    %c160_110 = arith.constant 160 : index
    %c0_111 = arith.constant 0 : index
    %165 = vector.load %arg5[%c160_110, %c0_111] : memref<400x128xf32, #tpu.memory_space<vmem>>, vector<80x128xf32>
    %166 = arith.mulf %156, %165 : vector<80x128xf32>
    %c160_112 = arith.constant 160 : index
    %c0_113 = arith.constant 0 : index
    %167 = vector.load %arg7[%c160_112, %c0_113] : memref<400x128xf32, #tpu.memory_space<vmem>>, vector<80x128xf32>
    tpu.vector_store %arg7[%c160_112, %c0_113], %166 {strides = array<i32>} : memref<400x128xf32, #tpu.memory_space<vmem>>, vector<80x128xf32>,
    %c127_i32_114 = arith.constant 127 : i32
    %168 = tpu.dynamic_rotate %156 by %c127_i32_114 dim 1 : vector<80x128xf32>, i32 -> vector<80x128xf32>
    %c240_115 = arith.constant 240 : index
    %c0_116 = arith.constant 0 : index
    %169 = vector.load %arg5[%c240_115, %c0_116] : memref<400x128xf32, #tpu.memory_space<vmem>>, vector<80x128xf32>
    %170 = arith.mulf %168, %169 : vector<80x128xf32>
    %c240_117 = arith.constant 240 : index
    %c0_118 = arith.constant 0 : index
    %171 = vector.load %arg7[%c240_117, %c0_118] : memref<400x128xf32, #tpu.memory_space<vmem>>, vector<80x128xf32>
    tpu.vector_store %arg7[%c240_117, %c0_118], %170 {strides = array<i32>} : memref<400x128xf32, #tpu.memory_space<vmem>>, vector<80x128xf32>,
    %c126_i32_119 = arith.constant 126 : i32
    %172 = tpu.dynamic_rotate %156 by %c126_i32_119 dim 1 : vector<80x128xf32>, i32 -> vector<80x128xf32>
    %c320_120 = arith.constant 320 : index
    %c0_121 = arith.constant 0 : index
    %173 = vector.load %arg5[%c320_120, %c0_121] : memref<400x128xf32, #tpu.memory_space<vmem>>, vector<80x128xf32>
    %174 = arith.mulf %172, %173 : vector<80x128xf32>
    %c320_122 = arith.constant 320 : index
    %c0_123 = arith.constant 0 : index
    %175 = vector.load %arg7[%c320_122, %c0_123] : memref<400x128xf32, #tpu.memory_space<vmem>>, vector<80x128xf32>
    tpu.vector_store %arg7[%c320_122, %c0_123], %174 {strides = array<i32>} : memref<400x128xf32, #tpu.memory_space<vmem>>, vector<80x128xf32>,
    %c3 = arith.constant 3 : index
    %c0_124 = arith.constant 0 : index
    %c0_125 = arith.constant 0 : index
    %176 = vector.load %arg2[%c3, %c0_124, %c0_125] : memref<6x80x400xf32, #tpu.memory_space<vmem>>, vector<1x80x400xf32>
    %177 = vector.shape_cast %176 : vector<1x80x400xf32> to vector<80x400xf32>
    %c0_126 = arith.constant 0 : index
    %c0_127 = arith.constant 0 : index
    %178 = vector.load %arg7[%c0_126, %c0_127] : memref<400x128xf32, #tpu.memory_space<vmem>>, vector<400x128xf32>
    %cst_128 = arith.constant dense<0.000000e+00> : vector<80x128xf32>
    %179 = tpu.matmul %177, %178, %cst_128 {dimension_numbers = #tpu.dot_dimension_numbers<[1], [0], [0], [1], [0, 0, 1, 1], [], []>} : vector<80x400xf32>, vector<400x128xf32>, vector<80x128xf32> -> vector<80x128xf32>
    %180 = arith.addf %135, %179 : vector<80x128xf32>
    %cst_129 = arith.constant 0.000000e+00 : f32
    %181 = vector.broadcast %cst_129 : f32 to vector<80x128xf32>
    %182 = arith.maximumf %180, %181 : vector<80x128xf32>
    %183 = arith.mulf %182, %182 : vector<80x128xf32>
    %184 = tpu.concatenate %182, %183 in 0 : vector<80x128xf32>, vector<80x128xf32> -> vector<160x128xf32>
    %cst_130 = arith.constant dense<0.000000e+00> : vector<160xf32>
    %185 = vector.multi_reduction <add>, %184, %cst_130 [1] : vector<160x128xf32> to vector<160xf32>
    %186 = vector.shape_cast %185 : vector<160xf32> to vector<160x1xf32>
    %cst_131 = arith.constant 1.250000e-02 : f32
    %187 = vector.broadcast %cst_131 : f32 to vector<160x1xf32>
    %188 = arith.mulf %186, %187 : vector<160x1xf32>
    %189 = vector.extract_strided_slice %188 {offsets = [0, 0], sizes = [80, 1], strides = [1, 1]} : vector<160x1xf32> to vector<80x1xf32>
    %190 = vector.extract_strided_slice %188 {offsets = [80, 0], sizes = [80, 1], strides = [1, 1]} : vector<160x1xf32> to vector<80x1xf32>
    %191 = arith.mulf %189, %189 : vector<80x1xf32>
    %192 = arith.subf %190, %191 : vector<80x1xf32>
    %cst_132 = arith.constant 0.000000e+00 : f32
    %193 = vector.broadcast %cst_132 : f32 to vector<80x1xf32>
    %194 = arith.maximumf %192, %193 : vector<80x1xf32>
    %195 = vector.broadcast %189 : vector<80x1xf32> to vector<80x128xf32>
    %196 = arith.subf %182, %195 : vector<80x128xf32>
    %cst_133 = arith.constant 9.99999974E-6 : f32
    %197 = vector.broadcast %cst_133 : f32 to vector<80x1xf32>
    %198 = arith.addf %194, %197 : vector<80x1xf32>
    %199 = math.rsqrt %198 : vector<80x1xf32>
    %200 = vector.broadcast %199 : vector<80x1xf32> to vector<80x128xf32>
    %201 = arith.mulf %196, %200 : vector<80x128xf32>
    %c2_i32_134 = arith.constant 2 : i32
    %202 = tpu.dynamic_rotate %201 by %c2_i32_134 dim 1 : vector<80x128xf32>, i32 -> vector<80x128xf32>
    %c0_135 = arith.constant 0 : index
    %c0_136 = arith.constant 0 : index
    %203 = vector.load %arg5[%c0_135, %c0_136] : memref<400x128xf32, #tpu.memory_space<vmem>>, vector<80x128xf32>
    %204 = arith.mulf %202, %203 : vector<80x128xf32>
    %c0_137 = arith.constant 0 : index
    %c0_138 = arith.constant 0 : index
    %205 = vector.load %arg7[%c0_137, %c0_138] : memref<400x128xf32, #tpu.memory_space<vmem>>, vector<80x128xf32>
    tpu.vector_store %arg7[%c0_137, %c0_138], %204 {strides = array<i32>} : memref<400x128xf32, #tpu.memory_space<vmem>>, vector<80x128xf32>,
    %c1_i32_139 = arith.constant 1 : i32
    %206 = tpu.dynamic_rotate %201 by %c1_i32_139 dim 1 : vector<80x128xf32>, i32 -> vector<80x128xf32>
    %c80_140 = arith.constant 80 : index
    %c0_141 = arith.constant 0 : index
    %207 = vector.load %arg5[%c80_140, %c0_141] : memref<400x128xf32, #tpu.memory_space<vmem>>, vector<80x128xf32>
    %208 = arith.mulf %206, %207 : vector<80x128xf32>
    %c80_142 = arith.constant 80 : index
    %c0_143 = arith.constant 0 : index
    %209 = vector.load %arg7[%c80_142, %c0_143] : memref<400x128xf32, #tpu.memory_space<vmem>>, vector<80x128xf32>
    tpu.vector_store %arg7[%c80_142, %c0_143], %208 {strides = array<i32>} : memref<400x128xf32, #tpu.memory_space<vmem>>, vector<80x128xf32>,
    %c160_144 = arith.constant 160 : index
    %c0_145 = arith.constant 0 : index
    %210 = vector.load %arg5[%c160_144, %c0_145] : memref<400x128xf32, #tpu.memory_space<vmem>>, vector<80x128xf32>
    %211 = arith.mulf %201, %210 : vector<80x128xf32>
    %c160_146 = arith.constant 160 : index
    %c0_147 = arith.constant 0 : index
    %212 = vector.load %arg7[%c160_146, %c0_147] : memref<400x128xf32, #tpu.memory_space<vmem>>, vector<80x128xf32>
    tpu.vector_store %arg7[%c160_146, %c0_147], %211 {strides = array<i32>} : memref<400x128xf32, #tpu.memory_space<vmem>>, vector<80x128xf32>,
    %c127_i32_148 = arith.constant 127 : i32
    %213 = tpu.dynamic_rotate %201 by %c127_i32_148 dim 1 : vector<80x128xf32>, i32 -> vector<80x128xf32>
    %c240_149 = arith.constant 240 : index
    %c0_150 = arith.constant 0 : index
    %214 = vector.load %arg5[%c240_149, %c0_150] : memref<400x128xf32, #tpu.memory_space<vmem>>, vector<80x128xf32>
    %215 = arith.mulf %213, %214 : vector<80x128xf32>
    %c240_151 = arith.constant 240 : index
    %c0_152 = arith.constant 0 : index
    %216 = vector.load %arg7[%c240_151, %c0_152] : memref<400x128xf32, #tpu.memory_space<vmem>>, vector<80x128xf32>
    tpu.vector_store %arg7[%c240_151, %c0_152], %215 {strides = array<i32>} : memref<400x128xf32, #tpu.memory_space<vmem>>, vector<80x128xf32>,
    %c126_i32_153 = arith.constant 126 : i32
    %217 = tpu.dynamic_rotate %201 by %c126_i32_153 dim 1 : vector<80x128xf32>, i32 -> vector<80x128xf32>
    %c320_154 = arith.constant 320 : index
    %c0_155 = arith.constant 0 : index
    %218 = vector.load %arg5[%c320_154, %c0_155] : memref<400x128xf32, #tpu.memory_space<vmem>>, vector<80x128xf32>
    %219 = arith.mulf %217, %218 : vector<80x128xf32>
    %c320_156 = arith.constant 320 : index
    %c0_157 = arith.constant 0 : index
    %220 = vector.load %arg7[%c320_156, %c0_157] : memref<400x128xf32, #tpu.memory_space<vmem>>, vector<80x128xf32>
    tpu.vector_store %arg7[%c320_156, %c0_157], %219 {strides = array<i32>} : memref<400x128xf32, #tpu.memory_space<vmem>>, vector<80x128xf32>,
    %c4 = arith.constant 4 : index
    %c0_158 = arith.constant 0 : index
    %c0_159 = arith.constant 0 : index
    %221 = vector.load %arg2[%c4, %c0_158, %c0_159] : memref<6x80x400xf32, #tpu.memory_space<vmem>>, vector<1x80x400xf32>
    %222 = vector.shape_cast %221 : vector<1x80x400xf32> to vector<80x400xf32>
    %c0_160 = arith.constant 0 : index
    %c0_161 = arith.constant 0 : index
    %223 = vector.load %arg7[%c0_160, %c0_161] : memref<400x128xf32, #tpu.memory_space<vmem>>, vector<400x128xf32>
    %cst_162 = arith.constant dense<0.000000e+00> : vector<80x128xf32>
    %224 = tpu.matmul %222, %223, %cst_162 {dimension_numbers = #tpu.dot_dimension_numbers<[1], [0], [0], [1], [0, 0, 1, 1], [], []>} : vector<80x400xf32>, vector<400x128xf32>, vector<80x128xf32> -> vector<80x128xf32>
    %225 = arith.addf %180, %224 : vector<80x128xf32>
    %cst_163 = arith.constant 0.000000e+00 : f32
    %226 = vector.broadcast %cst_163 : f32 to vector<80x128xf32>
    %227 = arith.maximumf %225, %226 : vector<80x128xf32>
    %228 = arith.mulf %227, %227 : vector<80x128xf32>
    %229 = tpu.concatenate %227, %228 in 0 : vector<80x128xf32>, vector<80x128xf32> -> vector<160x128xf32>
    %cst_164 = arith.constant dense<0.000000e+00> : vector<160xf32>
    %230 = vector.multi_reduction <add>, %229, %cst_164 [1] : vector<160x128xf32> to vector<160xf32>
    %231 = vector.shape_cast %230 : vector<160xf32> to vector<160x1xf32>
    %cst_165 = arith.constant 1.250000e-02 : f32
    %232 = vector.broadcast %cst_165 : f32 to vector<160x1xf32>
    %233 = arith.mulf %231, %232 : vector<160x1xf32>
    %234 = vector.extract_strided_slice %233 {offsets = [0, 0], sizes = [80, 1], strides = [1, 1]} : vector<160x1xf32> to vector<80x1xf32>
    %235 = vector.extract_strided_slice %233 {offsets = [80, 0], sizes = [80, 1], strides = [1, 1]} : vector<160x1xf32> to vector<80x1xf32>
    %236 = arith.mulf %234, %234 : vector<80x1xf32>
    %237 = arith.subf %235, %236 : vector<80x1xf32>
    %cst_166 = arith.constant 0.000000e+00 : f32
    %238 = vector.broadcast %cst_166 : f32 to vector<80x1xf32>
    %239 = arith.maximumf %237, %238 : vector<80x1xf32>
    %240 = vector.broadcast %234 : vector<80x1xf32> to vector<80x128xf32>
    %241 = arith.subf %227, %240 : vector<80x128xf32>
    %cst_167 = arith.constant 9.99999974E-6 : f32
    %242 = vector.broadcast %cst_167 : f32 to vector<80x1xf32>
    %243 = arith.addf %239, %242 : vector<80x1xf32>
    %244 = math.rsqrt %243 : vector<80x1xf32>
    %245 = vector.broadcast %244 : vector<80x1xf32> to vector<80x128xf32>
    %246 = arith.mulf %241, %245 : vector<80x128xf32>
    %c2_i32_168 = arith.constant 2 : i32
    %247 = tpu.dynamic_rotate %246 by %c2_i32_168 dim 1 : vector<80x128xf32>, i32 -> vector<80x128xf32>
    %c0_169 = arith.constant 0 : index
    %c0_170 = arith.constant 0 : index
    %248 = vector.load %arg5[%c0_169, %c0_170] : memref<400x128xf32, #tpu.memory_space<vmem>>, vector<80x128xf32>
    %249 = arith.mulf %247, %248 : vector<80x128xf32>
    %c0_171 = arith.constant 0 : index
    %c0_172 = arith.constant 0 : index
    %250 = vector.load %arg7[%c0_171, %c0_172] : memref<400x128xf32, #tpu.memory_space<vmem>>, vector<80x128xf32>
    tpu.vector_store %arg7[%c0_171, %c0_172], %249 {strides = array<i32>} : memref<400x128xf32, #tpu.memory_space<vmem>>, vector<80x128xf32>,
    %c1_i32_173 = arith.constant 1 : i32
    %251 = tpu.dynamic_rotate %246 by %c1_i32_173 dim 1 : vector<80x128xf32>, i32 -> vector<80x128xf32>
    %c80_174 = arith.constant 80 : index
    %c0_175 = arith.constant 0 : index
    %252 = vector.load %arg5[%c80_174, %c0_175] : memref<400x128xf32, #tpu.memory_space<vmem>>, vector<80x128xf32>
    %253 = arith.mulf %251, %252 : vector<80x128xf32>
    %c80_176 = arith.constant 80 : index
    %c0_177 = arith.constant 0 : index
    %254 = vector.load %arg7[%c80_176, %c0_177] : memref<400x128xf32, #tpu.memory_space<vmem>>, vector<80x128xf32>
    tpu.vector_store %arg7[%c80_176, %c0_177], %253 {strides = array<i32>} : memref<400x128xf32, #tpu.memory_space<vmem>>, vector<80x128xf32>,
    %c160_178 = arith.constant 160 : index
    %c0_179 = arith.constant 0 : index
    %255 = vector.load %arg5[%c160_178, %c0_179] : memref<400x128xf32, #tpu.memory_space<vmem>>, vector<80x128xf32>
    %256 = arith.mulf %246, %255 : vector<80x128xf32>
    %c160_180 = arith.constant 160 : index
    %c0_181 = arith.constant 0 : index
    %257 = vector.load %arg7[%c160_180, %c0_181] : memref<400x128xf32, #tpu.memory_space<vmem>>, vector<80x128xf32>
    tpu.vector_store %arg7[%c160_180, %c0_181], %256 {strides = array<i32>} : memref<400x128xf32, #tpu.memory_space<vmem>>, vector<80x128xf32>,
    %c127_i32_182 = arith.constant 127 : i32
    %258 = tpu.dynamic_rotate %246 by %c127_i32_182 dim 1 : vector<80x128xf32>, i32 -> vector<80x128xf32>
    %c240_183 = arith.constant 240 : index
    %c0_184 = arith.constant 0 : index
    %259 = vector.load %arg5[%c240_183, %c0_184] : memref<400x128xf32, #tpu.memory_space<vmem>>, vector<80x128xf32>
    %260 = arith.mulf %258, %259 : vector<80x128xf32>
    %c240_185 = arith.constant 240 : index
    %c0_186 = arith.constant 0 : index
    %261 = vector.load %arg7[%c240_185, %c0_186] : memref<400x128xf32, #tpu.memory_space<vmem>>, vector<80x128xf32>
    tpu.vector_store %arg7[%c240_185, %c0_186], %260 {strides = array<i32>} : memref<400x128xf32, #tpu.memory_space<vmem>>, vector<80x128xf32>,
    %c126_i32_187 = arith.constant 126 : i32
    %262 = tpu.dynamic_rotate %246 by %c126_i32_187 dim 1 : vector<80x128xf32>, i32 -> vector<80x128xf32>
    %c320_188 = arith.constant 320 : index
    %c0_189 = arith.constant 0 : index
    %263 = vector.load %arg5[%c320_188, %c0_189] : memref<400x128xf32, #tpu.memory_space<vmem>>, vector<80x128xf32>
    %264 = arith.mulf %262, %263 : vector<80x128xf32>
    %c320_190 = arith.constant 320 : index
    %c0_191 = arith.constant 0 : index
    %265 = vector.load %arg7[%c320_190, %c0_191] : memref<400x128xf32, #tpu.memory_space<vmem>>, vector<80x128xf32>
    tpu.vector_store %arg7[%c320_190, %c0_191], %264 {strides = array<i32>} : memref<400x128xf32, #tpu.memory_space<vmem>>, vector<80x128xf32>,
    %c5 = arith.constant 5 : index
    %c0_192 = arith.constant 0 : index
    %c0_193 = arith.constant 0 : index
    %266 = vector.load %arg2[%c5, %c0_192, %c0_193] : memref<6x80x400xf32, #tpu.memory_space<vmem>>, vector<1x80x400xf32>
    %267 = vector.shape_cast %266 : vector<1x80x400xf32> to vector<80x400xf32>
    %c0_194 = arith.constant 0 : index
    %c0_195 = arith.constant 0 : index
    %268 = vector.load %arg7[%c0_194, %c0_195] : memref<400x128xf32, #tpu.memory_space<vmem>>, vector<400x128xf32>
    %cst_196 = arith.constant dense<0.000000e+00> : vector<80x128xf32>
    %269 = tpu.matmul %267, %268, %cst_196 {dimension_numbers = #tpu.dot_dimension_numbers<[1], [0], [0], [1], [0, 0, 1, 1], [], []>} : vector<80x400xf32>, vector<400x128xf32>, vector<80x128xf32> -> vector<80x128xf32>
    %270 = arith.addf %225, %269 : vector<80x128xf32>
    %c0_197 = arith.constant 0 : index
    %c0_198 = arith.constant 0 : index
    %271 = vector.load %arg3[%c0_197, %c0_198] : memref<128x128xf32, #tpu.memory_space<vmem>>, vector<128x128xf32>
    %cst_199 = arith.constant dense<0.000000e+00> : vector<80x128xf32>
    %272 = tpu.matmul %270, %271, %cst_199 {dimension_numbers = #tpu.dot_dimension_numbers<[1], [0], [0], [1], [0, 0, 1, 1], [], []>} : vector<80x128xf32>, vector<128x128xf32>, vector<80x128xf32> -> vector<80x128xf32>
    %c0_200 = arith.constant 0 : index
    %c0_201 = arith.constant 0 : index
    %273 = vector.load %arg4[%c0_200, %c0_201] : memref<1x128xf32, #tpu.memory_space<vmem>>, vector<1x128xf32>
    %274 = vector.broadcast %273 : vector<1x128xf32> to vector<80x128xf32>
    %275 = arith.addf %272, %274 : vector<80x128xf32>
    %c0_202 = arith.constant 0 : index
    %c0_203 = arith.constant 0 : index
    %276 = vector.load %arg1[%c0_202, %c0_203] : memref<80x128xf32, #tpu.memory_space<vmem>>, vector<80x128xf32>
    %277 = arith.addf %275, %276 : vector<80x128xf32>
    %278 = arith.mulf %277, %277 : vector<80x128xf32>
    %cst_204 = arith.constant dense<0.000000e+00> : vector<128xf32>
    %279 = vector.multi_reduction <add>, %278, %cst_204 [0] : vector<80x128xf32> to vector<128xf32>
    %280 = vector.shape_cast %279 : vector<128xf32> to vector<1x128xf32>
    %cst_205 = arith.constant 0.000000e+00 : f32
    %281 = vector.broadcast %cst_205 : f32 to vector<1x128xf32>
    %282 = arith.cmpf ogt, %280, %281 : vector<1x128xf32>
    %cst_206 = arith.constant 1.000000e+00 : f32
    %283 = vector.broadcast %cst_206 : f32 to vector<1x128xf32>
    %284 = arith.select %282, %280, %283 : vector<1x128xi1>, vector<1x128xf32>
    %285 = math.rsqrt %284 : vector<1x128xf32>
    %286 = vector.broadcast %285 : vector<1x128xf32> to vector<80x128xf32>
    %287 = arith.mulf %277, %286 : vector<80x128xf32>
    %c0_207 = arith.constant 0 : index
    %c0_208 = arith.constant 0 : index
    %288 = vector.load %arg6[%c0_207, %c0_208] : memref<80x128xf32, #tpu.memory_space<vmem>>, vector<80x128xf32>
    tpu.vector_store %arg6[%c0_207, %c0_208], %287 {strides = array<i32>} : memref<80x128xf32, #tpu.memory_space<vmem>>, vector<80x128xf32>,
    return
  }
}

</mosaic_0001>

<llo_original>
// kernel: tile.9
$region0: #{tile.9}
  %s0 = inlined_call_operand.vmem [shape: f32[2,20], index: 0, kind: input, shape index: {}]
  %s1 = inlined_call_operand.vmem [shape: f32[1,40], index: 1, kind: output, shape index: {}]
  $region1: #{tile.9} parent=0
    #allocation0 [shape = 'u8[4096]{0}', space=vmem, size = 0x1000, scoped, tag = 'scoped mem for output reshape']
    #allocation1 [shape = 'u8[4096]{0}', space=vmem, size = 0x1000, scoped, tag = 'scoped mem for input reshape']
    %s3 = ssub.s32 4, 1
    %v4 = vld [vmem:[%s0] sm:%s3]
    %5 = vst [vmem:[#allocation1] sm:%s3] %v4
    %v6 = vld [vmem:[#allocation1] sm:$0x1]
    %vm7 = vcmask 162816
    %8 = vst.msk [vmem:[#allocation0] sm:$0x1] %vm7, %v6
    %s9 = scalar_lea.vmem [#allocation1], 1
    %v10 = vld [vmem:[%s9] sm:$0x1]
    %11 = vrot.lane.b32.xlu0 %v10, 20
    %v12 = vpop.permute.xlu0 %11
    %vm13 = vcmask 326816
    %14 = vst.msk [vmem:[#allocation0] sm:$0x1] %vm13, %v12
    %s16 = ssub.s32 2, 1
    %v17 = vld [vmem:[#allocation0] sm:%s16]
    %s19 = ssub.s32 2, 1
    %20 = vst [vmem:[%s1] sm:%s19] %v17

// kernel: tile.8
$region0: #{tile.8}
  #allocation0 [shape = 's32[1]{0}', space=sflag, size = 0x4, scoped, tag = 'scoped memory for tile.8']
  %s0 = inlined_call_operand.vmem [shape: f32[20], index: 0, kind: input, shape index: {}]
  %s1 = inlined_call_operand.vmem [shape: f32[2,20], index: 1, kind: output, shape index: {}]
  // Predicated region
  $region2: #{tile.8} parent=0 // pred_check
    _
  $region3: #{tile.8} parent=0 // pred_check_branch
    %3 = sbr.rel (0) target = $region5
  $region4: #{tile.8} parent=0 // pred_region
    _
  $region5: #{tile.8} parent=0 // pred_fallthru
    _
  %v4 = vld [vmem:[%s0] ss:$0 sm:$0xff]
  %5 = vst [vmem:[%s1] sm:$0x3] %v4

// kernel: phase_subnet_forward.1
$region0: #{phase_subnet_forward.1}
  #allocation0 [shape = 'u32[]', space=smem, size = 0x4, offset = 0x4, fixed_abs, tag = 'smem constant byte address 0x4 - core index']
  #allocation1 [shape = 'u32[72,128]{1,0:T(1,128)}', space=vmem, size = 0x9000, scoped, tag = 'internal scratch']
  #allocation2 [shape = 'f32[400,128]{1,0:T(8,128)}', space=vmem, size = 0x32000, scoped, tag = 'scratch operand']
  %s0 = inlined_call_operand.vmem [shape: f32[80,128], index: 0, kind: input, shape index: {}]
  %s1 = inlined_call_operand.vmem [shape: f32[80,128], index: 1, kind: input, shape index: {}]
  %s2 = inlined_call_operand.hbm [shape: f32[6,80,400], index: 2, kind: input, shape index: {}]
  %s3 = inlined_call_operand.vmem [shape: f32[128,128], index: 3, kind: input, shape index: {}]
  %s4 = inlined_call_operand.vmem [shape: f32[1,128], index: 4, kind: input, shape index: {}]
  %s5 = inlined_call_operand.vmem [shape: f32[400,128], index: 5, kind: input, shape index: {}]
  %s6 = inlined_call_operand.vmem [shape: f32[80,128], index: 6, kind: output, shape index: {}]
  %s7 = sld [smem:[#allocation0]]
  $region38: #{phase_subnet_forward.1} parent=0
    _
  %s9 = ssub.s32 1, %s7
  %s10 = scalar_select 0, %s9, %s7
  $region1: #{phase_subnet_forward.1} parent=0
    #allocation3 [shape = 'u8[983040]{0}', space=vmem, size = 0xf0000, scoped, tag = 'input window, operand 2, single buffered']
    #allocation4 [shape = 's32[1]{0}', space=sflag, size = 0x4, scoped, tag = 'scoped memory for phase_subnet_forward.1']
    %11 = vsyncpa [#allocation4], 0
    // Predicated region
    $region2: #{phase_subnet_forward.1} parent=1 // pred_check
      _
    $region3: #{phase_subnet_forward.1} parent=1 // pred_check_branch
      %13 = sbr.rel (0) target = $region5
    $region4: #{phase_subnet_forward.1} parent=1 // pred_region
      _
    $region5: #{phase_subnet_forward.1} parent=1 // pred_fallthru
      _
    // Predicated region
    $region6: #{phase_subnet_forward.1} parent=1 // pred_check
      _
    $region7: #{phase_subnet_forward.1} parent=1 // pred_check_branch
      %15 = sbr.rel (0) target = $region9
    $region8: #{phase_subnet_forward.1} parent=1 // pred_region
      _
    $region9: #{phase_subnet_forward.1} parent=1 // pred_fallthru
      _
    // Predicated region
    $region10: #{phase_subnet_forward.1} parent=1 // pred_check
      _
    $region11: #{phase_subnet_forward.1} parent=1 // pred_check_branch
      %17 = sbr.rel (0) target = $region13
    $region12: #{phase_subnet_forward.1} parent=1 // pred_region
      %19 = vsyncadd [#allocation4], 0
      %s20 = sshll.u32 %s2, 4
      %s21 = int_to_ptr.hbm [resolvable:$true] %s20
      %s22 = sshll.u32 [#allocation3], 4
      %s23 = int_to_ptr.vmem [resolvable:$true] %s22
      %28 = dma.hbm_to_vmem [thread:$0]  %s21, 30720, %s23, [#allocation4], 512, 512, 32
    $region13: #{phase_subnet_forward.1} parent=1 // pred_fallthru
      _
    // Predicated region
    $region14: #{phase_subnet_forward.1} parent=1 // pred_check
      _
    $region15: #{phase_subnet_forward.1} parent=1 // pred_check_branch
      %30 = sbr.rel (0) target = $region17
    $region16: #{phase_subnet_forward.1} parent=1 // pred_region
      _
    $region17: #{phase_subnet_forward.1} parent=1 // pred_fallthru
      _
    // Predicated region
    $region18: #{phase_subnet_forward.1} parent=1 // pred_check
      _
    $region19: #{phase_subnet_forward.1} parent=1 // pred_check_branch
      %32 = sbr.rel (0) target = $region21
    $region20: #{phase_subnet_forward.1} parent=1 // pred_region
      _
    $region21: #{phase_subnet_forward.1} parent=1 // pred_fallthru
      _
    // Predicated region
    $region22: #{phase_subnet_forward.1} parent=1 // pred_check
      _
    $region23: #{phase_subnet_forward.1} parent=1 // pred_check_branch
      %34 = sbr.rel (0) target = $region25
    $region24: #{phase_subnet_forward.1} parent=1 // pred_region
      _
    $region25: #{phase_subnet_forward.1} parent=1 // pred_fallthru
      _
    // Predicated region
    $region26: #{phase_subnet_forward.1} parent=1 // pred_check
      _
    $region27: #{phase_subnet_forward.1} parent=1 // pred_check_branch
      %36 = sbr.rel (0) target = $region29
    $region28: #{phase_subnet_forward.1} parent=1 // pred_region
      %38 = dma.done [#allocation4], 30720
    $region29: #{phase_subnet_forward.1} parent=1 // pred_fallthru
      _
    %v39 = vld [vmem:[%s0] sm:$0xff]
    %v40 = vld [vmem:[%s0 + $0x8] sm:$0xff]
    %v41 = vld [vmem:[%s0 + $0x10] sm:$0xff]
    %v42 = vld [vmem:[%s0 + $0x18] sm:$0xff]
    %v43 = vld [vmem:[%s0 + $0x20] sm:$0xff]
    %v44 = vld [vmem:[%s0 + $0x28] sm:$0xff]
    %v45 = vld [vmem:[%s0 + $0x30] sm:$0xff]
    %v46 = vld [vmem:[%s0 + $0x38] sm:$0xff]
    %v47 = vld [vmem:[%s0 + $0x40] sm:$0xff]
    %v48 = vld [vmem:[%s0 + $0x48] sm:$0xff]
    %v49 = vmax.f32 %v39, 0.0
    %v50 = vmax.f32 %v40, 0.0
    %v51 = vmax.f32 %v41, 0.0
    %v52 = vmax.f32 %v42, 0.0
    %v53 = vmax.f32 %v43, 0.0
    %v54 = vmax.f32 %v44, 0.0
    %v55 = vmax.f32 %v45, 0.0
    %v56 = vmax.f32 %v46, 0.0
    %v57 = vmax.f32 %v47, 0.0
    %v58 = vmax.f32 %v48, 0.0
    %v59 = vmul.f32 %v49, %v49
    %v60 = vmul.f32 %v50, %v50
    %v61 = vmul.f32 %v51, %v51
    %v62 = vmul.f32 %v52, %v52
    %v63 = vmul.f32 %v53, %v53
    %v64 = vmul.f32 %v54, %v54
    %v65 = vmul.f32 %v55, %v55
    %v66 = vmul.f32 %v56, %v56
    %v67 = vmul.f32 %v57, %v57
    %v68 = vmul.f32 %v58, %v58
    %69 = vadd.xlane.f32.xlu0 %v49
    %v70 = vpop.xlane.xlu0 %69
    %71 = vadd.xlane.f32.xlu0 %v50
    %v72 = vpop.xlane.xlu0 %71
    %73 = vadd.xlane.f32.xlu0 %v51
    %v74 = vpop.xlane.xlu0 %73
    %75 = vadd.xlane.f32.xlu0 %v52
    %v76 = vpop.xlane.xlu0 %75
    %77 = vadd.xlane.f32.xlu0 %v53
    %v78 = vpop.xlane.xlu0 %77
    %79 = vadd.xlane.f32.xlu0 %v54
    %v80 = vpop.xlane.xlu0 %79
    %81 = vadd.xlane.f32.xlu0 %v55
    %v82 = vpop.xlane.xlu0 %81
    %83 = vadd.xlane.f32.xlu0 %v56
    %v84 = vpop.xlane.xlu0 %83
    %85 = vadd.xlane.f32.xlu0 %v57
    %v86 = vpop.xlane.xlu0 %85
    %87 = vadd.xlane.f32.xlu0 %v58
    %v88 = vpop.xlane.xlu0 %87
    %89 = vadd.xlane.f32.xlu0 %v59
    %v90 = vpop.xlane.xlu0 %89
    %91 = vadd.xlane.f32.xlu0 %v60
    %v92 = vpop.xlane.xlu0 %91
    %93 = vadd.xlane.f32.xlu0 %v61
    %v94 = vpop.xlane.xlu0 %93
    %95 = vadd.xlane.f32.xlu0 %v62
    %v96 = vpop.xlane.xlu0 %95
    %97 = vadd.xlane.f32.xlu0 %v63
    %v98 = vpop.xlane.xlu0 %97
    %99 = vadd.xlane.f32.xlu0 %v64
    %v100 = vpop.xlane.xlu0 %99
    %101 = vadd.xlane.f32.xlu0 %v65
    %v102 = vpop.xlane.xlu0 %101
    %103 = vadd.xlane.f32.xlu0 %v66
    %v104 = vpop.xlane.xlu0 %103
    %105 = vadd.xlane.f32.xlu0 %v67
    %v106 = vpop.xlane.xlu0 %105
    %107 = vadd.xlane.f32.xlu0 %v68
    %v108 = vpop.xlane.xlu0 %107
    %v109 = vmul.f32 %v70, 0.0125
    %v110 = vmul.f32 %v72, 0.0125
    %v111 = vmul.f32 %v74, 0.0125
    %v112 = vmul.f32 %v76, 0.0125
    %v113 = vmul.f32 %v78, 0.0125
    %v114 = vmul.f32 %v80, 0.0125
    %v115 = vmul.f32 %v82, 0.0125
    %v116 = vmul.f32 %v84, 0.0125
    %v117 = vmul.f32 %v86, 0.0125
    %v118 = vmul.f32 %v88, 0.0125
    %v119 = vmul.f32 %v90, 0.0125
    %v120 = vmul.f32 %v92, 0.0125
    %v121 = vmul.f32 %v94, 0.0125
    %v122 = vmul.f32 %v96, 0.0125
    %v123 = vmul.f32 %v98, 0.0125
    %v124 = vmul.f32 %v100, 0.0125
    %v125 = vmul.f32 %v102, 0.0125
    %v126 = vmul.f32 %v104, 0.0125
    %v127 = vmul.f32 %v106, 0.0125
    %v128 = vmul.f32 %v108, 0.0125
    %v129 = vmul.f32 %v109, %v109
    %v130 = vmul.f32 %v110, %v110
    %v131 = vmul.f32 %v111, %v111
    %v132 = vmul.f32 %v112, %v112
    %v133 = vmul.f32 %v113, %v113
    %v134 = vmul.f32 %v114, %v114
    %v135 = vmul.f32 %v115, %v115
    %v136 = vmul.f32 %v116, %v116
    %v137 = vmul.f32 %v117, %v117
    %v138 = vmul.f32 %v118, %v118
    %v139 = vsub.f32 %v119, %v129
    %v140 = vsub.f32 %v120, %v130
    %v141 = vsub.f32 %v121, %v131
    %v142 = vsub.f32 %v122, %v132
    %v143 = vsub.f32 %v123, %v133
    %v144 = vsub.f32 %v124, %v134
    %v145 = vsub.f32 %v125, %v135
    %v146 = vsub.f32 %v126, %v136
    %v147 = vsub.f32 %v127, %v137
    %v148 = vsub.f32 %v128, %v138
    %v149 = vmax.f32 %v139, 0.0
    %v150 = vmax.f32 %v140, 0.0
    %v151 = vmax.f32 %v141, 0.0
    %v152 = vmax.f32 %v142, 0.0
    %v153 = vmax.f32 %v143, 0.0
    %v154 = vmax.f32 %v144, 0.0
    %v155 = vmax.f32 %v145, 0.0
    %v156 = vmax.f32 %v146, 0.0
    %v157 = vmax.f32 %v147, 0.0
    %v158 = vmax.f32 %v148, 0.0
    %v159 = vsub.f32 %v49, %v109
    %v160 = vsub.f32 %v50, %v110
    %v161 = vsub.f32 %v51, %v111
    %v162 = vsub.f32 %v52, %v112
    %v163 = vsub.f32 %v53, %v113
    %v164 = vsub.f32 %v54, %v114
    %v165 = vsub.f32 %v55, %v115
    %v166 = vsub.f32 %v56, %v116
    %v167 = vsub.f32 %v57, %v117
    %v168 = vsub.f32 %v58, %v118
    %v169 = vadd.f32 %v149, 1e-05
    %v170 = vadd.f32 %v150, 1e-05
    %v171 = vadd.f32 %v151, 1e-05
    %v172 = vadd.f32 %v152, 1e-05
    %v173 = vadd.f32 %v153, 1e-05
    %v174 = vadd.f32 %v154, 1e-05
    %v175 = vadd.f32 %v155, 1e-05
    %v176 = vadd.f32 %v156, 1e-05
    %v177 = vadd.f32 %v157, 1e-05
    %v178 = vadd.f32 %v158, 1e-05
    %v179 = vrsqrt.pop %v169
    %v180 = vmul.f32 %v179, %v169
    %v181 = vmul.f32 %v180, %v179
    %v182 = vmul.f32 0.5, %v181
    %v183 = vsub.f32 1.5, %v182
    %v184 = vmul.f32 %v179, %v183
    %vm185 = vweird.f32 %v169
    %vm186 = vweird.f32 %v179
    %vm187 = vmor %vm185, %vm186
    %v188 = vsel %vm187, %v179, %v184
    %v189 = vrsqrt.pop %v170
    %v190 = vmul.f32 %v189, %v170
    %v191 = vmul.f32 %v190, %v189
    %v192 = vmul.f32 0.5, %v191
    %v193 = vsub.f32 1.5, %v192
    %v194 = vmul.f32 %v189, %v193
    %vm195 = vweird.f32 %v170
    %vm196 = vweird.f32 %v189
    %vm197 = vmor %vm195, %vm196
    %v198 = vsel %vm197, %v189, %v194
    %v199 = vrsqrt.pop %v171
    %v200 = vmul.f32 %v199, %v171
    %v201 = vmul.f32 %v200, %v199
    %v202 = vmul.f32 0.5, %v201
    %v203 = vsub.f32 1.5, %v202
    %v204 = vmul.f32 %v199, %v203
    %vm205 = vweird.f32 %v171
    %vm206 = vweird.f32 %v199
    %vm207 = vmor %vm205, %vm206
    %v208 = vsel %vm207, %v199, %v204
    %v209 = vrsqrt.pop %v172
    %v210 = vmul.f32 %v209, %v172
    %v211 = vmul.f32 %v210, %v209
    %v212 = vmul.f32 0.5, %v211
    %v213 = vsub.f32 1.5, %v212
    %v214 = vmul.f32 %v209, %v213
    %vm215 = vweird.f32 %v172
    %vm216 = vweird.f32 %v209
    %vm217 = vmor %vm215, %vm216
    %v218 = vsel %vm217, %v209, %v214
    %v219 = vrsqrt.pop %v173
    %v220 = vmul.f32 %v219, %v173
    %v221 = vmul.f32 %v220, %v219
    %v222 = vmul.f32 0.5, %v221
    %v223 = vsub.f32 1.5, %v222
    %v224 = vmul.f32 %v219, %v223
    %vm225 = vweird.f32 %v173
    %vm226 = vweird.f32 %v219
    %vm227 = vmor %vm225, %vm226
    %v228 = vsel %vm227, %v219, %v224
    %v229 = vrsqrt.pop %v174
    %v230 = vmul.f32 %v229, %v174
    %v231 = vmul.f32 %v230, %v229
    %v232 = vmul.f32 0.5, %v231
    %v233 = vsub.f32 1.5, %v232
    %v234 = vmul.f32 %v229, %v233
    %vm235 = vweird.f32 %v174
    %vm236 = vweird.f32 %v229
    %vm237 = vmor %vm235, %vm236
    %v238 = vsel %vm237, %v229, %v234
    %v239 = vrsqrt.pop %v175
    %v240 = vmul.f32 %v239, %v175
    %v241 = vmul.f32 %v240, %v239
    %v242 = vmul.f32 0.5, %v241
    %v243 = vsub.f32 1.5, %v242
    %v244 = vmul.f32 %v239, %v243
    %vm245 = vweird.f32 %v175
    %vm246 = vweird.f32 %v239
    %vm247 = vmor %vm245, %vm246
    %v248 = vsel %vm247, %v239, %v244
    %v249 = vrsqrt.pop %v176
    %v250 = vmul.f32 %v249, %v176
    %v251 = vmul.f32 %v250, %v249
    %v252 = vmul.f32 0.5, %v251
    %v253 = vsub.f32 1.5, %v252
    %v254 = vmul.f32 %v249, %v253
    %vm255 = vweird.f32 %v176
    %vm256 = vweird.f32 %v249
    %vm257 = vmor %vm255, %vm256
    %v258 = vsel %vm257, %v249, %v254
    %v259 = vrsqrt.pop %v177
    %v260 = vmul.f32 %v259, %v177
    %v261 = vmul.f32 %v260, %v259
    %v262 = vmul.f32 0.5, %v261
    %v263 = vsub.f32 1.5, %v262
    %v264 = vmul.f32 %v259, %v263
    %vm265 = vweird.f32 %v177
    %vm266 = vweird.f32 %v259
    %vm267 = vmor %vm265, %vm266
    %v268 = vsel %vm267, %v259, %v264
    %v269 = vrsqrt.pop %v178
    %v270 = vmul.f32 %v269, %v178
    %v271 = vmul.f32 %v270, %v269
    %v272 = vmul.f32 0.5, %v271
    %v273 = vsub.f32 1.5, %v272
    %v274 = vmul.f32 %v269, %v273
    %vm275 = vweird.f32 %v178
    %vm276 = vweird.f32 %v269
    %vm277 = vmor %vm275, %vm276
    %v278 = vsel %vm277, %v269, %v274
    %v279 = vmul.f32 %v159, %v188
    %v280 = vmul.f32 %v160, %v198
    %v281 = vmul.f32 %v161, %v208
    %v282 = vmul.f32 %v162, %v218
    %v283 = vmul.f32 %v163, %v228
    %v284 = vmul.f32 %v164, %v238
    %v285 = vmul.f32 %v165, %v248
    %v286 = vmul.f32 %v166, %v258
    %v287 = vmul.f32 %v167, %v268
    %v288 = vmul.f32 %v168, %v278
    %289 = vrot.lane.b32.xlu0 %v279, 2
    %v290 = vpop.permute.xlu0 %289
    %291 = vrot.lane.b32.xlu0 %v280, 2
    %v292 = vpop.permute.xlu0 %291
    %293 = vrot.lane.b32.xlu0 %v281, 2
    %v294 = vpop.permute.xlu0 %293
    %295 = vrot.lane.b32.xlu0 %v282, 2
    %v296 = vpop.permute.xlu0 %295
    %297 = vrot.lane.b32.xlu0 %v283, 2
    %v298 = vpop.permute.xlu0 %297
    %299 = vrot.lane.b32.xlu0 %v284, 2
    %v300 = vpop.permute.xlu0 %299
    %301 = vrot.lane.b32.xlu0 %v285, 2
    %v302 = vpop.permute.xlu0 %301
    %303 = vrot.lane.b32.xlu0 %v286, 2
    %v304 = vpop.permute.xlu0 %303
    %305 = vrot.lane.b32.xlu0 %v287, 2
    %v306 = vpop.permute.xlu0 %305
    %307 = vrot.lane.b32.xlu0 %v288, 2
    %v308 = vpop.permute.xlu0 %307
    %v309 = vld [vmem:[%s5] sm:$0xff]
    %v310 = vld [vmem:[%s5 + $0x8] sm:$0xff]
    %v311 = vld [vmem:[%s5 + $0x10] sm:$0xff]
    %v312 = vld [vmem:[%s5 + $0x18] sm:$0xff]
    %v313 = vld [vmem:[%s5 + $0x20] sm:$0xff]
    %v314 = vld [vmem:[%s5 + $0x28] sm:$0xff]
    %v315 = vld [vmem:[%s5 + $0x30] sm:$0xff]
    %v316 = vld [vmem:[%s5 + $0x38] sm:$0xff]
    %v317 = vld [vmem:[%s5 + $0x40] sm:$0xff]
    %v318 = vld [vmem:[%s5 + $0x48] sm:$0xff]
    %v319 = vmul.f32 %v290, %v309
    %v320 = vmul.f32 %v292, %v310
    %v321 = vmul.f32 %v294, %v311
    %v322 = vmul.f32 %v296, %v312
    %v323 = vmul.f32 %v298, %v313
    %v324 = vmul.f32 %v300, %v314
    %v325 = vmul.f32 %v302, %v315
    %v326 = vmul.f32 %v304, %v316
    %v327 = vmul.f32 %v306, %v317
    %v328 = vmul.f32 %v308, %v318
    %329 = vst [vmem:[#allocation2] sm:$0xff] %v319
    %330 = vst [vmem:[#allocation2 + $0x8] sm:$0xff] %v320
    %331 = vst [vmem:[#allocation2 + $0x10] sm:$0xff] %v321
    %332 = vst [vmem:[#allocation2 + $0x18] sm:$0xff] %v322
    %333 = vst [vmem:[#allocation2 + $0x20] sm:$0xff] %v323
    %334 = vst [vmem:[#allocation2 + $0x28] sm:$0xff] %v324
    %335 = vst [vmem:[#allocation2 + $0x30] sm:$0xff] %v325
    %336 = vst [vmem:[#allocation2 + $0x38] sm:$0xff] %v326
    %337 = vst [vmem:[#allocation2 + $0x40] sm:$0xff] %v327
    %338 = vst [vmem:[#allocation2 + $0x48] sm:$0xff] %v328
    %339 = vrot.lane.b32.xlu0 %v279, 1
    %v340 = vpop.permute.xlu0 %339
    %341 = vrot.lane.b32.xlu0 %v280, 1
    %v342 = vpop.permute.xlu0 %341
    %343 = vrot.lane.b32.xlu0 %v281, 1
    %v344 = vpop.permute.xlu0 %343
    %345 = vrot.lane.b32.xlu0 %v282, 1
    %v346 = vpop.permute.xlu0 %345
    %347 = vrot.lane.b32.xlu0 %v283, 1
    %v348 = vpop.permute.xlu0 %347
    %349 = vrot.lane.b32.xlu0 %v284, 1
    %v350 = vpop.permute.xlu0 %349
    %351 = vrot.lane.b32.xlu0 %v285, 1
    %v352 = vpop.permute.xlu0 %351
    %353 = vrot.lane.b32.xlu0 %v286, 1
    %v354 = vpop.permute.xlu0 %353
    %355 = vrot.lane.b32.xlu0 %v287, 1
    %v356 = vpop.permute.xlu0 %355
    %357 = vrot.lane.b32.xlu0 %v288, 1
    %v358 = vpop.permute.xlu0 %357
    %v359 = vld [vmem:[%s5 + $0x50] sm:$0xff]
    %v360 = vld [vmem:[%s5 + $0x58] sm:$0xff]
    %v361 = vld [vmem:[%s5 + $0x60] sm:$0xff]
    %v362 = vld [vmem:[%s5 + $0x68] sm:$0xff]
    %v363 = vld [vmem:[%s5 + $0x70] sm:$0xff]
    %v364 = vld [vmem:[%s5 + $0x78] sm:$0xff]
    %v365 = vld [vmem:[%s5 + $0x80] sm:$0xff]
    %v366 = vld [vmem:[%s5 + $0x88] sm:$0xff]
    %v367 = vld [vmem:[%s5 + $0x90] sm:$0xff]
    %v368 = vld [vmem:[%s5 + $0x98] sm:$0xff]
    %v369 = vmul.f32 %v340, %v359
    %v370 = vmul.f32 %v342, %v360
    %v371 = vmul.f32 %v344, %v361
    %v372 = vmul.f32 %v346, %v362
    %v373 = vmul.f32 %v348, %v363
    %v374 = vmul.f32 %v350, %v364
    %v375 = vmul.f32 %v352, %v365
    %v376 = vmul.f32 %v354, %v366
    %v377 = vmul.f32 %v356, %v367
    %v378 = vmul.f32 %v358, %v368
    %379 = vst [vmem:[#allocation2 + $0x50] sm:$0xff] %v369
    %380 = vst [vmem:[#allocation2 + $0x58] sm:$0xff] %v370
    %381 = vst [vmem:[#allocation2 + $0x60] sm:$0xff] %v371
    %382 = vst [vmem:[#allocation2 + $0x68] sm:$0xff] %v372
    %383 = vst [vmem:[#allocation2 + $0x70] sm:$0xff] %v373
    %384 = vst [vmem:[#allocation2 + $0x78] sm:$0xff] %v374
    %385 = vst [vmem:[#allocation2 + $0x80] sm:$0xff] %v375
    %386 = vst [vmem:[#allocation2 + $0x88] sm:$0xff] %v376
    %387 = vst [vmem:[#allocation2 + $0x90] sm:$0xff] %v377
    %388 = vst [vmem:[#allocation2 + $0x98] sm:$0xff] %v378
    %v389 = vld [vmem:[%s5 + $0xa0] sm:$0xff]
    %v390 = vld [vmem:[%s5 + $0xa8] sm:$0xff]
    %v391 = vld [vmem:[%s5 + $0xb0] sm:$0xff]
    %v392 = vld [vmem:[%s5 + $0xb8] sm:$0xff]
    %v393 = vld [vmem:[%s5 + $0xc0] sm:$0xff]
    %v394 = vld [vmem:[%s5 + $0xc8] sm:$0xff]
    %v395 = vld [vmem:[%s5 + $0xd0] sm:$0xff]
    %v396 = vld [vmem:[%s5 + $0xd8] sm:$0xff]
    %v397 = vld [vmem:[%s5 + $0xe0] sm:$0xff]
    %v398 = vld [vmem:[%s5 + $0xe8] sm:$0xff]
    %v399 = vmul.f32 %v279, %v389
    %v400 = vmul.f32 %v280, %v390
    %v401 = vmul.f32 %v281, %v391
    %v402 = vmul.f32 %v282, %v392
    %v403 = vmul.f32 %v283, %v393
    %v404 = vmul.f32 %v284, %v394
    %v405 = vmul.f32 %v285, %v395
    %v406 = vmul.f32 %v286, %v396
    %v407 = vmul.f32 %v287, %v397
    %v408 = vmul.f32 %v288, %v398
    %409 = vst [vmem:[#allocation2 + $0xa0] sm:$0xff] %v399
    %410 = vst [vmem:[#allocation2 + $0xa8] sm:$0xff] %v400
    %411 = vst [vmem:[#allocation2 + $0xb0] sm:$0xff] %v401
    %412 = vst [vmem:[#allocation2 + $0xb8] sm:$0xff] %v402
    %413 = vst [vmem:[#allocation2 + $0xc0] sm:$0xff] %v403
    %414 = vst [vmem:[#allocation2 + $0xc8] sm:$0xff] %v404
    %415 = vst [vmem:[#allocation2 + $0xd0] sm:$0xff] %v405
    %416 = vst [vmem:[#allocation2 + $0xd8] sm:$0xff] %v406
    %417 = vst [vmem:[#allocation2 + $0xe0] sm:$0xff] %v407
    %418 = vst [vmem:[#allocation2 + $0xe8] sm:$0xff] %v408
    %419 = vrot.lane.b32.xlu0 %v279, 127
    %v420 = vpop.permute.xlu0 %419
    %421 = vrot.lane.b32.xlu0 %v280, 127
    %v422 = vpop.permute.xlu0 %421
    %423 = vrot.lane.b32.xlu0 %v281, 127
    %v424 = vpop.permute.xlu0 %423
    %425 = vrot.lane.b32.xlu0 %v282, 127
    %v426 = vpop.permute.xlu0 %425
    %427 = vrot.lane.b32.xlu0 %v283, 127
    %v428 = vpop.permute.xlu0 %427
    %429 = vrot.lane.b32.xlu0 %v284, 127
    %v430 = vpop.permute.xlu0 %429
    %431 = vrot.lane.b32.xlu0 %v285, 127
    %v432 = vpop.permute.xlu0 %431
    %433 = vrot.lane.b32.xlu0 %v286, 127
    %v434 = vpop.permute.xlu0 %433
    %435 = vrot.lane.b32.xlu0 %v287, 127
    %v436 = vpop.permute.xlu0 %435
    %437 = vrot.lane.b32.xlu0 %v288, 127
    %v438 = vpop.permute.xlu0 %437
    %v439 = vld [vmem:[%s5 + $0xf0] sm:$0xff]
    %v440 = vld [vmem:[%s5 + $0xf8] sm:$0xff]
    %v441 = vld [vmem:[%s5 + $0x100] sm:$0xff]
    %v442 = vld [vmem:[%s5 + $0x108] sm:$0xff]
    %v443 = vld [vmem:[%s5 + $0x110] sm:$0xff]
    %v444 = vld [vmem:[%s5 + $0x118] sm:$0xff]
    %v445 = vld [vmem:[%s5 + $0x120] sm:$0xff]
    %v446 = vld [vmem:[%s5 + $0x128] sm:$0xff]
    %v447 = vld [vmem:[%s5 + $0x130] sm:$0xff]
    %v448 = vld [vmem:[%s5 + $0x138] sm:$0xff]
    %v449 = vmul.f32 %v420, %v439
    %v450 = vmul.f32 %v422, %v440
    %v451 = vmul.f32 %v424, %v441
    %v452 = vmul.f32 %v426, %v442
    %v453 = vmul.f32 %v428, %v443
    %v454 = vmul.f32 %v430, %v444
    %v455 = vmul.f32 %v432, %v445
    %v456 = vmul.f32 %v434, %v446
    %v457 = vmul.f32 %v436, %v447
    %v458 = vmul.f32 %v438, %v448
    %459 = vst [vmem:[#allocation2 + $0xf0] sm:$0xff] %v449
    %460 = vst [vmem:[#allocation2 + $0xf8] sm:$0xff] %v450
    %461 = vst [vmem:[#allocation2 + $0x100] sm:$0xff] %v451
    %462 = vst [vmem:[#allocation2 + $0x108] sm:$0xff] %v452
    %463 = vst [vmem:[#allocation2 + $0x110] sm:$0xff] %v453
    %464 = vst [vmem:[#allocation2 + $0x118] sm:$0xff] %v454
    %465 = vst [vmem:[#allocation2 + $0x120] sm:$0xff] %v455
    %466 = vst [vmem:[#allocation2 + $0x128] sm:$0xff] %v456
    %467 = vst [vmem:[#allocation2 + $0x130] sm:$0xff] %v457
    %468 = vst [vmem:[#allocation2 + $0x138] sm:$0xff] %v458
    %469 = vrot.lane.b32.xlu0 %v279, 126
    %v470 = vpop.permute.xlu0 %469
    %471 = vrot.lane.b32.xlu0 %v280, 126
    %v472 = vpop.permute.xlu0 %471
    %473 = vrot.lane.b32.xlu0 %v281, 126
    %v474 = vpop.permute.xlu0 %473
    %475 = vrot.lane.b32.xlu0 %v282, 126
    %v476 = vpop.permute.xlu0 %475
    %477 = vrot.lane.b32.xlu0 %v283, 126
    %v478 = vpop.permute.xlu0 %477
    %479 = vrot.lane.b32.xlu0 %v284, 126
    %v480 = vpop.permute.xlu0 %479
    %481 = vrot.lane.b32.xlu0 %v285, 126
    %v482 = vpop.permute.xlu0 %481
    %483 = vrot.lane.b32.xlu0 %v286, 126
    %v484 = vpop.permute.xlu0 %483
    %485 = vrot.lane.b32.xlu0 %v287, 126
    %v486 = vpop.permute.xlu0 %485
    %487 = vrot.lane.b32.xlu0 %v288, 126
    %v488 = vpop.permute.xlu0 %487
    %v489 = vld [vmem:[%s5 + $0x140] sm:$0xff]
    %v490 = vld [vmem:[%s5 + $0x148] sm:$0xff]
    %v491 = vld [vmem:[%s5 + $0x150] sm:$0xff]
    %v492 = vld [vmem:[%s5 + $0x158] sm:$0xff]
    %v493 = vld [vmem:[%s5 + $0x160] sm:$0xff]
    %v494 = vld [vmem:[%s5 + $0x168] sm:$0xff]
    %v495 = vld [vmem:[%s5 + $0x170] sm:$0xff]
    %v496 = vld [vmem:[%s5 + $0x178] sm:$0xff]
    %v497 = vld [vmem:[%s5 + $0x180] sm:$0xff]
    %v498 = vld [vmem:[%s5 + $0x188] sm:$0xff]
    %v499 = vmul.f32 %v470, %v489
    %v500 = vmul.f32 %v472, %v490
    %v501 = vmul.f32 %v474, %v491
    %v502 = vmul.f32 %v476, %v492
    %v503 = vmul.f32 %v478, %v493
    %v504 = vmul.f32 %v480, %v494
    %v505 = vmul.f32 %v482, %v495
    %v506 = vmul.f32 %v484, %v496
    %v507 = vmul.f32 %v486, %v497
    %v508 = vmul.f32 %v488, %v498
    %509 = vst [vmem:[#allocation2 + $0x140] sm:$0xff] %v499
    %510 = vst [vmem:[#allocation2 + $0x148] sm:$0xff] %v500
    %511 = vst [vmem:[#allocation2 + $0x150] sm:$0xff] %v501
    %512 = vst [vmem:[#allocation2 + $0x158] sm:$0xff] %v502
    %513 = vst [vmem:[#allocation2 + $0x160] sm:$0xff] %v503
    %514 = vst [vmem:[#allocation2 + $0x168] sm:$0xff] %v504
    %515 = vst [vmem:[#allocation2 + $0x170] sm:$0xff] %v505
    %516 = vst [vmem:[#allocation2 + $0x178] sm:$0xff] %v506
    %517 = vst [vmem:[#allocation2 + $0x180] sm:$0xff] %v507
    %518 = vst [vmem:[#allocation2 + $0x188] sm:$0xff] %v508
    %v519 = vld [vmem:[#allocation3] sm:$0xff]
    %v520 = vld [vmem:[#allocation3 + $0x8] sm:$0xff]
    %v521 = vld [vmem:[#allocation3 + $0x10] sm:$0xff]
    %v522 = vld [vmem:[#allocation3 + $0x18] sm:$0xff]
    %v523 = vld [vmem:[#allocation3 + $0x20] sm:$0xff]
    %v524 = vld [vmem:[#allocation3 + $0x28] sm:$0xff]
    %v525 = vld [vmem:[#allocation3 + $0x30] sm:$0xff]
    %v526 = vld [vmem:[#allocation3 + $0x38] sm:$0xff]
    %v527 = vld [vmem:[#allocation3 + $0x40] sm:$0xff]
    %v528 = vld [vmem:[#allocation3 + $0x48] sm:$0xff]
    %v529 = vld [vmem:[#allocation3 + $0x50] sm:$0xff]
    %v530 = vld [vmem:[#allocation3 + $0x58] sm:$0xff]
    %v531 = vld [vmem:[#allocation3 + $0x60] sm:$0xff]
    %v532 = vld [vmem:[#allocation3 + $0x68] sm:$0xff]
    %v533 = vld [vmem:[#allocation3 + $0x70] sm:$0xff]
    %v534 = vld [vmem:[#allocation3 + $0x78] sm:$0xff]
    %v535 = vld [vmem:[#allocation3 + $0x80] sm:$0xff]
    %v536 = vld [vmem:[#allocation3 + $0x88] sm:$0xff]
    %v537 = vld [vmem:[#allocation3 + $0x90] sm:$0xff]
    %v538 = vld [vmem:[#allocation3 + $0x98] sm:$0xff]
    %v539 = vld [vmem:[#allocation3 + $0xa0] sm:$0xff]
    %v540 = vld [vmem:[#allocation3 + $0xa8] sm:$0xff]
    %v541 = vld [vmem:[#allocation3 + $0xb0] sm:$0xff]
    %v542 = vld [vmem:[#allocation3 + $0xb8] sm:$0xff]
    %v543 = vld [vmem:[#allocation3 + $0xc0] sm:$0xff]
    %v544 = vld [vmem:[#allocation3 + $0xc8] sm:$0xff]
    %v545 = vld [vmem:[#allocation3 + $0xd0] sm:$0xff]
    %v546 = vld [vmem:[#allocation3 + $0xd8] sm:$0xff]
    %v547 = vld [vmem:[#allocation3 + $0xe0] sm:$0xff]
    %v548 = vld [vmem:[#allocation3 + $0xe8] sm:$0xff]
    %v549 = vld [vmem:[#allocation3 + $0xf0] sm:$0xff]
    %v550 = vld [vmem:[#allocation3 + $0xf8] sm:$0xff]
    %v551 = vld [vmem:[#allocation3 + $0x100] sm:$0xff]
    %v552 = vld [vmem:[#allocation3 + $0x108] sm:$0xff]
    %v553 = vld [vmem:[#allocation3 + $0x110] sm:$0xff]
    %v554 = vld [vmem:[#allocation3 + $0x118] sm:$0xff]
    %v555 = vld [vmem:[#allocation3 + $0x120] sm:$0xff]
    %v556 = vld [vmem:[#allocation3 + $0x128] sm:$0xff]
    %v557 = vld [vmem:[#allocation3 + $0x130] sm:$0xff]
    %v558 = vld [vmem:[#allocation3 + $0x138] sm:$0xff]
    %v559 = vld [vmem:[#allocation2] sm:$0xff]
    %v560 = vld [vmem:[#allocation2 + $0x8] sm:$0xff]
    %v561 = vld [vmem:[#allocation2 + $0x10] sm:$0xff]
    %v562 = vld [vmem:[#allocation2 + $0x18] sm:$0xff]
    %v563 = vld [vmem:[#allocation2 + $0x20] sm:$0xff]
    %v564 = vld [vmem:[#allocation2 + $0x28] sm:$0xff]
    %v565 = vld [vmem:[#allocation2 + $0x30] sm:$0xff]
    %v566 = vld [vmem:[#allocation2 + $0x38] sm:$0xff]
    %v567 = vld [vmem:[#allocation2 + $0x40] sm:$0xff]
    %v568 = vld [vmem:[#allocation2 + $0x48] sm:$0xff]
    %v569 = vld [vmem:[#allocation2 + $0x50] sm:$0xff]
    %v570 = vld [vmem:[#allocation2 + $0x58] sm:$0xff]
    %v571 = vld [vmem:[#allocation2 + $0x60] sm:$0xff]
    %v572 = vld [vmem:[#allocation2 + $0x68] sm:$0xff]
    %v573 = vld [vmem:[#allocation2 + $0x70] sm:$0xff]
    %v574 = vld [vmem:[#allocation2 + $0x78] sm:$0xff]
    %v575 = vld [vmem:[#allocation2 + $0x80] sm:$0xff]
    %v576 = vld [vmem:[#allocation2 + $0x88] sm:$0xff]
    %v577 = vld [vmem:[#allocation2 + $0x90] sm:$0xff]
    %v578 = vld [vmem:[#allocation2 + $0x98] sm:$0xff]
    %v579 = vld [vmem:[#allocation2 + $0xa0] sm:$0xff]
    %v580 = vld [vmem:[#allocation2 + $0xa8] sm:$0xff]
    %v581 = vld [vmem:[#allocation2 + $0xb0] sm:$0xff]
    %v582 = vld [vmem:[#allocation2 + $0xb8] sm:$0xff]
    %v583 = vld [vmem:[#allocation2 + $0xc0] sm:$0xff]
    %v584 = vld [vmem:[#allocation2 + $0xc8] sm:$0xff]
    %v585 = vld [vmem:[#allocation2 + $0xd0] sm:$0xff]
    %v586 = vld [vmem:[#allocation2 + $0xd8] sm:$0xff]
    %v587 = vld [vmem:[#allocation2 + $0xe0] sm:$0xff]
    %v588 = vld [vmem:[#allocation2 + $0xe8] sm:$0xff]
    %v589 = vld [vmem:[#allocation2 + $0xf0] sm:$0xff]
    %v590 = vld [vmem:[#allocation2 + $0xf8] sm:$0xff]
    %v591 = vld [vmem:[#allocation2 + $0x100] sm:$0xff]
    %v592 = vld [vmem:[#allocation2 + $0x108] sm:$0xff]
    %v593 = vld [vmem:[#allocation2 + $0x110] sm:$0xff]
    %v594 = vld [vmem:[#allocation2 + $0x118] sm:$0xff]
    %v595 = vld [vmem:[#allocation2 + $0x120] sm:$0xff]
    %v596 = vld [vmem:[#allocation2 + $0x128] sm:$0xff]
    %v597 = vld [vmem:[#allocation2 + $0x130] sm:$0xff]
    %v598 = vld [vmem:[#allocation2 + $0x138] sm:$0xff]
    %v599 = vld [vmem:[#allocation2 + $0x140] sm:$0xff]
    %v600 = vld [vmem:[#allocation2 + $0x148] sm:$0xff]
    %v601 = vld [vmem:[#allocation2 + $0x150] sm:$0xff]
    %v602 = vld [vmem:[#allocation2 + $0x158] sm:$0xff]
    %v603 = vld [vmem:[#allocation2 + $0x160] sm:$0xff]
    %v604 = vld [vmem:[#allocation2 + $0x168] sm:$0xff]
    %v605 = vld [vmem:[#allocation2 + $0x170] sm:$0xff]
    %v606 = vld [vmem:[#allocation2 + $0x178] sm:$0xff]
    %v607 = vld [vmem:[#allocation2 + $0x180] sm:$0xff]
    %v608 = vld [vmem:[#allocation2 + $0x188] sm:$0xff]
    %vm609 = vcmask 130048
    %v611 = vsel %vm609, %v522, 0
    %v614 = vsel %vm609, %v526, 0
    %v617 = vsel %vm609, %v530, 0
    %v620 = vsel %vm609, %v534, 0
    %v623 = vsel %vm609, %v538, 0
    %v626 = vsel %vm609, %v542, 0
    %v629 = vsel %vm609, %v546, 0
    %v632 = vsel %vm609, %v550, 0
    %v635 = vsel %vm609, %v554, 0
    %v638 = vsel %vm609, %v558, 0
    %640 = vmatpush.msra.mxu0 %v574
    %641 = vmatpush.msra.mxu0 %v573
    %642 = vmatpush.msra.mxu0 %v572
    %643 = vmatpush.msra.mxu0 %v571
    %644 = vmatpush.msra.mxu0 %v570
    %645 = vmatpush.msra.mxu0 %v569
    %646 = vmatpush.msra.mxu0 %v568
    %647 = vmatpush.msra.mxu0 %v567
    %648 = vmatpush.msra.mxu0 %v566
    %649 = vmatpush.msra.mxu0 %v565
    %650 = vmatpush.msra.mxu0 %v564
    %651 = vmatpush.msra.mxu0 %v563
    %652 = vmatpush.msra.mxu0 %v562
    %653 = vmatpush.msra.mxu0 %v561
    %654 = vmatpush.msra.mxu0 %v560
    %655 = vmatpush.msra.mxu0 %v559
    %656 = vmatmul.f32.gmra.mxu0 %v519
    %v657 = vpop.f32.mrf.mxu0
    %v658 = vadd.f32 0.0, %v657
    %659 = vmatmul.f32.gmra.mxu0 %v523
    %v660 = vpop.f32.mrf.mxu0
    %v661 = vadd.f32 0.0, %v660
    %662 = vmatmul.f32.gmra.mxu0 %v527
    %v663 = vpop.f32.mrf.mxu0
    %v664 = vadd.f32 0.0, %v663
    %665 = vmatmul.f32.gmra.mxu0 %v531
    %v666 = vpop.f32.mrf.mxu0
    %v667 = vadd.f32 0.0, %v666
    %668 = vmatmul.f32.gmra.mxu0 %v535
    %v669 = vpop.f32.mrf.mxu0
    %v670 = vadd.f32 0.0, %v669
    %671 = vmatmul.f32.gmra.mxu0 %v539
    %v672 = vpop.f32.mrf.mxu0
    %v673 = vadd.f32 0.0, %v672
    %674 = vmatmul.f32.gmra.mxu0 %v543
    %v675 = vpop.f32.mrf.mxu0
    %v676 = vadd.f32 0.0, %v675
    %677 = vmatmul.f32.gmra.mxu0 %v547
    %v678 = vpop.f32.mrf.mxu0
    %v679 = vadd.f32 0.0, %v678
    %680 = vmatmul.f32.gmra.mxu0 %v551
    %v681 = vpop.f32.mrf.mxu0
    %v682 = vadd.f32 0.0, %v681
    %683 = vmatmul.f32.gmra.mxu0 %v555
    %v684 = vpop.f32.mrf.mxu0
    %v685 = vadd.f32 0.0, %v684
    %686 = vdwg.mxu0
    %687 = vmatpush.msra.mxu0 %v590
    %688 = vmatpush.msra.mxu0 %v589
    %689 = vmatpush.msra.mxu0 %v588
    %690 = vmatpush.msra.mxu0 %v587
    %691 = vmatpush.msra.mxu0 %v586
    %692 = vmatpush.msra.mxu0 %v585
    %693 = vmatpush.msra.mxu0 %v584
    %694 = vmatpush.msra.mxu0 %v583
    %695 = vmatpush.msra.mxu0 %v582
    %696 = vmatpush.msra.mxu0 %v581
    %697 = vmatpush.msra.mxu0 %v580
    %698 = vmatpush.msra.mxu0 %v579
    %699 = vmatpush.msra.mxu0 %v578
    %700 = vmatpush.msra.mxu0 %v577
    %701 = vmatpush.msra.mxu0 %v576
    %702 = vmatpush.msra.mxu0 %v575
    %703 = vmatmul.f32.gmra.mxu0 %v520
    %v704 = vpop.f32.mrf.mxu0
    %v705 = vadd.f32 %v658, %v704
    %706 = vmatmul.f32.gmra.mxu0 %v524
    %v707 = vpop.f32.mrf.mxu0
    %v708 = vadd.f32 %v661, %v707
    %709 = vmatmul.f32.gmra.mxu0 %v528
    %v710 = vpop.f32.mrf.mxu0
    %v711 = vadd.f32 %v664, %v710
    %712 = vmatmul.f32.gmra.mxu0 %v532
    %v713 = vpop.f32.mrf.mxu0
    %v714 = vadd.f32 %v667, %v713
    %715 = vmatmul.f32.gmra.mxu0 %v536
    %v716 = vpop.f32.mrf.mxu0
    %v717 = vadd.f32 %v670, %v716
    %718 = vmatmul.f32.gmra.mxu0 %v540
    %v719 = vpop.f32.mrf.mxu0
    %v720 = vadd.f32 %v673, %v719
    %721 = vmatmul.f32.gmra.mxu0 %v544
    %v722 = vpop.f32.mrf.mxu0
    %v723 = vadd.f32 %v676, %v722
    %724 = vmatmul.f32.gmra.mxu0 %v548
    %v725 = vpop.f32.mrf.mxu0
    %v726 = vadd.f32 %v679, %v725
    %727 = vmatmul.f32.gmra.mxu0 %v552
    %v728 = vpop.f32.mrf.mxu0
    %v729 = vadd.f32 %v682, %v728
    %730 = vmatmul.f32.gmra.mxu0 %v556
    %v731 = vpop.f32.mrf.mxu0
    %v732 = vadd.f32 %v685, %v731
    %733 = vdwg.mxu0
    %734 = vmatpush.msra.mxu0 %v606
    %735 = vmatpush.msra.mxu0 %v605
    %736 = vmatpush.msra.mxu0 %v604
    %737 = vmatpush.msra.mxu0 %v603
    %738 = vmatpush.msra.mxu0 %v602
    %739 = vmatpush.msra.mxu0 %v601
    %740 = vmatpush.msra.mxu0 %v600
    %741 = vmatpush.msra.mxu0 %v599
    %742 = vmatpush.msra.mxu0 %v598
    %743 = vmatpush.msra.mxu0 %v597
    %744 = vmatpush.msra.mxu0 %v596
    %745 = vmatpush.msra.mxu0 %v595
    %746 = vmatpush.msra.mxu0 %v594
    %747 = vmatpush.msra.mxu0 %v593
    %748 = vmatpush.msra.mxu0 %v592
    %749 = vmatpush.msra.mxu0 %v591
    %750 = vmatmul.f32.gmra.mxu0 %v521
    %v751 = vpop.f32.mrf.mxu0
    %v752 = vadd.f32 %v705, %v751
    %753 = vmatmul.f32.gmra.mxu0 %v525
    %v754 = vpop.f32.mrf.mxu0
    %v755 = vadd.f32 %v708, %v754
    %756 = vmatmul.f32.gmra.mxu0 %v529
    %v757 = vpop.f32.mrf.mxu0
    %v758 = vadd.f32 %v711, %v757
    %759 = vmatmul.f32.gmra.mxu0 %v533
    %v760 = vpop.f32.mrf.mxu0
    %v761 = vadd.f32 %v714, %v760
    %762 = vmatmul.f32.gmra.mxu0 %v537
    %v763 = vpop.f32.mrf.mxu0
    %v764 = vadd.f32 %v717, %v763
    %765 = vmatmul.f32.gmra.mxu0 %v541
    %v766 = vpop.f32.mrf.mxu0
    %v767 = vadd.f32 %v720, %v766
    %768 = vmatmul.f32.gmra.mxu0 %v545
    %v769 = vpop.f32.mrf.mxu0
    %v770 = vadd.f32 %v723, %v769
    %771 = vmatmul.f32.gmra.mxu0 %v549
    %v772 = vpop.f32.mrf.mxu0
    %v773 = vadd.f32 %v726, %v772
    %774 = vmatmul.f32.gmra.mxu0 %v553
    %v775 = vpop.f32.mrf.mxu0
    %v776 = vadd.f32 %v729, %v775
    %777 = vmatmul.f32.gmra.mxu0 %v557
    %v778 = vpop.f32.mrf.mxu0
    %v779 = vadd.f32 %v732, %v778
    %780 = vdwg.mxu0
    %781 = vmatpush.msra.mxu0 0.0
    %782 = vmatpush.msra.mxu0 0.0
    %783 = vmatpush.msra.mxu0 0.0
    %784 = vmatpush.msra.mxu0 0.0
    %785 = vmatpush.msra.mxu0 0.0
    %786 = vmatpush.msra.mxu0 0.0
    %787 = vmatpush.msra.mxu0 0.0
    %788 = vmatpush.msra.mxu0 0.0
    %789 = vmatpush.msra.mxu0 0.0
    %790 = vmatpush.msra.mxu0 0.0
    %791 = vmatpush.msra.mxu0 0.0
    %792 = vmatpush.msra.mxu0 0.0
    %793 = vmatpush.msra.mxu0 0.0
    %794 = vmatpush.msra.mxu0 0.0
    %795 = vmatpush.msra.mxu0 %v608
    %796 = vmatpush.msra.mxu0 %v607
    %797 = vmatmul.f32.gmra.mxu0 %v611
    %v798 = vpop.f32.mrf.mxu0
    %v799 = vadd.f32 %v752, %v798
    %800 = vmatmul.f32.gmra.mxu0 %v614
    %v801 = vpop.f32.mrf.mxu0
    %v802 = vadd.f32 %v755, %v801
    %803 = vmatmul.f32.gmra.mxu0 %v617
    %v804 = vpop.f32.mrf.mxu0
    %v805 = vadd.f32 %v758, %v804
    %806 = vmatmul.f32.gmra.mxu0 %v620
    %v807 = vpop.f32.mrf.mxu0
    %v808 = vadd.f32 %v761, %v807
    %809 = vmatmul.f32.gmra.mxu0 %v623
    %v810 = vpop.f32.mrf.mxu0
    %v811 = vadd.f32 %v764, %v810
    %812 = vmatmul.f32.gmra.mxu0 %v626
    %v813 = vpop.f32.mrf.mxu0
    %v814 = vadd.f32 %v767, %v813
    %815 = vmatmul.f32.gmra.mxu0 %v629
    %v816 = vpop.f32.mrf.mxu0
    %v817 = vadd.f32 %v770, %v816
    %818 = vmatmul.f32.gmra.mxu0 %v632
    %v819 = vpop.f32.mrf.mxu0
    %v820 = vadd.f32 %v773, %v819
    %821 = vmatmul.f32.gmra.mxu0 %v635
    %v822 = vpop.f32.mrf.mxu0
    %v823 = vadd.f32 %v776, %v822
    %824 = vmatmul.f32.gmra.mxu0 %v638
    %v825 = vpop.f32.mrf.mxu0
    %v826 = vadd.f32 %v779, %v825
    %827 = vdwg.mxu0
    %v828 = vadd.f32 %v39, %v799
    %v829 = vadd.f32 %v40, %v802
    %v830 = vadd.f32 %v41, %v805
    %v831 = vadd.f32 %v42, %v808
    %v832 = vadd.f32 %v43, %v811
    %v833 = vadd.f32 %v44, %v814
    %v834 = vadd.f32 %v45, %v817
    %v835 = vadd.f32 %v46, %v820
    %v836 = vadd.f32 %v47, %v823
    %v837 = vadd.f32 %v48, %v826
    %v838 = vmax.f32 %v828, 0.0
    %v839 = vmax.f32 %v829, 0.0
    %v840 = vmax.f32 %v830, 0.0
    %v841 = vmax.f32 %v831, 0.0
    %v842 = vmax.f32 %v832, 0.0
    %v843 = vmax.f32 %v833, 0.0
    %v844 = vmax.f32 %v834, 0.0
    %v845 = vmax.f32 %v835, 0.0
    %v846 = vmax.f32 %v836, 0.0
    %v847 = vmax.f32 %v837, 0.0
    %v848 = vmul.f32 %v838, %v838
    %v849 = vmul.f32 %v839, %v839
    %v850 = vmul.f32 %v840, %v840
    %v851 = vmul.f32 %v841, %v841
    %v852 = vmul.f32 %v842, %v842
    %v853 = vmul.f32 %v843, %v843
    %v854 = vmul.f32 %v844, %v844
    %v855 = vmul.f32 %v845, %v845
    %v856 = vmul.f32 %v846, %v846
    %v857 = vmul.f32 %v847, %v847
    %858 = vadd.xlane.f32.xlu0 %v838
    %v859 = vpop.xlane.xlu0 %858
    %860 = vadd.xlane.f32.xlu0 %v839
    %v861 = vpop.xlane.xlu0 %860
    %862 = vadd.xlane.f32.xlu0 %v840
    %v863 = vpop.xlane.xlu0 %862
    %864 = vadd.xlane.f32.xlu0 %v841
    %v865 = vpop.xlane.xlu0 %864
    %866 = vadd.xlane.f32.xlu0 %v842
    %v867 = vpop.xlane.xlu0 %866
    %868 = vadd.xlane.f32.xlu0 %v843
    %v869 = vpop.xlane.xlu0 %868
    %870 = vadd.xlane.f32.xlu0 %v844
    %v871 = vpop.xlane.xlu0 %870
    %872 = vadd.xlane.f32.xlu0 %v845
    %v873 = vpop.xlane.xlu0 %872
    %874 = vadd.xlane.f32.xlu0 %v846
    %v875 = vpop.xlane.xlu0 %874
    %876 = vadd.xlane.f32.xlu0 %v847
    %v877 = vpop.xlane.xlu0 %876
    %878 = vadd.xlane.f32.xlu0 %v848
    %v879 = vpop.xlane.xlu0 %878
    %880 = vadd.xlane.f32.xlu0 %v849
    %v881 = vpop.xlane.xlu0 %880
    %882 = vadd.xlane.f32.xlu0 %v850
    %v883 = vpop.xlane.xlu0 %882
    %884 = vadd.xlane.f32.xlu0 %v851
    %v885 = vpop.xlane.xlu0 %884
    %886 = vadd.xlane.f32.xlu0 %v852
    %v887 = vpop.xlane.xlu0 %886
    %888 = vadd.xlane.f32.xlu0 %v853
    %v889 = vpop.xlane.xlu0 %888
    %890 = vadd.xlane.f32.xlu0 %v854
    %v891 = vpop.xlane.xlu0 %890
    %892 = vadd.xlane.f32.xlu0 %v855
    %v893 = vpop.xlane.xlu0 %892
    %894 = vadd.xlane.f32.xlu0 %v856
    %v895 = vpop.xlane.xlu0 %894
    %896 = vadd.xlane.f32.xlu0 %v857
    %v897 = vpop.xlane.xlu0 %896
    %v898 = vmul.f32 %v859, 0.0125
    %v899 = vmul.f32 %v861, 0.0125
    %v900 = vmul.f32 %v863, 0.0125
    %v901 = vmul.f32 %v865, 0.0125
    %v902 = vmul.f32 %v867, 0.0125
    %v903 = vmul.f32 %v869, 0.0125
    %v904 = vmul.f32 %v871, 0.0125
    %v905 = vmul.f32 %v873, 0.0125
    %v906 = vmul.f32 %v875, 0.0125
    %v907 = vmul.f32 %v877, 0.0125
    %v908 = vmul.f32 %v879, 0.0125
    %v909 = vmul.f32 %v881, 0.0125
    %v910 = vmul.f32 %v883, 0.0125
    %v911 = vmul.f32 %v885, 0.0125
    %v912 = vmul.f32 %v887, 0.0125
    %v913 = vmul.f32 %v889, 0.0125
    %v914 = vmul.f32 %v891, 0.0125
    %v915 = vmul.f32 %v893, 0.0125
    %v916 = vmul.f32 %v895, 0.0125
    %v917 = vmul.f32 %v897, 0.0125
    %v918 = vmul.f32 %v898, %v898
    %v919 = vmul.f32 %v899, %v899
    %v920 = vmul.f32 %v900, %v900
    %v921 = vmul.f32 %v901, %v901
    %v922 = vmul.f32 %v902, %v902
    %v923 = vmul.f32 %v903, %v903
    %v924 = vmul.f32 %v904, %v904
    %v925 = vmul.f32 %v905, %v905
    %v926 = vmul.f32 %v906, %v906
    %v927 = vmul.f32 %v907, %v907
    %v928 = vsub.f32 %v908, %v918
    %v929 = vsub.f32 %v909, %v919
    %v930 = vsub.f32 %v910, %v920
    %v931 = vsub.f32 %v911, %v921
    %v932 = vsub.f32 %v912, %v922
    %v933 = vsub.f32 %v913, %v923
    %v934 = vsub.f32 %v914, %v924
    %v935 = vsub.f32 %v915, %v925
    %v936 = vsub.f32 %v916, %v926
    %v937 = vsub.f32 %v917, %v927
    %v938 = vmax.f32 %v928, 0.0
    %v939 = vmax.f32 %v929, 0.0
    %v940 = vmax.f32 %v930, 0.0
    %v941 = vmax.f32 %v931, 0.0
    %v942 = vmax.f32 %v932, 0.0
    %v943 = vmax.f32 %v933, 0.0
    %v944 = vmax.f32 %v934, 0.0
    %v945 = vmax.f32 %v935, 0.0
    %v946 = vmax.f32 %v936, 0.0
    %v947 = vmax.f32 %v937, 0.0
    %v948 = vsub.f32 %v838, %v898
    %v949 = vsub.f32 %v839, %v899
    %v950 = vsub.f32 %v840, %v900
    %v951 = vsub.f32 %v841, %v901
    %v952 = vsub.f32 %v842, %v902
    %v953 = vsub.f32 %v843, %v903
    %v954 = vsub.f32 %v844, %v904
    %v955 = vsub.f32 %v845, %v905
    %v956 = vsub.f32 %v846, %v906
    %v957 = vsub.f32 %v847, %v907
    %v958 = vadd.f32 %v938, 1e-05
    %v959 = vadd.f32 %v939, 1e-05
    %v960 = vadd.f32 %v940, 1e-05
    %v961 = vadd.f32 %v941, 1e-05
    %v962 = vadd.f32 %v942, 1e-05
    %v963 = vadd.f32 %v943, 1e-05
    %v964 = vadd.f32 %v944, 1e-05
    %v965 = vadd.f32 %v945, 1e-05
    %v966 = vadd.f32 %v946, 1e-05
    %v967 = vadd.f32 %v947, 1e-05
    %v968 = vrsqrt.pop %v958
    %v969 = vmul.f32 %v968, %v958
    %v970 = vmul.f32 %v969, %v968
    %v971 = vmul.f32 0.5, %v970
    %v972 = vsub.f32 1.5, %v971
    %v973 = vmul.f32 %v968, %v972
    %vm974 = vweird.f32 %v958
    %vm975 = vweird.f32 %v968
    %vm976 = vmor %vm974, %vm975
    %v977 = vsel %vm976, %v968, %v973
    %v978 = vrsqrt.pop %v959
    %v979 = vmul.f32 %v978, %v959
    %v980 = vmul.f32 %v979, %v978
    %v981 = vmul.f32 0.5, %v980
    %v982 = vsub.f32 1.5, %v981
    %v983 = vmul.f32 %v978, %v982
    %vm984 = vweird.f32 %v959
    %vm985 = vweird.f32 %v978
    %vm986 = vmor %vm984, %vm985
    %v987 = vsel %vm986, %v978, %v983
    %v988 = vrsqrt.pop %v960
    %v989 = vmul.f32 %v988, %v960
    %v990 = vmul.f32 %v989, %v988
    %v991 = vmul.f32 0.5, %v990
    %v992 = vsub.f32 1.5, %v991
    %v993 = vmul.f32 %v988, %v992
    %vm994 = vweird.f32 %v960
    %vm995 = vweird.f32 %v988
    %vm996 = vmor %vm994, %vm995
    %v997 = vsel %vm996, %v988, %v993
    %v998 = vrsqrt.pop %v961
    %v999 = vmul.f32 %v998, %v961
    %v1000 = vmul.f32 %v999, %v998
    %v1001 = vmul.f32 0.5, %v1000
    %v1002 = vsub.f32 1.5, %v1001
    %v1003 = vmul.f32 %v998, %v1002
    %vm1004 = vweird.f32 %v961
    %vm1005 = vweird.f32 %v998
    %vm1006 = vmor %vm1004, %vm1005
    %v1007 = vsel %vm1006, %v998, %v1003
    %v1008 = vrsqrt.pop %v962
    %v1009 = vmul.f32 %v1008, %v962
    %v1010 = vmul.f32 %v1009, %v1008
    %v1011 = vmul.f32 0.5, %v1010
    %v1012 = vsub.f32 1.5, %v1011
    %v1013 = vmul.f32 %v1008, %v1012
    %vm1014 = vweird.f32 %v962
    %vm1015 = vweird.f32 %v1008
    %vm1016 = vmor %vm1014, %vm1015
    %v1017 = vsel %vm1016, %v1008, %v1013
    %v1018 = vrsqrt.pop %v963
    %v1019 = vmul.f32 %v1018, %v963
    %v1020 = vmul.f32 %v1019, %v1018
    %v1021 = vmul.f32 0.5, %v1020
    %v1022 = vsub.f32 1.5, %v1021
    %v1023 = vmul.f32 %v1018, %v1022
    %vm1024 = vweird.f32 %v963
    %vm1025 = vweird.f32 %v1018
    %vm1026 = vmor %vm1024, %vm1025
    %v1027 = vsel %vm1026, %v1018, %v1023
    %v1028 = vrsqrt.pop %v964
    %v1029 = vmul.f32 %v1028, %v964
    %v1030 = vmul.f32 %v1029, %v1028
    %v1031 = vmul.f32 0.5, %v1030
    %v1032 = vsub.f32 1.5, %v1031
    %v1033 = vmul.f32 %v1028, %v1032
    %vm1034 = vweird.f32 %v964
    %vm1035 = vweird.f32 %v1028
    %vm1036 = vmor %vm1034, %vm1035
    %v1037 = vsel %vm1036, %v1028, %v1033
    %v1038 = vrsqrt.pop %v965
    %v1039 = vmul.f32 %v1038, %v965
    %v1040 = vmul.f32 %v1039, %v1038
    %v1041 = vmul.f32 0.5, %v1040
    %v1042 = vsub.f32 1.5, %v1041
    %v1043 = vmul.f32 %v1038, %v1042
    %vm1044 = vweird.f32 %v965
    %vm1045 = vweird.f32 %v1038
    %vm1046 = vmor %vm1044, %vm1045
    %v1047 = vsel %vm1046, %v1038, %v1043
    %v1048 = vrsqrt.pop %v966
    %v1049 = vmul.f32 %v1048, %v966
    %v1050 = vmul.f32 %v1049, %v1048
    %v1051 = vmul.f32 0.5, %v1050
    %v1052 = vsub.f32 1.5, %v1051
    %v1053 = vmul.f32 %v1048, %v1052
    %vm1054 = vweird.f32 %v966
    %vm1055 = vweird.f32 %v1048
    %vm1056 = vmor %vm1054, %vm1055
    %v1057 = vsel %vm1056, %v1048, %v1053
    %v1058 = vrsqrt.pop %v967
    %v1059 = vmul.f32 %v1058, %v967
    %v1060 = vmul.f32 %v1059, %v1058
    %v1061 = vmul.f32 0.5, %v1060
    %v1062 = vsub.f32 1.5, %v1061
    %v1063 = vmul.f32 %v1058, %v1062
    %vm1064 = vweird.f32 %v967
    %vm1065 = vweird.f32 %v1058
    %vm1066 = vmor %vm1064, %vm1065
    %v1067 = vsel %vm1066, %v1058, %v1063
    %v1068 = vmul.f32 %v948, %v977
    %v1069 = vmul.f32 %v949, %v987
    %v1070 = vmul.f32 %v950, %v997
    %v1071 = vmul.f32 %v951, %v1007
    %v1072 = vmul.f32 %v952, %v1017
    %v1073 = vmul.f32 %v953, %v1027
    %v1074 = vmul.f32 %v954, %v1037
    %v1075 = vmul.f32 %v955, %v1047
    %v1076 = vmul.f32 %v956, %v1057
    %v1077 = vmul.f32 %v957, %v1067
    %1078 = vrot.lane.b32.xlu0 %v1068, 2
    %v1079 = vpop.permute.xlu0 %1078
    %1080 = vrot.lane.b32.xlu0 %v1069, 2
    %v1081 = vpop.permute.xlu0 %1080
    %1082 = vrot.lane.b32.xlu0 %v1070, 2
    %v1083 = vpop.permute.xlu0 %1082
    %1084 = vrot.lane.b32.xlu0 %v1071, 2
    %v1085 = vpop.permute.xlu0 %1084
    %1086 = vrot.lane.b32.xlu0 %v1072, 2
    %v1087 = vpop.permute.xlu0 %1086
    %1088 = vrot.lane.b32.xlu0 %v1073, 2
    %v1089 = vpop.permute.xlu0 %1088
    %1090 = vrot.lane.b32.xlu0 %v1074, 2
    %v1091 = vpop.permute.xlu0 %1090
    %1092 = vrot.lane.b32.xlu0 %v1075, 2
    %v1093 = vpop.permute.xlu0 %1092
    %1094 = vrot.lane.b32.xlu0 %v1076, 2
    %v1095 = vpop.permute.xlu0 %1094
    %1096 = vrot.lane.b32.xlu0 %v1077, 2
    %v1097 = vpop.permute.xlu0 %1096
    %v1098 = vld [vmem:[%s5] sm:$0xff]
    %v1099 = vld [vmem:[%s5 + $0x8] sm:$0xff]
    %v1100 = vld [vmem:[%s5 + $0x10] sm:$0xff]
    %v1101 = vld [vmem:[%s5 + $0x18] sm:$0xff]
    %v1102 = vld [vmem:[%s5 + $0x20] sm:$0xff]
    %v1103 = vld [vmem:[%s5 + $0x28] sm:$0xff]
    %v1104 = vld [vmem:[%s5 + $0x30] sm:$0xff]
    %v1105 = vld [vmem:[%s5 + $0x38] sm:$0xff]
    %v1106 = vld [vmem:[%s5 + $0x40] sm:$0xff]
    %v1107 = vld [vmem:[%s5 + $0x48] sm:$0xff]
    %v1108 = vmul.f32 %v1079, %v1098
    %v1109 = vmul.f32 %v1081, %v1099
    %v1110 = vmul.f32 %v1083, %v1100
    %v1111 = vmul.f32 %v1085, %v1101
    %v1112 = vmul.f32 %v1087, %v1102
    %v1113 = vmul.f32 %v1089, %v1103
    %v1114 = vmul.f32 %v1091, %v1104
    %v1115 = vmul.f32 %v1093, %v1105
    %v1116 = vmul.f32 %v1095, %v1106
    %v1117 = vmul.f32 %v1097, %v1107
    %1118 = vst [vmem:[#allocation2] sm:$0xff] %v1108
    %1119 = vst [vmem:[#allocation2 + $0x8] sm:$0xff] %v1109
    %1120 = vst [vmem:[#allocation2 + $0x10] sm:$0xff] %v1110
    %1121 = vst [vmem:[#allocation2 + $0x18] sm:$0xff] %v1111
    %1122 = vst [vmem:[#allocation2 + $0x20] sm:$0xff] %v1112
    %1123 = vst [vmem:[#allocation2 + $0x28] sm:$0xff] %v1113
    %1124 = vst [vmem:[#allocation2 + $0x30] sm:$0xff] %v1114
    %1125 = vst [vmem:[#allocation2 + $0x38] sm:$0xff] %v1115
    %1126 = vst [vmem:[#allocation2 + $0x40] sm:$0xff] %v1116
    %1127 = vst [vmem:[#allocation2 + $0x48] sm:$0xff] %v1117
    %1128 = vrot.lane.b32.xlu0 %v1068, 1
    %v1129 = vpop.permute.xlu0 %1128
    %1130 = vrot.lane.b32.xlu0 %v1069, 1
    %v1131 = vpop.permute.xlu0 %1130
    %1132 = vrot.lane.b32.xlu0 %v1070, 1
    %v1133 = vpop.permute.xlu0 %1132
    %1134 = vrot.lane.b32.xlu0 %v1071, 1
    %v1135 = vpop.permute.xlu0 %1134
    %1136 = vrot.lane.b32.xlu0 %v1072, 1
    %v1137 = vpop.permute.xlu0 %1136
    %1138 = vrot.lane.b32.xlu0 %v1073, 1
    %v1139 = vpop.permute.xlu0 %1138
    %1140 = vrot.lane.b32.xlu0 %v1074, 1
    %v1141 = vpop.permute.xlu0 %1140
    %1142 = vrot.lane.b32.xlu0 %v1075, 1
    %v1143 = vpop.permute.xlu0 %1142
    %1144 = vrot.lane.b32.xlu0 %v1076, 1
    %v1145 = vpop.permute.xlu0 %1144
    %1146 = vrot.lane.b32.xlu0 %v1077, 1
    %v1147 = vpop.permute.xlu0 %1146
    %v1148 = vld [vmem:[%s5 + $0x50] sm:$0xff]
    %v1149 = vld [vmem:[%s5 + $0x58] sm:$0xff]
    %v1150 = vld [vmem:[%s5 + $0x60] sm:$0xff]
    %v1151 = vld [vmem:[%s5 + $0x68] sm:$0xff]
    %v1152 = vld [vmem:[%s5 + $0x70] sm:$0xff]
    %v1153 = vld [vmem:[%s5 + $0x78] sm:$0xff]
    %v1154 = vld [vmem:[%s5 + $0x80] sm:$0xff]
    %v1155 = vld [vmem:[%s5 + $0x88] sm:$0xff]
    %v1156 = vld [vmem:[%s5 + $0x90] sm:$0xff]
    %v1157 = vld [vmem:[%s5 + $0x98] sm:$0xff]
    %v1158 = vmul.f32 %v1129, %v1148
    %v1159 = vmul.f32 %v1131, %v1149
    %v1160 = vmul.f32 %v1133, %v1150
    %v1161 = vmul.f32 %v1135, %v1151
    %v1162 = vmul.f32 %v1137, %v1152
    %v1163 = vmul.f32 %v1139, %v1153
    %v1164 = vmul.f32 %v1141, %v1154
    %v1165 = vmul.f32 %v1143, %v1155
    %v1166 = vmul.f32 %v1145, %v1156
    %v1167 = vmul.f32 %v1147, %v1157
    %1168 = vst [vmem:[#allocation2 + $0x50] sm:$0xff] %v1158
    %1169 = vst [vmem:[#allocation2 + $0x58] sm:$0xff] %v1159
    %1170 = vst [vmem:[#allocation2 + $0x60] sm:$0xff] %v1160
    %1171 = vst [vmem:[#allocation2 + $0x68] sm:$0xff] %v1161
    %1172 = vst [vmem:[#allocation2 + $0x70] sm:$0xff] %v1162
    %1173 = vst [vmem:[#allocation2 + $0x78] sm:$0xff] %v1163
    %1174 = vst [vmem:[#allocation2 + $0x80] sm:$0xff] %v1164
    %1175 = vst [vmem:[#allocation2 + $0x88] sm:$0xff] %v1165
    %1176 = vst [vmem:[#allocation2 + $0x90] sm:$0xff] %v1166
    %1177 = vst [vmem:[#allocation2 + $0x98] sm:$0xff] %v1167
    %v1178 = vld [vmem:[%s5 + $0xa0] sm:$0xff]
    %v1179 = vld [vmem:[%s5 + $0xa8] sm:$0xff]
    %v1180 = vld [vmem:[%s5 + $0xb0] sm:$0xff]
    %v1181 = vld [vmem:[%s5 + $0xb8] sm:$0xff]
    %v1182 = vld [vmem:[%s5 + $0xc0] sm:$0xff]
    %v1183 = vld [vmem:[%s5 + $0xc8] sm:$0xff]
    %v1184 = vld [vmem:[%s5 + $0xd0] sm:$0xff]
    %v1185 = vld [vmem:[%s5 + $0xd8] sm:$0xff]
    %v1186 = vld [vmem:[%s5 + $0xe0] sm:$0xff]
    %v1187 = vld [vmem:[%s5 + $0xe8] sm:$0xff]
    %v1188 = vmul.f32 %v1068, %v1178
    %v1189 = vmul.f32 %v1069, %v1179
    %v1190 = vmul.f32 %v1070, %v1180
    %v1191 = vmul.f32 %v1071, %v1181
    %v1192 = vmul.f32 %v1072, %v1182
    %v1193 = vmul.f32 %v1073, %v1183
    %v1194 = vmul.f32 %v1074, %v1184
    %v1195 = vmul.f32 %v1075, %v1185
    %v1196 = vmul.f32 %v1076, %v1186
    %v1197 = vmul.f32 %v1077, %v1187
    %1198 = vst [vmem:[#allocation2 + $0xa0] sm:$0xff] %v1188
    %1199 = vst [vmem:[#allocation2 + $0xa8] sm:$0xff] %v1189
    %1200 = vst [vmem:[#allocation2 + $0xb0] sm:$0xff] %v1190
    %1201 = vst [vmem:[#allocation2 + $0xb8] sm:$0xff] %v1191
    %1202 = vst [vmem:[#allocation2 + $0xc0] sm:$0xff] %v1192
    %1203 = vst [vmem:[#allocation2 + $0xc8] sm:$0xff] %v1193
    %1204 = vst [vmem:[#allocation2 + $0xd0] sm:$0xff] %v1194
    %1205 = vst [vmem:[#allocation2 + $0xd8] sm:$0xff] %v1195
    %1206 = vst [vmem:[#allocation2 + $0xe0] sm:$0xff] %v1196
    %1207 = vst [vmem:[#allocation2 + $0xe8] sm:$0xff] %v1197
    %1208 = vrot.lane.b32.xlu0 %v1068, 127
    %v1209 = vpop.permute.xlu0 %1208
    %1210 = vrot.lane.b32.xlu0 %v1069, 127
    %v1211 = vpop.permute.xlu0 %1210
    %1212 = vrot.lane.b32.xlu0 %v1070, 127
    %v1213 = vpop.permute.xlu0 %1212
    %1214 = vrot.lane.b32.xlu0 %v1071, 127
    %v1215 = vpop.permute.xlu0 %1214
    %1216 = vrot.lane.b32.xlu0 %v1072, 127
    %v1217 = vpop.permute.xlu0 %1216
    %1218 = vrot.lane.b32.xlu0 %v1073, 127
    %v1219 = vpop.permute.xlu0 %1218
    %1220 = vrot.lane.b32.xlu0 %v1074, 127
    %v1221 = vpop.permute.xlu0 %1220
    %1222 = vrot.lane.b32.xlu0 %v1075, 127
    %v1223 = vpop.permute.xlu0 %1222
    %1224 = vrot.lane.b32.xlu0 %v1076, 127
    %v1225 = vpop.permute.xlu0 %1224
    %1226 = vrot.lane.b32.xlu0 %v1077, 127
    %v1227 = vpop.permute.xlu0 %1226
    %v1228 = vld [vmem:[%s5 + $0xf0] sm:$0xff]
    %v1229 = vld [vmem:[%s5 + $0xf8] sm:$0xff]
    %v1230 = vld [vmem:[%s5 + $0x100] sm:$0xff]
    %v1231 = vld [vmem:[%s5 + $0x108] sm:$0xff]
    %v1232 = vld [vmem:[%s5 + $0x110] sm:$0xff]
    %v1233 = vld [vmem:[%s5 + $0x118] sm:$0xff]
    %v1234 = vld [vmem:[%s5 + $0x120] sm:$0xff]
    %v1235 = vld [vmem:[%s5 + $0x128] sm:$0xff]
    %v1236 = vld [vmem:[%s5 + $0x130] sm:$0xff]
    %v1237 = vld [vmem:[%s5 + $0x138] sm:$0xff]
    %v1238 = vmul.f32 %v1209, %v1228
    %v1239 = vmul.f32 %v1211, %v1229
    %v1240 = vmul.f32 %v1213, %v1230
    %v1241 = vmul.f32 %v1215, %v1231
    %v1242 = vmul.f32 %v1217, %v1232
    %v1243 = vmul.f32 %v1219, %v1233
    %v1244 = vmul.f32 %v1221, %v1234
    %v1245 = vmul.f32 %v1223, %v1235
    %v1246 = vmul.f32 %v1225, %v1236
    %v1247 = vmul.f32 %v1227, %v1237
    %1248 = vst [vmem:[#allocation2 + $0xf0] sm:$0xff] %v1238
    %1249 = vst [vmem:[#allocation2 + $0xf8] sm:$0xff] %v1239
    %1250 = vst [vmem:[#allocation2 + $0x100] sm:$0xff] %v1240
    %1251 = vst [vmem:[#allocation2 + $0x108] sm:$0xff] %v1241
    %1252 = vst [vmem:[#allocation2 + $0x110] sm:$0xff] %v1242
    %1253 = vst [vmem:[#allocation2 + $0x118] sm:$0xff] %v1243
    %1254 = vst [vmem:[#allocation2 + $0x120] sm:$0xff] %v1244
    %1255 = vst [vmem:[#allocation2 + $0x128] sm:$0xff] %v1245
    %1256 = vst [vmem:[#allocation2 + $0x130] sm:$0xff] %v1246
    %1257 = vst [vmem:[#allocation2 + $0x138] sm:$0xff] %v1247
    %1258 = vrot.lane.b32.xlu0 %v1068, 126
    %v1259 = vpop.permute.xlu0 %1258
    %1260 = vrot.lane.b32.xlu0 %v1069, 126
    %v1261 = vpop.permute.xlu0 %1260
    %1262 = vrot.lane.b32.xlu0 %v1070, 126
    %v1263 = vpop.permute.xlu0 %1262
    %1264 = vrot.lane.b32.xlu0 %v1071, 126
    %v1265 = vpop.permute.xlu0 %1264
    %1266 = vrot.lane.b32.xlu0 %v1072, 126
    %v1267 = vpop.permute.xlu0 %1266
    %1268 = vrot.lane.b32.xlu0 %v1073, 126
    %v1269 = vpop.permute.xlu0 %1268
    %1270 = vrot.lane.b32.xlu0 %v1074, 126
    %v1271 = vpop.permute.xlu0 %1270
    %1272 = vrot.lane.b32.xlu0 %v1075, 126
    %v1273 = vpop.permute.xlu0 %1272
    %1274 = vrot.lane.b32.xlu0 %v1076, 126
    %v1275 = vpop.permute.xlu0 %1274
    %1276 = vrot.lane.b32.xlu0 %v1077, 126
    %v1277 = vpop.permute.xlu0 %1276
    %v1278 = vld [vmem:[%s5 + $0x140] sm:$0xff]
    %v1279 = vld [vmem:[%s5 + $0x148] sm:$0xff]
    %v1280 = vld [vmem:[%s5 + $0x150] sm:$0xff]
    %v1281 = vld [vmem:[%s5 + $0x158] sm:$0xff]
    %v1282 = vld [vmem:[%s5 + $0x160] sm:$0xff]
    %v1283 = vld [vmem:[%s5 + $0x168] sm:$0xff]
    %v1284 = vld [vmem:[%s5 + $0x170] sm:$0xff]
    %v1285 = vld [vmem:[%s5 + $0x178] sm:$0xff]
    %v1286 = vld [vmem:[%s5 + $0x180] sm:$0xff]
    %v1287 = vld [vmem:[%s5 + $0x188] sm:$0xff]
    %v1288 = vmul.f32 %v1259, %v1278
    %v1289 = vmul.f32 %v1261, %v1279
    %v1290 = vmul.f32 %v1263, %v1280
    %v1291 = vmul.f32 %v1265, %v1281
    %v1292 = vmul.f32 %v1267, %v1282
    %v1293 = vmul.f32 %v1269, %v1283
    %v1294 = vmul.f32 %v1271, %v1284
    %v1295 = vmul.f32 %v1273, %v1285
    %v1296 = vmul.f32 %v1275, %v1286
    %v1297 = vmul.f32 %v1277, %v1287
    %1298 = vst [vmem:[#allocation2 + $0x140] sm:$0xff] %v1288
    %1299 = vst [vmem:[#allocation2 + $0x148] sm:$0xff] %v1289
    %1300 = vst [vmem:[#allocation2 + $0x150] sm:$0xff] %v1290
    %1301 = vst [vmem:[#allocation2 + $0x158] sm:$0xff] %v1291
    %1302 = vst [vmem:[#allocation2 + $0x160] sm:$0xff] %v1292
    %1303 = vst [vmem:[#allocation2 + $0x168] sm:$0xff] %v1293
    %1304 = vst [vmem:[#allocation2 + $0x170] sm:$0xff] %v1294
    %1305 = vst [vmem:[#allocation2 + $0x178] sm:$0xff] %v1295
    %1306 = vst [vmem:[#allocation2 + $0x180] sm:$0xff] %v1296
    %1307 = vst [vmem:[#allocation2 + $0x188] sm:$0xff] %v1297
    %s1308 = scalar_lea.vmem [#allocation3], 320
    %v1309 = vld [vmem:[%s1308] sm:$0xff]
    %v1310 = vld [vmem:[%s1308 + $0x8] sm:$0xff]
    %v1311 = vld [vmem:[%s1308 + $0x10] sm:$0xff]
    %v1312 = vld [vmem:[%s1308 + $0x18] sm:$0xff]
    %v1313 = vld [vmem:[%s1308 + $0x20] sm:$0xff]
    %v1314 = vld [vmem:[%s1308 + $0x28] sm:$0xff]
    %v1315 = vld [vmem:[%s1308 + $0x30] sm:$0xff]
    %v1316 = vld [vmem:[%s1308 + $0x38] sm:$0xff]
    %v1317 = vld [vmem:[%s1308 + $0x40] sm:$0xff]
    %v1318 = vld [vmem:[%s1308 + $0x48] sm:$0xff]
    %v1319 = vld [vmem:[%s1308 + $0x50] sm:$0xff]
    %v1320 = vld [vmem:[%s1308 + $0x58] sm:$0xff]
    %v1321 = vld [vmem:[%s1308 + $0x60] sm:$0xff]
    %v1322 = vld [vmem:[%s1308 + $0x68] sm:$0xff]
    %v1323 = vld [vmem:[%s1308 + $0x70] sm:$0xff]
    %v1324 = vld [vmem:[%s1308 + $0x78] sm:$0xff]
    %v1325 = vld [vmem:[%s1308 + $0x80] sm:$0xff]
    %v1326 = vld [vmem:[%s1308 + $0x88] sm:$0xff]
    %v1327 = vld [vmem:[%s1308 + $0x90] sm:$0xff]
    %v1328 = vld [vmem:[%s1308 + $0x98] sm:$0xff]
    %v1329 = vld [vmem:[%s1308 + $0xa0] sm:$0xff]
    %v1330 = vld [vmem:[%s1308 + $0xa8] sm:$0xff]
    %v1331 = vld [vmem:[%s1308 + $0xb0] sm:$0xff]
    %v1332 = vld [vmem:[%s1308 + $0xb8] sm:$0xff]
    %v1333 = vld [vmem:[%s1308 + $0xc0] sm:$0xff]
    %v1334 = vld [vmem:[%s1308 + $0xc8] sm:$0xff]
    %v1335 = vld [vmem:[%s1308 + $0xd0] sm:$0xff]
    %v1336 = vld [vmem:[%s1308 + $0xd8] sm:$0xff]
    %v1337 = vld [vmem:[%s1308 + $0xe0] sm:$0xff]
    %v1338 = vld [vmem:[%s1308 + $0xe8] sm:$0xff]
    %v1339 = vld [vmem:[%s1308 + $0xf0] sm:$0xff]
    %v1340 = vld [vmem:[%s1308 + $0xf8] sm:$0xff]
    %v1341 = vld [vmem:[%s1308 + $0x100] sm:$0xff]
    %v1342 = vld [vmem:[%s1308 + $0x108] sm:$0xff]
    %v1343 = vld [vmem:[%s1308 + $0x110] sm:$0xff]
    %v1344 = vld [vmem:[%s1308 + $0x118] sm:$0xff]
    %v1345 = vld [vmem:[%s1308 + $0x120] sm:$0xff]
    %v1346 = vld [vmem:[%s1308 + $0x128] sm:$0xff]
    %v1347 = vld [vmem:[%s1308 + $0x130] sm:$0xff]
    %v1348 = vld [vmem:[%s1308 + $0x138] sm:$0xff]
    %v1349 = vld [vmem:[#allocation2] sm:$0xff]
    %v1350 = vld [vmem:[#allocation2 + $0x8] sm:$0xff]
    %v1351 = vld [vmem:[#allocation2 + $0x10] sm:$0xff]
    %v1352 = vld [vmem:[#allocation2 + $0x18] sm:$0xff]
    %v1353 = vld [vmem:[#allocation2 + $0x20] sm:$0xff]
    %v1354 = vld [vmem:[#allocation2 + $0x28] sm:$0xff]
    %v1355 = vld [vmem:[#allocation2 + $0x30] sm:$0xff]
    %v1356 = vld [vmem:[#allocation2 + $0x38] sm:$0xff]
    %v1357 = vld [vmem:[#allocation2 + $0x40] sm:$0xff]
    %v1358 = vld [vmem:[#allocation2 + $0x48] sm:$0xff]
    %v1359 = vld [vmem:[#allocation2 + $0x50] sm:$0xff]
    %v1360 = vld [vmem:[#allocation2 + $0x58] sm:$0xff]
    %v1361 = vld [vmem:[#allocation2 + $0x60] sm:$0xff]
    %v1362 = vld [vmem:[#allocation2 + $0x68] sm:$0xff]
    %v1363 = vld [vmem:[#allocation2 + $0x70] sm:$0xff]
    %v1364 = vld [vmem:[#allocation2 + $0x78] sm:$0xff]
    %v1365 = vld [vmem:[#allocation2 + $0x80] sm:$0xff]
    %v1366 = vld [vmem:[#allocation2 + $0x88] sm:$0xff]
    %v1367 = vld [vmem:[#allocation2 + $0x90] sm:$0xff]
    %v1368 = vld [vmem:[#allocation2 + $0x98] sm:$0xff]
    %v1369 = vld [vmem:[#allocation2 + $0xa0] sm:$0xff]
    %v1370 = vld [vmem:[#allocation2 + $0xa8] sm:$0xff]
    %v1371 = vld [vmem:[#allocation2 + $0xb0] sm:$0xff]
    %v1372 = vld [vmem:[#allocation2 + $0xb8] sm:$0xff]
    %v1373 = vld [vmem:[#allocation2 + $0xc0] sm:$0xff]
    %v1374 = vld [vmem:[#allocation2 + $0xc8] sm:$0xff]
    %v1375 = vld [vmem:[#allocation2 + $0xd0] sm:$0xff]
    %v1376 = vld [vmem:[#allocation2 + $0xd8] sm:$0xff]
    %v1377 = vld [vmem:[#allocation2 + $0xe0] sm:$0xff]
    %v1378 = vld [vmem:[#allocation2 + $0xe8] sm:$0xff]
    %v1379 = vld [vmem:[#allocation2 + $0xf0] sm:$0xff]
    %v1380 = vld [vmem:[#allocation2 + $0xf8] sm:$0xff]
    %v1381 = vld [vmem:[#allocation2 + $0x100] sm:$0xff]
    %v1382 = vld [vmem:[#allocation2 + $0x108] sm:$0xff]
    %v1383 = vld [vmem:[#allocation2 + $0x110] sm:$0xff]
    %v1384 = vld [vmem:[#allocation2 + $0x118] sm:$0xff]
    %v1385 = vld [vmem:[#allocation2 + $0x120] sm:$0xff]
    %v1386 = vld [vmem:[#allocation2 + $0x128] sm:$0xff]
    %v1387 = vld [vmem:[#allocation2 + $0x130] sm:$0xff]
    %v1388 = vld [vmem:[#allocation2 + $0x138] sm:$0xff]
    %v1389 = vld [vmem:[#allocation2 + $0x140] sm:$0xff]
    %v1390 = vld [vmem:[#allocation2 + $0x148] sm:$0xff]
    %v1391 = vld [vmem:[#allocation2 + $0x150] sm:$0xff]
    %v1392 = vld [vmem:[#allocation2 + $0x158] sm:$0xff]
    %v1393 = vld [vmem:[#allocation2 + $0x160] sm:$0xff]
    %v1394 = vld [vmem:[#allocation2 + $0x168] sm:$0xff]
    %v1395 = vld [vmem:[#allocation2 + $0x170] sm:$0xff]
    %v1396 = vld [vmem:[#allocation2 + $0x178] sm:$0xff]
    %v1397 = vld [vmem:[#allocation2 + $0x180] sm:$0xff]
    %v1398 = vld [vmem:[#allocation2 + $0x188] sm:$0xff]
    %v1400 = vsel %vm609, %v1312, 0
    %v1403 = vsel %vm609, %v1316, 0
    %v1406 = vsel %vm609, %v1320, 0
    %v1409 = vsel %vm609, %v1324, 0
    %v1412 = vsel %vm609, %v1328, 0
    %v1415 = vsel %vm609, %v1332, 0
    %v1418 = vsel %vm609, %v1336, 0
    %v1421 = vsel %vm609, %v1340, 0
    %v1424 = vsel %vm609, %v1344, 0
    %v1427 = vsel %vm609, %v1348, 0
    %1429 = vmatpush.msra.mxu0 %v1364
    %1430 = vmatpush.msra.mxu0 %v1363
    %1431 = vmatpush.msra.mxu0 %v1362
    %1432 = vmatpush.msra.mxu0 %v1361
    %1433 = vmatpush.msra.mxu0 %v1360
    %1434 = vmatpush.msra.mxu0 %v1359
    %1435 = vmatpush.msra.mxu0 %v1358
    %1436 = vmatpush.msra.mxu0 %v1357
    %1437 = vmatpush.msra.mxu0 %v1356
    %1438 = vmatpush.msra.mxu0 %v1355
    %1439 = vmatpush.msra.mxu0 %v1354
    %1440 = vmatpush.msra.mxu0 %v1353
    %1441 = vmatpush.msra.mxu0 %v1352
    %1442 = vmatpush.msra.mxu0 %v1351
    %1443 = vmatpush.msra.mxu0 %v1350
    %1444 = vmatpush.msra.mxu0 %v1349
    %1445 = vmatmul.f32.gmra.mxu0 %v1309
    %v1446 = vpop.f32.mrf.mxu0
    %v1447 = vadd.f32 0.0, %v1446
    %1448 = vmatmul.f32.gmra.mxu0 %v1313
    %v1449 = vpop.f32.mrf.mxu0
    %v1450 = vadd.f32 0.0, %v1449
    %1451 = vmatmul.f32.gmra.mxu0 %v1317
    %v1452 = vpop.f32.mrf.mxu0
    %v1453 = vadd.f32 0.0, %v1452
    %1454 = vmatmul.f32.gmra.mxu0 %v1321
    %v1455 = vpop.f32.mrf.mxu0
    %v1456 = vadd.f32 0.0, %v1455
    %1457 = vmatmul.f32.gmra.mxu0 %v1325
    %v1458 = vpop.f32.mrf.mxu0
    %v1459 = vadd.f32 0.0, %v1458
    %1460 = vmatmul.f32.gmra.mxu0 %v1329
    %v1461 = vpop.f32.mrf.mxu0
    %v1462 = vadd.f32 0.0, %v1461
    %1463 = vmatmul.f32.gmra.mxu0 %v1333
    %v1464 = vpop.f32.mrf.mxu0
    %v1465 = vadd.f32 0.0, %v1464
    %1466 = vmatmul.f32.gmra.mxu0 %v1337
    %v1467 = vpop.f32.mrf.mxu0
    %v1468 = vadd.f32 0.0, %v1467
    %1469 = vmatmul.f32.gmra.mxu0 %v1341
    %v1470 = vpop.f32.mrf.mxu0
    %v1471 = vadd.f32 0.0, %v1470
    %1472 = vmatmul.f32.gmra.mxu0 %v1345
    %v1473 = vpop.f32.mrf.mxu0
    %v1474 = vadd.f32 0.0, %v1473
    %1475 = vdwg.mxu0
    %1476 = vmatpush.msra.mxu0 %v1380
    %1477 = vmatpush.msra.mxu0 %v1379
    %1478 = vmatpush.msra.mxu0 %v1378
    %1479 = vmatpush.msra.mxu0 %v1377
    %1480 = vmatpush.msra.mxu0 %v1376
    %1481 = vmatpush.msra.mxu0 %v1375
    %1482 = vmatpush.msra.mxu0 %v1374
    %1483 = vmatpush.msra.mxu0 %v1373
    %1484 = vmatpush.msra.mxu0 %v1372
    %1485 = vmatpush.msra.mxu0 %v1371
    %1486 = vmatpush.msra.mxu0 %v1370
    %1487 = vmatpush.msra.mxu0 %v1369
    %1488 = vmatpush.msra.mxu0 %v1368
    %1489 = vmatpush.msra.mxu0 %v1367
    %1490 = vmatpush.msra.mxu0 %v1366
    %1491 = vmatpush.msra.mxu0 %v1365
    %1492 = vmatmul.f32.gmra.mxu0 %v1310
    %v1493 = vpop.f32.mrf.mxu0
    %v1494 = vadd.f32 %v1447, %v1493
    %1495 = vmatmul.f32.gmra.mxu0 %v1314
    %v1496 = vpop.f32.mrf.mxu0
    %v1497 = vadd.f32 %v1450, %v1496
    %1498 = vmatmul.f32.gmra.mxu0 %v1318
    %v1499 = vpop.f32.mrf.mxu0
    %v1500 = vadd.f32 %v1453, %v1499
    %1501 = vmatmul.f32.gmra.mxu0 %v1322
    %v1502 = vpop.f32.mrf.mxu0
    %v1503 = vadd.f32 %v1456, %v1502
    %1504 = vmatmul.f32.gmra.mxu0 %v1326
    %v1505 = vpop.f32.mrf.mxu0
    %v1506 = vadd.f32 %v1459, %v1505
    %1507 = vmatmul.f32.gmra.mxu0 %v1330
    %v1508 = vpop.f32.mrf.mxu0
    %v1509 = vadd.f32 %v1462, %v1508
    %1510 = vmatmul.f32.gmra.mxu0 %v1334
    %v1511 = vpop.f32.mrf.mxu0
    %v1512 = vadd.f32 %v1465, %v1511
    %1513 = vmatmul.f32.gmra.mxu0 %v1338
    %v1514 = vpop.f32.mrf.mxu0
    %v1515 = vadd.f32 %v1468, %v1514
    %1516 = vmatmul.f32.gmra.mxu0 %v1342
    %v1517 = vpop.f32.mrf.mxu0
    %v1518 = vadd.f32 %v1471, %v1517
    %1519 = vmatmul.f32.gmra.mxu0 %v1346
    %v1520 = vpop.f32.mrf.mxu0
    %v1521 = vadd.f32 %v1474, %v1520
    %1522 = vdwg.mxu0
    %1523 = vmatpush.msra.mxu0 %v1396
    %1524 = vmatpush.msra.mxu0 %v1395
    %1525 = vmatpush.msra.mxu0 %v1394
    %1526 = vmatpush.msra.mxu0 %v1393
    %1527 = vmatpush.msra.mxu0 %v1392
    %1528 = vmatpush.msra.mxu0 %v1391
    %1529 = vmatpush.msra.mxu0 %v1390
    %1530 = vmatpush.msra.mxu0 %v1389
    %1531 = vmatpush.msra.mxu0 %v1388
    %1532 = vmatpush.msra.mxu0 %v1387
    %1533 = vmatpush.msra.mxu0 %v1386
    %1534 = vmatpush.msra.mxu0 %v1385
    %1535 = vmatpush.msra.mxu0 %v1384
    %1536 = vmatpush.msra.mxu0 %v1383
    %1537 = vmatpush.msra.mxu0 %v1382
    %1538 = vmatpush.msra.mxu0 %v1381
    %1539 = vmatmul.f32.gmra.mxu0 %v1311
    %v1540 = vpop.f32.mrf.mxu0
    %v1541 = vadd.f32 %v1494, %v1540
    %1542 = vmatmul.f32.gmra.mxu0 %v1315
    %v1543 = vpop.f32.mrf.mxu0
    %v1544 = vadd.f32 %v1497, %v1543
    %1545 = vmatmul.f32.gmra.mxu0 %v1319
    %v1546 = vpop.f32.mrf.mxu0
    %v1547 = vadd.f32 %v1500, %v1546
    %1548 = vmatmul.f32.gmra.mxu0 %v1323
    %v1549 = vpop.f32.mrf.mxu0
    %v1550 = vadd.f32 %v1503, %v1549
    %1551 = vmatmul.f32.gmra.mxu0 %v1327
    %v1552 = vpop.f32.mrf.mxu0
    %v1553 = vadd.f32 %v1506, %v1552
    %1554 = vmatmul.f32.gmra.mxu0 %v1331
    %v1555 = vpop.f32.mrf.mxu0
    %v1556 = vadd.f32 %v1509, %v1555
    %1557 = vmatmul.f32.gmra.mxu0 %v1335
    %v1558 = vpop.f32.mrf.mxu0
    %v1559 = vadd.f32 %v1512, %v1558
    %1560 = vmatmul.f32.gmra.mxu0 %v1339
    %v1561 = vpop.f32.mrf.mxu0
    %v1562 = vadd.f32 %v1515, %v1561
    %1563 = vmatmul.f32.gmra.mxu0 %v1343
    %v1564 = vpop.f32.mrf.mxu0
    %v1565 = vadd.f32 %v1518, %v1564
    %1566 = vmatmul.f32.gmra.mxu0 %v1347
    %v1567 = vpop.f32.mrf.mxu0
    %v1568 = vadd.f32 %v1521, %v1567
    %1569 = vdwg.mxu0
    %1570 = vmatpush.msra.mxu0 0.0
    %1571 = vmatpush.msra.mxu0 0.0
    %1572 = vmatpush.msra.mxu0 0.0
    %1573 = vmatpush.msra.mxu0 0.0
    %1574 = vmatpush.msra.mxu0 0.0
    %1575 = vmatpush.msra.mxu0 0.0
    %1576 = vmatpush.msra.mxu0 0.0
    %1577 = vmatpush.msra.mxu0 0.0
    %1578 = vmatpush.msra.mxu0 0.0
    %1579 = vmatpush.msra.mxu0 0.0
    %1580 = vmatpush.msra.mxu0 0.0
    %1581 = vmatpush.msra.mxu0 0.0
    %1582 = vmatpush.msra.mxu0 0.0
    %1583 = vmatpush.msra.mxu0 0.0
    %1584 = vmatpush.msra.mxu0 %v1398
    %1585 = vmatpush.msra.mxu0 %v1397
    %1586 = vmatmul.f32.gmra.mxu0 %v1400
    %v1587 = vpop.f32.mrf.mxu0
    %v1588 = vadd.f32 %v1541, %v1587
    %1589 = vmatmul.f32.gmra.mxu0 %v1403
    %v1590 = vpop.f32.mrf.mxu0
    %v1591 = vadd.f32 %v1544, %v1590
    %1592 = vmatmul.f32.gmra.mxu0 %v1406
    %v1593 = vpop.f32.mrf.mxu0
    %v1594 = vadd.f32 %v1547, %v1593
    %1595 = vmatmul.f32.gmra.mxu0 %v1409
    %v1596 = vpop.f32.mrf.mxu0
    %v1597 = vadd.f32 %v1550, %v1596
    %1598 = vmatmul.f32.gmra.mxu0 %v1412
    %v1599 = vpop.f32.mrf.mxu0
    %v1600 = vadd.f32 %v1553, %v1599
    %1601 = vmatmul.f32.gmra.mxu0 %v1415
    %v1602 = vpop.f32.mrf.mxu0
    %v1603 = vadd.f32 %v1556, %v1602
    %1604 = vmatmul.f32.gmra.mxu0 %v1418
    %v1605 = vpop.f32.mrf.mxu0
    %v1606 = vadd.f32 %v1559, %v1605
    %1607 = vmatmul.f32.gmra.mxu0 %v1421
    %v1608 = vpop.f32.mrf.mxu0
    %v1609 = vadd.f32 %v1562, %v1608
    %1610 = vmatmul.f32.gmra.mxu0 %v1424
    %v1611 = vpop.f32.mrf.mxu0
    %v1612 = vadd.f32 %v1565, %v1611
    %1613 = vmatmul.f32.gmra.mxu0 %v1427
    %v1614 = vpop.f32.mrf.mxu0
    %v1615 = vadd.f32 %v1568, %v1614
    %1616 = vdwg.mxu0
    %v1617 = vadd.f32 %v828, %v1588
    %v1618 = vadd.f32 %v829, %v1591
    %v1619 = vadd.f32 %v830, %v1594
    %v1620 = vadd.f32 %v831, %v1597
    %v1621 = vadd.f32 %v832, %v1600
    %v1622 = vadd.f32 %v833, %v1603
    %v1623 = vadd.f32 %v834, %v1606
    %v1624 = vadd.f32 %v835, %v1609
    %v1625 = vadd.f32 %v836, %v1612
    %v1626 = vadd.f32 %v837, %v1615
    %v1627 = vmax.f32 %v1617, 0.0
    %v1628 = vmax.f32 %v1618, 0.0
    %v1629 = vmax.f32 %v1619, 0.0
    %v1630 = vmax.f32 %v1620, 0.0
    %v1631 = vmax.f32 %v1621, 0.0
    %v1632 = vmax.f32 %v1622, 0.0
    %v1633 = vmax.f32 %v1623, 0.0
    %v1634 = vmax.f32 %v1624, 0.0
    %v1635 = vmax.f32 %v1625, 0.0
    %v1636 = vmax.f32 %v1626, 0.0
    %v1637 = vmul.f32 %v1627, %v1627
    %v1638 = vmul.f32 %v1628, %v1628
    %v1639 = vmul.f32 %v1629, %v1629
    %v1640 = vmul.f32 %v1630, %v1630
    %v1641 = vmul.f32 %v1631, %v1631
    %v1642 = vmul.f32 %v1632, %v1632
    %v1643 = vmul.f32 %v1633, %v1633
    %v1644 = vmul.f32 %v1634, %v1634
    %v1645 = vmul.f32 %v1635, %v1635
    %v1646 = vmul.f32 %v1636, %v1636
    %1647 = vadd.xlane.f32.xlu0 %v1627
    %v1648 = vpop.xlane.xlu0 %1647
    %1649 = vadd.xlane.f32.xlu0 %v1628
    %v1650 = vpop.xlane.xlu0 %1649
    %1651 = vadd.xlane.f32.xlu0 %v1629
    %v1652 = vpop.xlane.xlu0 %1651
    %1653 = vadd.xlane.f32.xlu0 %v1630
    %v1654 = vpop.xlane.xlu0 %1653
    %1655 = vadd.xlane.f32.xlu0 %v1631
    %v1656 = vpop.xlane.xlu0 %1655
    %1657 = vadd.xlane.f32.xlu0 %v1632
    %v1658 = vpop.xlane.xlu0 %1657
    %1659 = vadd.xlane.f32.xlu0 %v1633
    %v1660 = vpop.xlane.xlu0 %1659
    %1661 = vadd.xlane.f32.xlu0 %v1634
    %v1662 = vpop.xlane.xlu0 %1661
    %1663 = vadd.xlane.f32.xlu0 %v1635
    %v1664 = vpop.xlane.xlu0 %1663
    %1665 = vadd.xlane.f32.xlu0 %v1636
    %v1666 = vpop.xlane.xlu0 %1665
    %1667 = vadd.xlane.f32.xlu0 %v1637
    %v1668 = vpop.xlane.xlu0 %1667
    %1669 = vadd.xlane.f32.xlu0 %v1638
    %v1670 = vpop.xlane.xlu0 %1669
    %1671 = vadd.xlane.f32.xlu0 %v1639
    %v1672 = vpop.xlane.xlu0 %1671
    %1673 = vadd.xlane.f32.xlu0 %v1640
    %v1674 = vpop.xlane.xlu0 %1673
    %1675 = vadd.xlane.f32.xlu0 %v1641
    %v1676 = vpop.xlane.xlu0 %1675
    %1677 = vadd.xlane.f32.xlu0 %v1642
    %v1678 = vpop.xlane.xlu0 %1677
    %1679 = vadd.xlane.f32.xlu0 %v1643
    %v1680 = vpop.xlane.xlu0 %1679
    %1681 = vadd.xlane.f32.xlu0 %v1644
    %v1682 = vpop.xlane.xlu0 %1681
    %1683 = vadd.xlane.f32.xlu0 %v1645
    %v1684 = vpop.xlane.xlu0 %1683
    %1685 = vadd.xlane.f32.xlu0 %v1646
    %v1686 = vpop.xlane.xlu0 %1685
    %v1687 = vmul.f32 %v1648, 0.0125
    %v1688 = vmul.f32 %v1650, 0.0125
    %v1689 = vmul.f32 %v1652, 0.0125
    %v1690 = vmul.f32 %v1654, 0.0125
    %v1691 = vmul.f32 %v1656, 0.0125
    %v1692 = vmul.f32 %v1658, 0.0125
    %v1693 = vmul.f32 %v1660, 0.0125
    %v1694 = vmul.f32 %v1662, 0.0125
    %v1695 = vmul.f32 %v1664, 0.0125
    %v1696 = vmul.f32 %v1666, 0.0125
    %v1697 = vmul.f32 %v1668, 0.0125
    %v1698 = vmul.f32 %v1670, 0.0125
    %v1699 = vmul.f32 %v1672, 0.0125
    %v1700 = vmul.f32 %v1674, 0.0125
    %v1701 = vmul.f32 %v1676, 0.0125
    %v1702 = vmul.f32 %v1678, 0.0125
    %v1703 = vmul.f32 %v1680, 0.0125
    %v1704 = vmul.f32 %v1682, 0.0125
    %v1705 = vmul.f32 %v1684, 0.0125
    %v1706 = vmul.f32 %v1686, 0.0125
    %v1707 = vmul.f32 %v1687, %v1687
    %v1708 = vmul.f32 %v1688, %v1688
    %v1709 = vmul.f32 %v1689, %v1689
    %v1710 = vmul.f32 %v1690, %v1690
    %v1711 = vmul.f32 %v1691, %v1691
    %v1712 = vmul.f32 %v1692, %v1692
    %v1713 = vmul.f32 %v1693, %v1693
    %v1714 = vmul.f32 %v1694, %v1694
    %v1715 = vmul.f32 %v1695, %v1695
    %v1716 = vmul.f32 %v1696, %v1696
    %v1717 = vsub.f32 %v1697, %v1707
    %v1718 = vsub.f32 %v1698, %v1708
    %v1719 = vsub.f32 %v1699, %v1709
    %v1720 = vsub.f32 %v1700, %v1710
    %v1721 = vsub.f32 %v1701, %v1711
    %v1722 = vsub.f32 %v1702, %v1712
    %v1723 = vsub.f32 %v1703, %v1713
    %v1724 = vsub.f32 %v1704, %v1714
    %v1725 = vsub.f32 %v1705, %v1715
    %v1726 = vsub.f32 %v1706, %v1716
    %v1727 = vmax.f32 %v1717, 0.0
    %v1728 = vmax.f32 %v1718, 0.0
    %v1729 = vmax.f32 %v1719, 0.0
    %v1730 = vmax.f32 %v1720, 0.0
    %v1731 = vmax.f32 %v1721, 0.0
    %v1732 = vmax.f32 %v1722, 0.0
    %v1733 = vmax.f32 %v1723, 0.0
    %v1734 = vmax.f32 %v1724, 0.0
    %v1735 = vmax.f32 %v1725, 0.0
    %v1736 = vmax.f32 %v1726, 0.0
    %v1737 = vsub.f32 %v1627, %v1687
    %v1738 = vsub.f32 %v1628, %v1688
    %v1739 = vsub.f32 %v1629, %v1689
    %v1740 = vsub.f32 %v1630, %v1690
    %v1741 = vsub.f32 %v1631, %v1691
    %v1742 = vsub.f32 %v1632, %v1692
    %v1743 = vsub.f32 %v1633, %v1693
    %v1744 = vsub.f32 %v1634, %v1694
    %v1745 = vsub.f32 %v1635, %v1695
    %v1746 = vsub.f32 %v1636, %v1696
    %v1747 = vadd.f32 %v1727, 1e-05
    %v1748 = vadd.f32 %v1728, 1e-05
    %v1749 = vadd.f32 %v1729, 1e-05
    %v1750 = vadd.f32 %v1730, 1e-05
    %v1751 = vadd.f32 %v1731, 1e-05
    %v1752 = vadd.f32 %v1732, 1e-05
    %v1753 = vadd.f32 %v1733, 1e-05
    %v1754 = vadd.f32 %v1734, 1e-05
    %v1755 = vadd.f32 %v1735, 1e-05
    %v1756 = vadd.f32 %v1736, 1e-05
    %v1757 = vrsqrt.pop %v1747
    %v1758 = vmul.f32 %v1757, %v1747
    %v1759 = vmul.f32 %v1758, %v1757
    %v1760 = vmul.f32 0.5, %v1759
    %v1761 = vsub.f32 1.5, %v1760
    %v1762 = vmul.f32 %v1757, %v1761
    %vm1763 = vweird.f32 %v1747
    %vm1764 = vweird.f32 %v1757
    %vm1765 = vmor %vm1763, %vm1764
    %v1766 = vsel %vm1765, %v1757, %v1762
    %v1767 = vrsqrt.pop %v1748
    %v1768 = vmul.f32 %v1767, %v1748
    %v1769 = vmul.f32 %v1768, %v1767
    %v1770 = vmul.f32 0.5, %v1769
    %v1771 = vsub.f32 1.5, %v1770
    %v1772 = vmul.f32 %v1767, %v1771
    %vm1773 = vweird.f32 %v1748
    %vm1774 = vweird.f32 %v1767
    %vm1775 = vmor %vm1773, %vm1774
    %v1776 = vsel %vm1775, %v1767, %v1772
    %v1777 = vrsqrt.pop %v1749
    %v1778 = vmul.f32 %v1777, %v1749
    %v1779 = vmul.f32 %v1778, %v1777
    %v1780 = vmul.f32 0.5, %v1779
    %v1781 = vsub.f32 1.5, %v1780
    %v1782 = vmul.f32 %v1777, %v1781
    %vm1783 = vweird.f32 %v1749
    %vm1784 = vweird.f32 %v1777
    %vm1785 = vmor %vm1783, %vm1784
    %v1786 = vsel %vm1785, %v1777, %v1782
    %v1787 = vrsqrt.pop %v1750
    %v1788 = vmul.f32 %v1787, %v1750
    %v1789 = vmul.f32 %v1788, %v1787
    %v1790 = vmul.f32 0.5, %v1789
    %v1791 = vsub.f32 1.5, %v1790
    %v1792 = vmul.f32 %v1787, %v1791
    %vm1793 = vweird.f32 %v1750
    %vm1794 = vweird.f32 %v1787
    %vm1795 = vmor %vm1793, %vm1794
    %v1796 = vsel %vm1795, %v1787, %v1792
    %v1797 = vrsqrt.pop %v1751
    %v1798 = vmul.f32 %v1797, %v1751
    %v1799 = vmul.f32 %v1798, %v1797
    %v1800 = vmul.f32 0.5, %v1799
    %v1801 = vsub.f32 1.5, %v1800
    %v1802 = vmul.f32 %v1797, %v1801
    %vm1803 = vweird.f32 %v1751
    %vm1804 = vweird.f32 %v1797
    %vm1805 = vmor %vm1803, %vm1804
    %v1806 = vsel %vm1805, %v1797, %v1802
    %v1807 = vrsqrt.pop %v1752
    %v1808 = vmul.f32 %v1807, %v1752
    %v1809 = vmul.f32 %v1808, %v1807
    %v1810 = vmul.f32 0.5, %v1809
    %v1811 = vsub.f32 1.5, %v1810
    %v1812 = vmul.f32 %v1807, %v1811
    %vm1813 = vweird.f32 %v1752
    %vm1814 = vweird.f32 %v1807
    %vm1815 = vmor %vm1813, %vm1814
    %v1816 = vsel %vm1815, %v1807, %v1812
    %v1817 = vrsqrt.pop %v1753
    %v1818 = vmul.f32 %v1817, %v1753
    %v1819 = vmul.f32 %v1818, %v1817
    %v1820 = vmul.f32 0.5, %v1819
    %v1821 = vsub.f32 1.5, %v1820
    %v1822 = vmul.f32 %v1817, %v1821
    %vm1823 = vweird.f32 %v1753
    %vm1824 = vweird.f32 %v1817
    %vm1825 = vmor %vm1823, %vm1824
    %v1826 = vsel %vm1825, %v1817, %v1822
    %v1827 = vrsqrt.pop %v1754
    %v1828 = vmul.f32 %v1827, %v1754
    %v1829 = vmul.f32 %v1828, %v1827
    %v1830 = vmul.f32 0.5, %v1829
    %v1831 = vsub.f32 1.5, %v1830
    %v1832 = vmul.f32 %v1827, %v1831
    %vm1833 = vweird.f32 %v1754
    %vm1834 = vweird.f32 %v1827
    %vm1835 = vmor %vm1833, %vm1834
    %v1836 = vsel %vm1835, %v1827, %v1832
    %v1837 = vrsqrt.pop %v1755
    %v1838 = vmul.f32 %v1837, %v1755
    %v1839 = vmul.f32 %v1838, %v1837
    %v1840 = vmul.f32 0.5, %v1839
    %v1841 = vsub.f32 1.5, %v1840
    %v1842 = vmul.f32 %v1837, %v1841
    %vm1843 = vweird.f32 %v1755
    %vm1844 = vweird.f32 %v1837
    %vm1845 = vmor %vm1843, %vm1844
    %v1846 = vsel %vm1845, %v1837, %v1842
    %v1847 = vrsqrt.pop %v1756
    %v1848 = vmul.f32 %v1847, %v1756
    %v1849 = vmul.f32 %v1848, %v1847
    %v1850 = vmul.f32 0.5, %v1849
    %v1851 = vsub.f32 1.5, %v1850
    %v1852 = vmul.f32 %v1847, %v1851
    %vm1853 = vweird.f32 %v1756
    %vm1854 = vweird.f32 %v1847
    %vm1855 = vmor %vm1853, %vm1854
    %v1856 = vsel %vm1855, %v1847, %v1852
    %v1857 = vmul.f32 %v1737, %v1766
    %v1858 = vmul.f32 %v1738, %v1776
    %v1859 = vmul.f32 %v1739, %v1786
    %v1860 = vmul.f32 %v1740, %v1796
    %v1861 = vmul.f32 %v1741, %v1806
    %v1862 = vmul.f32 %v1742, %v1816
    %v1863 = vmul.f32 %v1743, %v1826
    %v1864 = vmul.f32 %v1744, %v1836
    %v1865 = vmul.f32 %v1745, %v1846
    %v1866 = vmul.f32 %v1746, %v1856
    %1867 = vrot.lane.b32.xlu0 %v1857, 2
    %v1868 = vpop.permute.xlu0 %1867
    %1869 = vrot.lane.b32.xlu0 %v1858, 2
    %v1870 = vpop.permute.xlu0 %1869
    %1871 = vrot.lane.b32.xlu0 %v1859, 2
    %v1872 = vpop.permute.xlu0 %1871
    %1873 = vrot.lane.b32.xlu0 %v1860, 2
    %v1874 = vpop.permute.xlu0 %1873
    %1875 = vrot.lane.b32.xlu0 %v1861, 2
    %v1876 = vpop.permute.xlu0 %1875
    %1877 = vrot.lane.b32.xlu0 %v1862, 2
    %v1878 = vpop.permute.xlu0 %1877
    %1879 = vrot.lane.b32.xlu0 %v1863, 2
    %v1880 = vpop.permute.xlu0 %1879
    %1881 = vrot.lane.b32.xlu0 %v1864, 2
    %v1882 = vpop.permute.xlu0 %1881
    %1883 = vrot.lane.b32.xlu0 %v1865, 2
    %v1884 = vpop.permute.xlu0 %1883
    %1885 = vrot.lane.b32.xlu0 %v1866, 2
    %v1886 = vpop.permute.xlu0 %1885
    %v1887 = vld [vmem:[%s5] sm:$0xff]
    %v1888 = vld [vmem:[%s5 + $0x8] sm:$0xff]
    %v1889 = vld [vmem:[%s5 + $0x10] sm:$0xff]
    %v1890 = vld [vmem:[%s5 + $0x18] sm:$0xff]
    %v1891 = vld [vmem:[%s5 + $0x20] sm:$0xff]
    %v1892 = vld [vmem:[%s5 + $0x28] sm:$0xff]
    %v1893 = vld [vmem:[%s5 + $0x30] sm:$0xff]
    %v1894 = vld [vmem:[%s5 + $0x38] sm:$0xff]
    %v1895 = vld [vmem:[%s5 + $0x40] sm:$0xff]
    %v1896 = vld [vmem:[%s5 + $0x48] sm:$0xff]
    %v1897 = vmul.f32 %v1868, %v1887
    %v1898 = vmul.f32 %v1870, %v1888
    %v1899 = vmul.f32 %v1872, %v1889
    %v1900 = vmul.f32 %v1874, %v1890
    %v1901 = vmul.f32 %v1876, %v1891
    %v1902 = vmul.f32 %v1878, %v1892
    %v1903 = vmul.f32 %v1880, %v1893
    %v1904 = vmul.f32 %v1882, %v1894
    %v1905 = vmul.f32 %v1884, %v1895
    %v1906 = vmul.f32 %v1886, %v1896
    %1907 = vst [vmem:[#allocation2] sm:$0xff] %v1897
    %1908 = vst [vmem:[#allocation2 + $0x8] sm:$0xff] %v1898
    %1909 = vst [vmem:[#allocation2 + $0x10] sm:$0xff] %v1899
    %1910 = vst [vmem:[#allocation2 + $0x18] sm:$0xff] %v1900
    %1911 = vst [vmem:[#allocation2 + $0x20] sm:$0xff] %v1901
    %1912 = vst [vmem:[#allocation2 + $0x28] sm:$0xff] %v1902
    %1913 = vst [vmem:[#allocation2 + $0x30] sm:$0xff] %v1903
    %1914 = vst [vmem:[#allocation2 + $0x38] sm:$0xff] %v1904
    %1915 = vst [vmem:[#allocation2 + $0x40] sm:$0xff] %v1905
    %1916 = vst [vmem:[#allocation2 + $0x48] sm:$0xff] %v1906
    %1917 = vrot.lane.b32.xlu0 %v1857, 1
    %v1918 = vpop.permute.xlu0 %1917
    %1919 = vrot.lane.b32.xlu0 %v1858, 1
    %v1920 = vpop.permute.xlu0 %1919
    %1921 = vrot.lane.b32.xlu0 %v1859, 1
    %v1922 = vpop.permute.xlu0 %1921
    %1923 = vrot.lane.b32.xlu0 %v1860, 1
    %v1924 = vpop.permute.xlu0 %1923
    %1925 = vrot.lane.b32.xlu0 %v1861, 1
    %v1926 = vpop.permute.xlu0 %1925
    %1927 = vrot.lane.b32.xlu0 %v1862, 1
    %v1928 = vpop.permute.xlu0 %1927
    %1929 = vrot.lane.b32.xlu0 %v1863, 1
    %v1930 = vpop.permute.xlu0 %1929
    %1931 = vrot.lane.b32.xlu0 %v1864, 1
    %v1932 = vpop.permute.xlu0 %1931
    %1933 = vrot.lane.b32.xlu0 %v1865, 1
    %v1934 = vpop.permute.xlu0 %1933
    %1935 = vrot.lane.b32.xlu0 %v1866, 1
    %v1936 = vpop.permute.xlu0 %1935
    %v1937 = vld [vmem:[%s5 + $0x50] sm:$0xff]
    %v1938 = vld [vmem:[%s5 + $0x58] sm:$0xff]
    %v1939 = vld [vmem:[%s5 + $0x60] sm:$0xff]
    %v1940 = vld [vmem:[%s5 + $0x68] sm:$0xff]
    %v1941 = vld [vmem:[%s5 + $0x70] sm:$0xff]
    %v1942 = vld [vmem:[%s5 + $0x78] sm:$0xff]
    %v1943 = vld [vmem:[%s5 + $0x80] sm:$0xff]
    %v1944 = vld [vmem:[%s5 + $0x88] sm:$0xff]
    %v1945 = vld [vmem:[%s5 + $0x90] sm:$0xff]
    %v1946 = vld [vmem:[%s5 + $0x98] sm:$0xff]
    %v1947 = vmul.f32 %v1918, %v1937
    %v1948 = vmul.f32 %v1920, %v1938
    %v1949 = vmul.f32 %v1922, %v1939
    %v1950 = vmul.f32 %v1924, %v1940
    %v1951 = vmul.f32 %v1926, %v1941
    %v1952 = vmul.f32 %v1928, %v1942
    %v1953 = vmul.f32 %v1930, %v1943
    %v1954 = vmul.f32 %v1932, %v1944
    %v1955 = vmul.f32 %v1934, %v1945
    %v1956 = vmul.f32 %v1936, %v1946
    %1957 = vst [vmem:[#allocation2 + $0x50] sm:$0xff] %v1947
    %1958 = vst [vmem:[#allocation2 + $0x58] sm:$0xff] %v1948
    %1959 = vst [vmem:[#allocation2 + $0x60] sm:$0xff] %v1949
    %1960 = vst [vmem:[#allocation2 + $0x68] sm:$0xff] %v1950
    %1961 = vst [vmem:[#allocation2 + $0x70] sm:$0xff] %v1951
    %1962 = vst [vmem:[#allocation2 + $0x78] sm:$0xff] %v1952
    %1963 = vst [vmem:[#allocation2 + $0x80] sm:$0xff] %v1953
    %1964 = vst [vmem:[#allocation2 + $0x88] sm:$0xff] %v1954
    %1965 = vst [vmem:[#allocation2 + $0x90] sm:$0xff] %v1955
    %1966 = vst [vmem:[#allocation2 + $0x98] sm:$0xff] %v1956
    %v1967 = vld [vmem:[%s5 + $0xa0] sm:$0xff]
    %v1968 = vld [vmem:[%s5 + $0xa8] sm:$0xff]
    %v1969 = vld [vmem:[%s5 + $0xb0] sm:$0xff]
    %v1970 = vld [vmem:[%s5 + $0xb8] sm:$0xff]
    %v1971 = vld [vmem:[%s5 + $0xc0] sm:$0xff]
    %v1972 = vld [vmem:[%s5 + $0xc8] sm:$0xff]
    %v1973 = vld [vmem:[%s5 + $0xd0] sm:$0xff]
    %v1974 = vld [vmem:[%s5 + $0xd8] sm:$0xff]
    %v1975 = vld [vmem:[%s5 + $0xe0] sm:$0xff]
    %v1976 = vld [vmem:[%s5 + $0xe8] sm:$0xff]
    %v1977 = vmul.f32 %v1857, %v1967
    %v1978 = vmul.f32 %v1858, %v1968
    %v1979 = vmul.f32 %v1859, %v1969
    %v1980 = vmul.f32 %v1860, %v1970
    %v1981 = vmul.f32 %v1861, %v1971
    %v1982 = vmul.f32 %v1862, %v1972
    %v1983 = vmul.f32 %v1863, %v1973
    %v1984 = vmul.f32 %v1864, %v1974
    %v1985 = vmul.f32 %v1865, %v1975
    %v1986 = vmul.f32 %v1866, %v1976
    %1987 = vst [vmem:[#allocation2 + $0xa0] sm:$0xff] %v1977
    %1988 = vst [vmem:[#allocation2 + $0xa8] sm:$0xff] %v1978
    %1989 = vst [vmem:[#allocation2 + $0xb0] sm:$0xff] %v1979
    %1990 = vst [vmem:[#allocation2 + $0xb8] sm:$0xff] %v1980
    %1991 = vst [vmem:[#allocation2 + $0xc0] sm:$0xff] %v1981
    %1992 = vst [vmem:[#allocation2 + $0xc8] sm:$0xff] %v1982
    %1993 = vst [vmem:[#allocation2 + $0xd0] sm:$0xff] %v1983
    %1994 = vst [vmem:[#allocation2 + $0xd8] sm:$0xff] %v1984
    %1995 = vst [vmem:[#allocation2 + $0xe0] sm:$0xff] %v1985
    %1996 = vst [vmem:[#allocation2 + $0xe8] sm:$0xff] %v1986
    %1997 = vrot.lane.b32.xlu0 %v1857, 127
    %v1998 = vpop.permute.xlu0 %1997
    %1999 = vrot.lane.b32.xlu0 %v1858, 127
    %v2000 = vpop.permute.xlu0 %1999
    %2001 = vrot.lane.b32.xlu0 %v1859, 127
    %v2002 = vpop.permute.xlu0 %2001
    %2003 = vrot.lane.b32.xlu0 %v1860, 127
    %v2004 = vpop.permute.xlu0 %2003
    %2005 = vrot.lane.b32.xlu0 %v1861, 127
    %v2006 = vpop.permute.xlu0 %2005
    %2007 = vrot.lane.b32.xlu0 %v1862, 127
    %v2008 = vpop.permute.xlu0 %2007
    %2009 = vrot.lane.b32.xlu0 %v1863, 127
    %v2010 = vpop.permute.xlu0 %2009
    %2011 = vrot.lane.b32.xlu0 %v1864, 127
    %v2012 = vpop.permute.xlu0 %2011
    %2013 = vrot.lane.b32.xlu0 %v1865, 127
    %v2014 = vpop.permute.xlu0 %2013
    %2015 = vrot.lane.b32.xlu0 %v1866, 127
    %v2016 = vpop.permute.xlu0 %2015
    %v2017 = vld [vmem:[%s5 + $0xf0] sm:$0xff]
    %v2018 = vld [vmem:[%s5 + $0xf8] sm:$0xff]
    %v2019 = vld [vmem:[%s5 + $0x100] sm:$0xff]
    %v2020 = vld [vmem:[%s5 + $0x108] sm:$0xff]
    %v2021 = vld [vmem:[%s5 + $0x110] sm:$0xff]
    %v2022 = vld [vmem:[%s5 + $0x118] sm:$0xff]
    %v2023 = vld [vmem:[%s5 + $0x120] sm:$0xff]
    %v2024 = vld [vmem:[%s5 + $0x128] sm:$0xff]
    %v2025 = vld [vmem:[%s5 + $0x130] sm:$0xff]
    %v2026 = vld [vmem:[%s5 + $0x138] sm:$0xff]
    %v2027 = vmul.f32 %v1998, %v2017
    %v2028 = vmul.f32 %v2000, %v2018
    %v2029 = vmul.f32 %v2002, %v2019
    %v2030 = vmul.f32 %v2004, %v2020
    %v2031 = vmul.f32 %v2006, %v2021
    %v2032 = vmul.f32 %v2008, %v2022
    %v2033 = vmul.f32 %v2010, %v2023
    %v2034 = vmul.f32 %v2012, %v2024
    %v2035 = vmul.f32 %v2014, %v2025
    %v2036 = vmul.f32 %v2016, %v2026
    %2037 = vst [vmem:[#allocation2 + $0xf0] sm:$0xff] %v2027
    %2038 = vst [vmem:[#allocation2 + $0xf8] sm:$0xff] %v2028
    %2039 = vst [vmem:[#allocation2 + $0x100] sm:$0xff] %v2029
    %2040 = vst [vmem:[#allocation2 + $0x108] sm:$0xff] %v2030
    %2041 = vst [vmem:[#allocation2 + $0x110] sm:$0xff] %v2031
    %2042 = vst [vmem:[#allocation2 + $0x118] sm:$0xff] %v2032
    %2043 = vst [vmem:[#allocation2 + $0x120] sm:$0xff] %v2033
    %2044 = vst [vmem:[#allocation2 + $0x128] sm:$0xff] %v2034
    %2045 = vst [vmem:[#allocation2 + $0x130] sm:$0xff] %v2035
    %2046 = vst [vmem:[#allocation2 + $0x138] sm:$0xff] %v2036
    %2047 = vrot.lane.b32.xlu0 %v1857, 126
    %v2048 = vpop.permute.xlu0 %2047
    %2049 = vrot.lane.b32.xlu0 %v1858, 126
    %v2050 = vpop.permute.xlu0 %2049
    %2051 = vrot.lane.b32.xlu0 %v1859, 126
    %v2052 = vpop.permute.xlu0 %2051
    %2053 = vrot.lane.b32.xlu0 %v1860, 126
    %v2054 = vpop.permute.xlu0 %2053
    %2055 = vrot.lane.b32.xlu0 %v1861, 126
    %v2056 = vpop.permute.xlu0 %2055
    %2057 = vrot.lane.b32.xlu0 %v1862, 126
    %v2058 = vpop.permute.xlu0 %2057
    %2059 = vrot.lane.b32.xlu0 %v1863, 126
    %v2060 = vpop.permute.xlu0 %2059
    %2061 = vrot.lane.b32.xlu0 %v1864, 126
    %v2062 = vpop.permute.xlu0 %2061
    %2063 = vrot.lane.b32.xlu0 %v1865, 126
    %v2064 = vpop.permute.xlu0 %2063
    %2065 = vrot.lane.b32.xlu0 %v1866, 126
    %v2066 = vpop.permute.xlu0 %2065
    %v2067 = vld [vmem:[%s5 + $0x140] sm:$0xff]
    %v2068 = vld [vmem:[%s5 + $0x148] sm:$0xff]
    %v2069 = vld [vmem:[%s5 + $0x150] sm:$0xff]
    %v2070 = vld [vmem:[%s5 + $0x158] sm:$0xff]
    %v2071 = vld [vmem:[%s5 + $0x160] sm:$0xff]
    %v2072 = vld [vmem:[%s5 + $0x168] sm:$0xff]
    %v2073 = vld [vmem:[%s5 + $0x170] sm:$0xff]
    %v2074 = vld [vmem:[%s5 + $0x178] sm:$0xff]
    %v2075 = vld [vmem:[%s5 + $0x180] sm:$0xff]
    %v2076 = vld [vmem:[%s5 + $0x188] sm:$0xff]
    %v2077 = vmul.f32 %v2048, %v2067
    %v2078 = vmul.f32 %v2050, %v2068
    %v2079 = vmul.f32 %v2052, %v2069
    %v2080 = vmul.f32 %v2054, %v2070
    %v2081 = vmul.f32 %v2056, %v2071
    %v2082 = vmul.f32 %v2058, %v2072
    %v2083 = vmul.f32 %v2060, %v2073
    %v2084 = vmul.f32 %v2062, %v2074
    %v2085 = vmul.f32 %v2064, %v2075
    %v2086 = vmul.f32 %v2066, %v2076
    %2087 = vst [vmem:[#allocation2 + $0x140] sm:$0xff] %v2077
    %2088 = vst [vmem:[#allocation2 + $0x148] sm:$0xff] %v2078
    %2089 = vst [vmem:[#allocation2 + $0x150] sm:$0xff] %v2079
    %2090 = vst [vmem:[#allocation2 + $0x158] sm:$0xff] %v2080
    %2091 = vst [vmem:[#allocation2 + $0x160] sm:$0xff] %v2081
    %2092 = vst [vmem:[#allocation2 + $0x168] sm:$0xff] %v2082
    %2093 = vst [vmem:[#allocation2 + $0x170] sm:$0xff] %v2083
    %2094 = vst [vmem:[#allocation2 + $0x178] sm:$0xff] %v2084
    %2095 = vst [vmem:[#allocation2 + $0x180] sm:$0xff] %v2085
    %2096 = vst [vmem:[#allocation2 + $0x188] sm:$0xff] %v2086
    %s2097 = scalar_lea.vmem [#allocation3], 640
    %v2098 = vld [vmem:[%s2097] sm:$0xff]
    %v2099 = vld [vmem:[%s2097 + $0x8] sm:$0xff]
    %v2100 = vld [vmem:[%s2097 + $0x10] sm:$0xff]
    %v2101 = vld [vmem:[%s2097 + $0x18] sm:$0xff]
    %v2102 = vld [vmem:[%s2097 + $0x20] sm:$0xff]
    %v2103 = vld [vmem:[%s2097 + $0x28] sm:$0xff]
    %v2104 = vld [vmem:[%s2097 + $0x30] sm:$0xff]
    %v2105 = vld [vmem:[%s2097 + $0x38] sm:$0xff]
    %v2106 = vld [vmem:[%s2097 + $0x40] sm:$0xff]
    %v2107 = vld [vmem:[%s2097 + $0x48] sm:$0xff]
    %v2108 = vld [vmem:[%s2097 + $0x50] sm:$0xff]
    %v2109 = vld [vmem:[%s2097 + $0x58] sm:$0xff]
    %v2110 = vld [vmem:[%s2097 + $0x60] sm:$0xff]
    %v2111 = vld [vmem:[%s2097 + $0x68] sm:$0xff]
    %v2112 = vld [vmem:[%s2097 + $0x70] sm:$0xff]
    %v2113 = vld [vmem:[%s2097 + $0x78] sm:$0xff]
    %v2114 = vld [vmem:[%s2097 + $0x80] sm:$0xff]
    %v2115 = vld [vmem:[%s2097 + $0x88] sm:$0xff]
    %v2116 = vld [vmem:[%s2097 + $0x90] sm:$0xff]
    %v2117 = vld [vmem:[%s2097 + $0x98] sm:$0xff]
    %v2118 = vld [vmem:[%s2097 + $0xa0] sm:$0xff]
    %v2119 = vld [vmem:[%s2097 + $0xa8] sm:$0xff]
    %v2120 = vld [vmem:[%s2097 + $0xb0] sm:$0xff]
    %v2121 = vld [vmem:[%s2097 + $0xb8] sm:$0xff]
    %v2122 = vld [vmem:[%s2097 + $0xc0] sm:$0xff]
    %v2123 = vld [vmem:[%s2097 + $0xc8] sm:$0xff]
    %v2124 = vld [vmem:[%s2097 + $0xd0] sm:$0xff]
    %v2125 = vld [vmem:[%s2097 + $0xd8] sm:$0xff]
    %v2126 = vld [vmem:[%s2097 + $0xe0] sm:$0xff]
    %v2127 = vld [vmem:[%s2097 + $0xe8] sm:$0xff]
    %v2128 = vld [vmem:[%s2097 + $0xf0] sm:$0xff]
    %v2129 = vld [vmem:[%s2097 + $0xf8] sm:$0xff]
    %v2130 = vld [vmem:[%s2097 + $0x100] sm:$0xff]
    %v2131 = vld [vmem:[%s2097 + $0x108] sm:$0xff]
    %v2132 = vld [vmem:[%s2097 + $0x110] sm:$0xff]
    %v2133 = vld [vmem:[%s2097 + $0x118] sm:$0xff]
    %v2134 = vld [vmem:[%s2097 + $0x120] sm:$0xff]
    %v2135 = vld [vmem:[%s2097 + $0x128] sm:$0xff]
    %v2136 = vld [vmem:[%s2097 + $0x130] sm:$0xff]
    %v2137 = vld [vmem:[%s2097 + $0x138] sm:$0xff]
    %v2138 = vld [vmem:[#allocation2] sm:$0xff]
    %v2139 = vld [vmem:[#allocation2 + $0x8] sm:$0xff]
    %v2140 = vld [vmem:[#allocation2 + $0x10] sm:$0xff]
    %v2141 = vld [vmem:[#allocation2 + $0x18] sm:$0xff]
    %v2142 = vld [vmem:[#allocation2 + $0x20] sm:$0xff]
    %v2143 = vld [vmem:[#allocation2 + $0x28] sm:$0xff]
    %v2144 = vld [vmem:[#allocation2 + $0x30] sm:$0xff]
    %v2145 = vld [vmem:[#allocation2 + $0x38] sm:$0xff]
    %v2146 = vld [vmem:[#allocation2 + $0x40] sm:$0xff]
    %v2147 = vld [vmem:[#allocation2 + $0x48] sm:$0xff]
    %v2148 = vld [vmem:[#allocation2 + $0x50] sm:$0xff]
    %v2149 = vld [vmem:[#allocation2 + $0x58] sm:$0xff]
    %v2150 = vld [vmem:[#allocation2 + $0x60] sm:$0xff]
    %v2151 = vld [vmem:[#allocation2 + $0x68] sm:$0xff]
    %v2152 = vld [vmem:[#allocation2 + $0x70] sm:$0xff]
    %v2153 = vld [vmem:[#allocation2 + $0x78] sm:$0xff]
    %v2154 = vld [vmem:[#allocation2 + $0x80] sm:$0xff]
    %v2155 = vld [vmem:[#allocation2 + $0x88] sm:$0xff]
    %v2156 = vld [vmem:[#allocation2 + $0x90] sm:$0xff]
    %v2157 = vld [vmem:[#allocation2 + $0x98] sm:$0xff]
    %v2158 = vld [vmem:[#allocation2 + $0xa0] sm:$0xff]
    %v2159 = vld [vmem:[#allocation2 + $0xa8] sm:$0xff]
    %v2160 = vld [vmem:[#allocation2 + $0xb0] sm:$0xff]
    %v2161 = vld [vmem:[#allocation2 + $0xb8] sm:$0xff]
    %v2162 = vld [vmem:[#allocation2 + $0xc0] sm:$0xff]
    %v2163 = vld [vmem:[#allocation2 + $0xc8] sm:$0xff]
    %v2164 = vld [vmem:[#allocation2 + $0xd0] sm:$0xff]
    %v2165 = vld [vmem:[#allocation2 + $0xd8] sm:$0xff]
    %v2166 = vld [vmem:[#allocation2 + $0xe0] sm:$0xff]
    %v2167 = vld [vmem:[#allocation2 + $0xe8] sm:$0xff]
    %v2168 = vld [vmem:[#allocation2 + $0xf0] sm:$0xff]
    %v2169 = vld [vmem:[#allocation2 + $0xf8] sm:$0xff]
    %v2170 = vld [vmem:[#allocation2 + $0x100] sm:$0xff]
    %v2171 = vld [vmem:[#allocation2 + $0x108] sm:$0xff]
    %v2172 = vld [vmem:[#allocation2 + $0x110] sm:$0xff]
    %v2173 = vld [vmem:[#allocation2 + $0x118] sm:$0xff]
    %v2174 = vld [vmem:[#allocation2 + $0x120] sm:$0xff]
    %v2175 = vld [vmem:[#allocation2 + $0x128] sm:$0xff]
    %v2176 = vld [vmem:[#allocation2 + $0x130] sm:$0xff]
    %v2177 = vld [vmem:[#allocation2 + $0x138] sm:$0xff]
    %v2178 = vld [vmem:[#allocation2 + $0x140] sm:$0xff]
    %v2179 = vld [vmem:[#allocation2 + $0x148] sm:$0xff]
    %v2180 = vld [vmem:[#allocation2 + $0x150] sm:$0xff]
    %v2181 = vld [vmem:[#allocation2 + $0x158] sm:$0xff]
    %v2182 = vld [vmem:[#allocation2 + $0x160] sm:$0xff]
    %v2183 = vld [vmem:[#allocation2 + $0x168] sm:$0xff]
    %v2184 = vld [vmem:[#allocation2 + $0x170] sm:$0xff]
    %v2185 = vld [vmem:[#allocation2 + $0x178] sm:$0xff]
    %v2186 = vld [vmem:[#allocation2 + $0x180] sm:$0xff]
    %v2187 = vld [vmem:[#allocation2 + $0x188] sm:$0xff]
    %v2189 = vsel %vm609, %v2101, 0
    %v2192 = vsel %vm609, %v2105, 0
    %v2195 = vsel %vm609, %v2109, 0
    %v2198 = vsel %vm609, %v2113, 0
    %v2201 = vsel %vm609, %v2117, 0
    %v2204 = vsel %vm609, %v2121, 0
    %v2207 = vsel %vm609, %v2125, 0
    %v2210 = vsel %vm609, %v2129, 0
    %v2213 = vsel %vm609, %v2133, 0
    %v2216 = vsel %vm609, %v2137, 0
    %2218 = vmatpush.msra.mxu0 %v2153
    %2219 = vmatpush.msra.mxu0 %v2152
    %2220 = vmatpush.msra.mxu0 %v2151
    %2221 = vmatpush.msra.mxu0 %v2150
    %2222 = vmatpush.msra.mxu0 %v2149
    %2223 = vmatpush.msra.mxu0 %v2148
    %2224 = vmatpush.msra.mxu0 %v2147
    %2225 = vmatpush.msra.mxu0 %v2146
    %2226 = vmatpush.msra.mxu0 %v2145
    %2227 = vmatpush.msra.mxu0 %v2144
    %2228 = vmatpush.msra.mxu0 %v2143
    %2229 = vmatpush.msra.mxu0 %v2142
    %2230 = vmatpush.msra.mxu0 %v2141
    %2231 = vmatpush.msra.mxu0 %v2140
    %2232 = vmatpush.msra.mxu0 %v2139
    %2233 = vmatpush.msra.mxu0 %v2138
    %2234 = vmatmul.f32.gmra.mxu0 %v2098
    %v2235 = vpop.f32.mrf.mxu0
    %v2236 = vadd.f32 0.0, %v2235
    %2237 = vmatmul.f32.gmra.mxu0 %v2102
    %v2238 = vpop.f32.mrf.mxu0
    %v2239 = vadd.f32 0.0, %v2238
    %2240 = vmatmul.f32.gmra.mxu0 %v2106
    %v2241 = vpop.f32.mrf.mxu0
    %v2242 = vadd.f32 0.0, %v2241
    %2243 = vmatmul.f32.gmra.mxu0 %v2110
    %v2244 = vpop.f32.mrf.mxu0
    %v2245 = vadd.f32 0.0, %v2244
    %2246 = vmatmul.f32.gmra.mxu0 %v2114
    %v2247 = vpop.f32.mrf.mxu0
    %v2248 = vadd.f32 0.0, %v2247
    %2249 = vmatmul.f32.gmra.mxu0 %v2118
    %v2250 = vpop.f32.mrf.mxu0
    %v2251 = vadd.f32 0.0, %v2250
    %2252 = vmatmul.f32.gmra.mxu0 %v2122
    %v2253 = vpop.f32.mrf.mxu0
    %v2254 = vadd.f32 0.0, %v2253
    %2255 = vmatmul.f32.gmra.mxu0 %v2126
    %v2256 = vpop.f32.mrf.mxu0
    %v2257 = vadd.f32 0.0, %v2256
    %2258 = vmatmul.f32.gmra.mxu0 %v2130
    %v2259 = vpop.f32.mrf.mxu0
    %v2260 = vadd.f32 0.0, %v2259
    %2261 = vmatmul.f32.gmra.mxu0 %v2134
    %v2262 = vpop.f32.mrf.mxu0
    %v2263 = vadd.f32 0.0, %v2262
    %2264 = vdwg.mxu0
    %2265 = vmatpush.msra.mxu0 %v2169
    %2266 = vmatpush.msra.mxu0 %v2168
    %2267 = vmatpush.msra.mxu0 %v2167
    %2268 = vmatpush.msra.mxu0 %v2166
    %2269 = vmatpush.msra.mxu0 %v2165
    %2270 = vmatpush.msra.mxu0 %v2164
    %2271 = vmatpush.msra.mxu0 %v2163
    %2272 = vmatpush.msra.mxu0 %v2162
    %2273 = vmatpush.msra.mxu0 %v2161
    %2274 = vmatpush.msra.mxu0 %v2160
    %2275 = vmatpush.msra.mxu0 %v2159
    %2276 = vmatpush.msra.mxu0 %v2158
    %2277 = vmatpush.msra.mxu0 %v2157
    %2278 = vmatpush.msra.mxu0 %v2156
    %2279 = vmatpush.msra.mxu0 %v2155
    %2280 = vmatpush.msra.mxu0 %v2154
    %2281 = vmatmul.f32.gmra.mxu0 %v2099
    %v2282 = vpop.f32.mrf.mxu0
    %v2283 = vadd.f32 %v2236, %v2282
    %2284 = vmatmul.f32.gmra.mxu0 %v2103
    %v2285 = vpop.f32.mrf.mxu0
    %v2286 = vadd.f32 %v2239, %v2285
    %2287 = vmatmul.f32.gmra.mxu0 %v2107
    %v2288 = vpop.f32.mrf.mxu0
    %v2289 = vadd.f32 %v2242, %v2288
    %2290 = vmatmul.f32.gmra.mxu0 %v2111
    %v2291 = vpop.f32.mrf.mxu0
    %v2292 = vadd.f32 %v2245, %v2291
    %2293 = vmatmul.f32.gmra.mxu0 %v2115
    %v2294 = vpop.f32.mrf.mxu0
    %v2295 = vadd.f32 %v2248, %v2294
    %2296 = vmatmul.f32.gmra.mxu0 %v2119
    %v2297 = vpop.f32.mrf.mxu0
    %v2298 = vadd.f32 %v2251, %v2297
    %2299 = vmatmul.f32.gmra.mxu0 %v2123
    %v2300 = vpop.f32.mrf.mxu0
    %v2301 = vadd.f32 %v2254, %v2300
    %2302 = vmatmul.f32.gmra.mxu0 %v2127
    %v2303 = vpop.f32.mrf.mxu0
    %v2304 = vadd.f32 %v2257, %v2303
    %2305 = vmatmul.f32.gmra.mxu0 %v2131
    %v2306 = vpop.f32.mrf.mxu0
    %v2307 = vadd.f32 %v2260, %v2306
    %2308 = vmatmul.f32.gmra.mxu0 %v2135
    %v2309 = vpop.f32.mrf.mxu0
    %v2310 = vadd.f32 %v2263, %v2309
    %2311 = vdwg.mxu0
    %2312 = vmatpush.msra.mxu0 %v2185
    %2313 = vmatpush.msra.mxu0 %v2184
    %2314 = vmatpush.msra.mxu0 %v2183
    %2315 = vmatpush.msra.mxu0 %v2182
    %2316 = vmatpush.msra.mxu0 %v2181
    %2317 = vmatpush.msra.mxu0 %v2180
    %2318 = vmatpush.msra.mxu0 %v2179
    %2319 = vmatpush.msra.mxu0 %v2178
    %2320 = vmatpush.msra.mxu0 %v2177
    %2321 = vmatpush.msra.mxu0 %v2176
    %2322 = vmatpush.msra.mxu0 %v2175
    %2323 = vmatpush.msra.mxu0 %v2174
    %2324 = vmatpush.msra.mxu0 %v2173
    %2325 = vmatpush.msra.mxu0 %v2172
    %2326 = vmatpush.msra.mxu0 %v2171
    %2327 = vmatpush.msra.mxu0 %v2170
    %2328 = vmatmul.f32.gmra.mxu0 %v2100
    %v2329 = vpop.f32.mrf.mxu0
    %v2330 = vadd.f32 %v2283, %v2329
    %2331 = vmatmul.f32.gmra.mxu0 %v2104
    %v2332 = vpop.f32.mrf.mxu0
    %v2333 = vadd.f32 %v2286, %v2332
    %2334 = vmatmul.f32.gmra.mxu0 %v2108
    %v2335 = vpop.f32.mrf.mxu0
    %v2336 = vadd.f32 %v2289, %v2335
    %2337 = vmatmul.f32.gmra.mxu0 %v2112
    %v2338 = vpop.f32.mrf.mxu0
    %v2339 = vadd.f32 %v2292, %v2338
    %2340 = vmatmul.f32.gmra.mxu0 %v2116
    %v2341 = vpop.f32.mrf.mxu0
    %v2342 = vadd.f32 %v2295, %v2341
    %2343 = vmatmul.f32.gmra.mxu0 %v2120
    %v2344 = vpop.f32.mrf.mxu0
    %v2345 = vadd.f32 %v2298, %v2344
    %2346 = vmatmul.f32.gmra.mxu0 %v2124
    %v2347 = vpop.f32.mrf.mxu0
    %v2348 = vadd.f32 %v2301, %v2347
    %2349 = vmatmul.f32.gmra.mxu0 %v2128
    %v2350 = vpop.f32.mrf.mxu0
    %v2351 = vadd.f32 %v2304, %v2350
    %2352 = vmatmul.f32.gmra.mxu0 %v2132
    %v2353 = vpop.f32.mrf.mxu0
    %v2354 = vadd.f32 %v2307, %v2353
    %2355 = vmatmul.f32.gmra.mxu0 %v2136
    %v2356 = vpop.f32.mrf.mxu0
    %v2357 = vadd.f32 %v2310, %v2356
    %2358 = vdwg.mxu0
    %2359 = vmatpush.msra.mxu0 0.0
    %2360 = vmatpush.msra.mxu0 0.0
    %2361 = vmatpush.msra.mxu0 0.0
    %2362 = vmatpush.msra.mxu0 0.0
    %2363 = vmatpush.msra.mxu0 0.0
    %2364 = vmatpush.msra.mxu0 0.0
    %2365 = vmatpush.msra.mxu0 0.0
    %2366 = vmatpush.msra.mxu0 0.0
    %2367 = vmatpush.msra.mxu0 0.0
    %2368 = vmatpush.msra.mxu0 0.0
    %2369 = vmatpush.msra.mxu0 0.0
    %2370 = vmatpush.msra.mxu0 0.0
    %2371 = vmatpush.msra.mxu0 0.0
    %2372 = vmatpush.msra.mxu0 0.0
    %2373 = vmatpush.msra.mxu0 %v2187
    %2374 = vmatpush.msra.mxu0 %v2186
    %2375 = vmatmul.f32.gmra.mxu0 %v2189
    %v2376 = vpop.f32.mrf.mxu0
    %v2377 = vadd.f32 %v2330, %v2376
    %2378 = vmatmul.f32.gmra.mxu0 %v2192
    %v2379 = vpop.f32.mrf.mxu0
    %v2380 = vadd.f32 %v2333, %v2379
    %2381 = vmatmul.f32.gmra.mxu0 %v2195
    %v2382 = vpop.f32.mrf.mxu0
    %v2383 = vadd.f32 %v2336, %v2382
    %2384 = vmatmul.f32.gmra.mxu0 %v2198
    %v2385 = vpop.f32.mrf.mxu0
    %v2386 = vadd.f32 %v2339, %v2385
    %2387 = vmatmul.f32.gmra.mxu0 %v2201
    %v2388 = vpop.f32.mrf.mxu0
    %v2389 = vadd.f32 %v2342, %v2388
    %2390 = vmatmul.f32.gmra.mxu0 %v2204
    %v2391 = vpop.f32.mrf.mxu0
    %v2392 = vadd.f32 %v2345, %v2391
    %2393 = vmatmul.f32.gmra.mxu0 %v2207
    %v2394 = vpop.f32.mrf.mxu0
    %v2395 = vadd.f32 %v2348, %v2394
    %2396 = vmatmul.f32.gmra.mxu0 %v2210
    %v2397 = vpop.f32.mrf.mxu0
    %v2398 = vadd.f32 %v2351, %v2397
    %2399 = vmatmul.f32.gmra.mxu0 %v2213
    %v2400 = vpop.f32.mrf.mxu0
    %v2401 = vadd.f32 %v2354, %v2400
    %2402 = vmatmul.f32.gmra.mxu0 %v2216
    %v2403 = vpop.f32.mrf.mxu0
    %v2404 = vadd.f32 %v2357, %v2403
    %2405 = vdwg.mxu0
    %v2406 = vadd.f32 %v1617, %v2377
    %v2407 = vadd.f32 %v1618, %v2380
    %v2408 = vadd.f32 %v1619, %v2383
    %v2409 = vadd.f32 %v1620, %v2386
    %v2410 = vadd.f32 %v1621, %v2389
    %v2411 = vadd.f32 %v1622, %v2392
    %v2412 = vadd.f32 %v1623, %v2395
    %v2413 = vadd.f32 %v1624, %v2398
    %v2414 = vadd.f32 %v1625, %v2401
    %v2415 = vadd.f32 %v1626, %v2404
    %v2416 = vmax.f32 %v2406, 0.0
    %v2417 = vmax.f32 %v2407, 0.0
    %v2418 = vmax.f32 %v2408, 0.0
    %v2419 = vmax.f32 %v2409, 0.0
    %v2420 = vmax.f32 %v2410, 0.0
    %v2421 = vmax.f32 %v2411, 0.0
    %v2422 = vmax.f32 %v2412, 0.0
    %v2423 = vmax.f32 %v2413, 0.0
    %v2424 = vmax.f32 %v2414, 0.0
    %v2425 = vmax.f32 %v2415, 0.0
    %v2426 = vmul.f32 %v2416, %v2416
    %v2427 = vmul.f32 %v2417, %v2417
    %v2428 = vmul.f32 %v2418, %v2418
    %v2429 = vmul.f32 %v2419, %v2419
    %v2430 = vmul.f32 %v2420, %v2420
    %v2431 = vmul.f32 %v2421, %v2421
    %v2432 = vmul.f32 %v2422, %v2422
    %v2433 = vmul.f32 %v2423, %v2423
    %v2434 = vmul.f32 %v2424, %v2424
    %v2435 = vmul.f32 %v2425, %v2425
    %2436 = vadd.xlane.f32.xlu0 %v2416
    %v2437 = vpop.xlane.xlu0 %2436
    %2438 = vadd.xlane.f32.xlu0 %v2417
    %v2439 = vpop.xlane.xlu0 %2438
    %2440 = vadd.xlane.f32.xlu0 %v2418
    %v2441 = vpop.xlane.xlu0 %2440
    %2442 = vadd.xlane.f32.xlu0 %v2419
    %v2443 = vpop.xlane.xlu0 %2442
    %2444 = vadd.xlane.f32.xlu0 %v2420
    %v2445 = vpop.xlane.xlu0 %2444
    %2446 = vadd.xlane.f32.xlu0 %v2421
    %v2447 = vpop.xlane.xlu0 %2446
    %2448 = vadd.xlane.f32.xlu0 %v2422
    %v2449 = vpop.xlane.xlu0 %2448
    %2450 = vadd.xlane.f32.xlu0 %v2423
    %v2451 = vpop.xlane.xlu0 %2450
    %2452 = vadd.xlane.f32.xlu0 %v2424
    %v2453 = vpop.xlane.xlu0 %2452
    %2454 = vadd.xlane.f32.xlu0 %v2425
    %v2455 = vpop.xlane.xlu0 %2454
    %2456 = vadd.xlane.f32.xlu0 %v2426
    %v2457 = vpop.xlane.xlu0 %2456
    %2458 = vadd.xlane.f32.xlu0 %v2427
    %v2459 = vpop.xlane.xlu0 %2458
    %2460 = vadd.xlane.f32.xlu0 %v2428
    %v2461 = vpop.xlane.xlu0 %2460
    %2462 = vadd.xlane.f32.xlu0 %v2429
    %v2463 = vpop.xlane.xlu0 %2462
    %2464 = vadd.xlane.f32.xlu0 %v2430
    %v2465 = vpop.xlane.xlu0 %2464
    %2466 = vadd.xlane.f32.xlu0 %v2431
    %v2467 = vpop.xlane.xlu0 %2466
    %2468 = vadd.xlane.f32.xlu0 %v2432
    %v2469 = vpop.xlane.xlu0 %2468
    %2470 = vadd.xlane.f32.xlu0 %v2433
    %v2471 = vpop.xlane.xlu0 %2470
    %2472 = vadd.xlane.f32.xlu0 %v2434
    %v2473 = vpop.xlane.xlu0 %2472
    %2474 = vadd.xlane.f32.xlu0 %v2435
    %v2475 = vpop.xlane.xlu0 %2474
    %v2476 = vmul.f32 %v2437, 0.0125
    %v2477 = vmul.f32 %v2439, 0.0125
    %v2478 = vmul.f32 %v2441, 0.0125
    %v2479 = vmul.f32 %v2443, 0.0125
    %v2480 = vmul.f32 %v2445, 0.0125
    %v2481 = vmul.f32 %v2447, 0.0125
    %v2482 = vmul.f32 %v2449, 0.0125
    %v2483 = vmul.f32 %v2451, 0.0125
    %v2484 = vmul.f32 %v2453, 0.0125
    %v2485 = vmul.f32 %v2455, 0.0125
    %v2486 = vmul.f32 %v2457, 0.0125
    %v2487 = vmul.f32 %v2459, 0.0125
    %v2488 = vmul.f32 %v2461, 0.0125
    %v2489 = vmul.f32 %v2463, 0.0125
    %v2490 = vmul.f32 %v2465, 0.0125
    %v2491 = vmul.f32 %v2467, 0.0125
    %v2492 = vmul.f32 %v2469, 0.0125
    %v2493 = vmul.f32 %v2471, 0.0125
    %v2494 = vmul.f32 %v2473, 0.0125
    %v2495 = vmul.f32 %v2475, 0.0125
    %v2496 = vmul.f32 %v2476, %v2476
    %v2497 = vmul.f32 %v2477, %v2477
    %v2498 = vmul.f32 %v2478, %v2478
    %v2499 = vmul.f32 %v2479, %v2479
    %v2500 = vmul.f32 %v2480, %v2480
    %v2501 = vmul.f32 %v2481, %v2481
    %v2502 = vmul.f32 %v2482, %v2482
    %v2503 = vmul.f32 %v2483, %v2483
    %v2504 = vmul.f32 %v2484, %v2484
    %v2505 = vmul.f32 %v2485, %v2485
    %v2506 = vsub.f32 %v2486, %v2496
    %v2507 = vsub.f32 %v2487, %v2497
    %v2508 = vsub.f32 %v2488, %v2498
    %v2509 = vsub.f32 %v2489, %v2499
    %v2510 = vsub.f32 %v2490, %v2500
    %v2511 = vsub.f32 %v2491, %v2501
    %v2512 = vsub.f32 %v2492, %v2502
    %v2513 = vsub.f32 %v2493, %v2503
    %v2514 = vsub.f32 %v2494, %v2504
    %v2515 = vsub.f32 %v2495, %v2505
    %v2516 = vmax.f32 %v2506, 0.0
    %v2517 = vmax.f32 %v2507, 0.0
    %v2518 = vmax.f32 %v2508, 0.0
    %v2519 = vmax.f32 %v2509, 0.0
    %v2520 = vmax.f32 %v2510, 0.0
    %v2521 = vmax.f32 %v2511, 0.0
    %v2522 = vmax.f32 %v2512, 0.0
    %v2523 = vmax.f32 %v2513, 0.0
    %v2524 = vmax.f32 %v2514, 0.0
    %v2525 = vmax.f32 %v2515, 0.0
    %v2526 = vsub.f32 %v2416, %v2476
    %v2527 = vsub.f32 %v2417, %v2477
    %v2528 = vsub.f32 %v2418, %v2478
    %v2529 = vsub.f32 %v2419, %v2479
    %v2530 = vsub.f32 %v2420, %v2480
    %v2531 = vsub.f32 %v2421, %v2481
    %v2532 = vsub.f32 %v2422, %v2482
    %v2533 = vsub.f32 %v2423, %v2483
    %v2534 = vsub.f32 %v2424, %v2484
    %v2535 = vsub.f32 %v2425, %v2485
    %v2536 = vadd.f32 %v2516, 1e-05
    %v2537 = vadd.f32 %v2517, 1e-05
    %v2538 = vadd.f32 %v2518, 1e-05
    %v2539 = vadd.f32 %v2519, 1e-05
    %v2540 = vadd.f32 %v2520, 1e-05
    %v2541 = vadd.f32 %v2521, 1e-05
    %v2542 = vadd.f32 %v2522, 1e-05
    %v2543 = vadd.f32 %v2523, 1e-05
    %v2544 = vadd.f32 %v2524, 1e-05
    %v2545 = vadd.f32 %v2525, 1e-05
    %v2546 = vrsqrt.pop %v2536
    %v2547 = vmul.f32 %v2546, %v2536
    %v2548 = vmul.f32 %v2547, %v2546
    %v2549 = vmul.f32 0.5, %v2548
    %v2550 = vsub.f32 1.5, %v2549
    %v2551 = vmul.f32 %v2546, %v2550
    %vm2552 = vweird.f32 %v2536
    %vm2553 = vweird.f32 %v2546
    %vm2554 = vmor %vm2552, %vm2553
    %v2555 = vsel %vm2554, %v2546, %v2551
    %v2556 = vrsqrt.pop %v2537
    %v2557 = vmul.f32 %v2556, %v2537
    %v2558 = vmul.f32 %v2557, %v2556
    %v2559 = vmul.f32 0.5, %v2558
    %v2560 = vsub.f32 1.5, %v2559
    %v2561 = vmul.f32 %v2556, %v2560
    %vm2562 = vweird.f32 %v2537
    %vm2563 = vweird.f32 %v2556
    %vm2564 = vmor %vm2562, %vm2563
    %v2565 = vsel %vm2564, %v2556, %v2561
    %v2566 = vrsqrt.pop %v2538
    %v2567 = vmul.f32 %v2566, %v2538
    %v2568 = vmul.f32 %v2567, %v2566
    %v2569 = vmul.f32 0.5, %v2568
    %v2570 = vsub.f32 1.5, %v2569
    %v2571 = vmul.f32 %v2566, %v2570
    %vm2572 = vweird.f32 %v2538
    %vm2573 = vweird.f32 %v2566
    %vm2574 = vmor %vm2572, %vm2573
    %v2575 = vsel %vm2574, %v2566, %v2571
    %v2576 = vrsqrt.pop %v2539
    %v2577 = vmul.f32 %v2576, %v2539
    %v2578 = vmul.f32 %v2577, %v2576
    %v2579 = vmul.f32 0.5, %v2578
    %v2580 = vsub.f32 1.5, %v2579
    %v2581 = vmul.f32 %v2576, %v2580
    %vm2582 = vweird.f32 %v2539
    %vm2583 = vweird.f32 %v2576
    %vm2584 = vmor %vm2582, %vm2583
    %v2585 = vsel %vm2584, %v2576, %v2581
    %v2586 = vrsqrt.pop %v2540
    %v2587 = vmul.f32 %v2586, %v2540
    %v2588 = vmul.f32 %v2587, %v2586
    %v2589 = vmul.f32 0.5, %v2588
    %v2590 = vsub.f32 1.5, %v2589
    %v2591 = vmul.f32 %v2586, %v2590
    %vm2592 = vweird.f32 %v2540
    %vm2593 = vweird.f32 %v2586
    %vm2594 = vmor %vm2592, %vm2593
    %v2595 = vsel %vm2594, %v2586, %v2591
    %v2596 = vrsqrt.pop %v2541
    %v2597 = vmul.f32 %v2596, %v2541
    %v2598 = vmul.f32 %v2597, %v2596
    %v2599 = vmul.f32 0.5, %v2598
    %v2600 = vsub.f32 1.5, %v2599
    %v2601 = vmul.f32 %v2596, %v2600
    %vm2602 = vweird.f32 %v2541
    %vm2603 = vweird.f32 %v2596
    %vm2604 = vmor %vm2602, %vm2603
    %v2605 = vsel %vm2604, %v2596, %v2601
    %v2606 = vrsqrt.pop %v2542
    %v2607 = vmul.f32 %v2606, %v2542
    %v2608 = vmul.f32 %v2607, %v2606
    %v2609 = vmul.f32 0.5, %v2608
    %v2610 = vsub.f32 1.5, %v2609
    %v2611 = vmul.f32 %v2606, %v2610
    %vm2612 = vweird.f32 %v2542
    %vm2613 = vweird.f32 %v2606
    %vm2614 = vmor %vm2612, %vm2613
    %v2615 = vsel %vm2614, %v2606, %v2611
    %v2616 = vrsqrt.pop %v2543
    %v2617 = vmul.f32 %v2616, %v2543
    %v2618 = vmul.f32 %v2617, %v2616
    %v2619 = vmul.f32 0.5, %v2618
    %v2620 = vsub.f32 1.5, %v2619
    %v2621 = vmul.f32 %v2616, %v2620
    %vm2622 = vweird.f32 %v2543
    %vm2623 = vweird.f32 %v2616
    %vm2624 = vmor %vm2622, %vm2623
    %v2625 = vsel %vm2624, %v2616, %v2621
    %v2626 = vrsqrt.pop %v2544
    %v2627 = vmul.f32 %v2626, %v2544
    %v2628 = vmul.f32 %v2627, %v2626
    %v2629 = vmul.f32 0.5, %v2628
    %v2630 = vsub.f32 1.5, %v2629
    %v2631 = vmul.f32 %v2626, %v2630
    %vm2632 = vweird.f32 %v2544
    %vm2633 = vweird.f32 %v2626
    %vm2634 = vmor %vm2632, %vm2633
    %v2635 = vsel %vm2634, %v2626, %v2631
    %v2636 = vrsqrt.pop %v2545
    %v2637 = vmul.f32 %v2636, %v2545
    %v2638 = vmul.f32 %v2637, %v2636
    %v2639 = vmul.f32 0.5, %v2638
    %v2640 = vsub.f32 1.5, %v2639
    %v2641 = vmul.f32 %v2636, %v2640
    %vm2642 = vweird.f32 %v2545
    %vm2643 = vweird.f32 %v2636
    %vm2644 = vmor %vm2642, %vm2643
    %v2645 = vsel %vm2644, %v2636, %v2641
    %v2646 = vmul.f32 %v2526, %v2555
    %v2647 = vmul.f32 %v2527, %v2565
    %v2648 = vmul.f32 %v2528, %v2575
    %v2649 = vmul.f32 %v2529, %v2585
    %v2650 = vmul.f32 %v2530, %v2595
    %v2651 = vmul.f32 %v2531, %v2605
    %v2652 = vmul.f32 %v2532, %v2615
    %v2653 = vmul.f32 %v2533, %v2625
    %v2654 = vmul.f32 %v2534, %v2635
    %v2655 = vmul.f32 %v2535, %v2645
    %2656 = vrot.lane.b32.xlu0 %v2646, 2
    %v2657 = vpop.permute.xlu0 %2656
    %2658 = vrot.lane.b32.xlu0 %v2647, 2
    %v2659 = vpop.permute.xlu0 %2658
    %2660 = vrot.lane.b32.xlu0 %v2648, 2
    %v2661 = vpop.permute.xlu0 %2660
    %2662 = vrot.lane.b32.xlu0 %v2649, 2
    %v2663 = vpop.permute.xlu0 %2662
    %2664 = vrot.lane.b32.xlu0 %v2650, 2
    %v2665 = vpop.permute.xlu0 %2664
    %2666 = vrot.lane.b32.xlu0 %v2651, 2
    %v2667 = vpop.permute.xlu0 %2666
    %2668 = vrot.lane.b32.xlu0 %v2652, 2
    %v2669 = vpop.permute.xlu0 %2668
    %2670 = vrot.lane.b32.xlu0 %v2653, 2
    %v2671 = vpop.permute.xlu0 %2670
    %2672 = vrot.lane.b32.xlu0 %v2654, 2
    %v2673 = vpop.permute.xlu0 %2672
    %2674 = vrot.lane.b32.xlu0 %v2655, 2
    %v2675 = vpop.permute.xlu0 %2674
    %v2676 = vld [vmem:[%s5] sm:$0xff]
    %v2677 = vld [vmem:[%s5 + $0x8] sm:$0xff]
    %v2678 = vld [vmem:[%s5 + $0x10] sm:$0xff]
    %v2679 = vld [vmem:[%s5 + $0x18] sm:$0xff]
    %v2680 = vld [vmem:[%s5 + $0x20] sm:$0xff]
    %v2681 = vld [vmem:[%s5 + $0x28] sm:$0xff]
    %v2682 = vld [vmem:[%s5 + $0x30] sm:$0xff]
    %v2683 = vld [vmem:[%s5 + $0x38] sm:$0xff]
    %v2684 = vld [vmem:[%s5 + $0x40] sm:$0xff]
    %v2685 = vld [vmem:[%s5 + $0x48] sm:$0xff]
    %v2686 = vmul.f32 %v2657, %v2676
    %v2687 = vmul.f32 %v2659, %v2677
    %v2688 = vmul.f32 %v2661, %v2678
    %v2689 = vmul.f32 %v2663, %v2679
    %v2690 = vmul.f32 %v2665, %v2680
    %v2691 = vmul.f32 %v2667, %v2681
    %v2692 = vmul.f32 %v2669, %v2682
    %v2693 = vmul.f32 %v2671, %v2683
    %v2694 = vmul.f32 %v2673, %v2684
    %v2695 = vmul.f32 %v2675, %v2685
    %2696 = vst [vmem:[#allocation2] sm:$0xff] %v2686
    %2697 = vst [vmem:[#allocation2 + $0x8] sm:$0xff] %v2687
    %2698 = vst [vmem:[#allocation2 + $0x10] sm:$0xff] %v2688
    %2699 = vst [vmem:[#allocation2 + $0x18] sm:$0xff] %v2689
    %2700 = vst [vmem:[#allocation2 + $0x20] sm:$0xff] %v2690
    %2701 = vst [vmem:[#allocation2 + $0x28] sm:$0xff] %v2691
    %2702 = vst [vmem:[#allocation2 + $0x30] sm:$0xff] %v2692
    %2703 = vst [vmem:[#allocation2 + $0x38] sm:$0xff] %v2693
    %2704 = vst [vmem:[#allocation2 + $0x40] sm:$0xff] %v2694
    %2705 = vst [vmem:[#allocation2 + $0x48] sm:$0xff] %v2695
    %2706 = vrot.lane.b32.xlu0 %v2646, 1
    %v2707 = vpop.permute.xlu0 %2706
    %2708 = vrot.lane.b32.xlu0 %v2647, 1
    %v2709 = vpop.permute.xlu0 %2708
    %2710 = vrot.lane.b32.xlu0 %v2648, 1
    %v2711 = vpop.permute.xlu0 %2710
    %2712 = vrot.lane.b32.xlu0 %v2649, 1
    %v2713 = vpop.permute.xlu0 %2712
    %2714 = vrot.lane.b32.xlu0 %v2650, 1
    %v2715 = vpop.permute.xlu0 %2714
    %2716 = vrot.lane.b32.xlu0 %v2651, 1
    %v2717 = vpop.permute.xlu0 %2716
    %2718 = vrot.lane.b32.xlu0 %v2652, 1
    %v2719 = vpop.permute.xlu0 %2718
    %2720 = vrot.lane.b32.xlu0 %v2653, 1
    %v2721 = vpop.permute.xlu0 %2720
    %2722 = vrot.lane.b32.xlu0 %v2654, 1
    %v2723 = vpop.permute.xlu0 %2722
    %2724 = vrot.lane.b32.xlu0 %v2655, 1
    %v2725 = vpop.permute.xlu0 %2724
    %v2726 = vld [vmem:[%s5 + $0x50] sm:$0xff]
    %v2727 = vld [vmem:[%s5 + $0x58] sm:$0xff]
    %v2728 = vld [vmem:[%s5 + $0x60] sm:$0xff]
    %v2729 = vld [vmem:[%s5 + $0x68] sm:$0xff]
    %v2730 = vld [vmem:[%s5 + $0x70] sm:$0xff]
    %v2731 = vld [vmem:[%s5 + $0x78] sm:$0xff]
    %v2732 = vld [vmem:[%s5 + $0x80] sm:$0xff]
    %v2733 = vld [vmem:[%s5 + $0x88] sm:$0xff]
    %v2734 = vld [vmem:[%s5 + $0x90] sm:$0xff]
    %v2735 = vld [vmem:[%s5 + $0x98] sm:$0xff]
    %v2736 = vmul.f32 %v2707, %v2726
    %v2737 = vmul.f32 %v2709, %v2727
    %v2738 = vmul.f32 %v2711, %v2728
    %v2739 = vmul.f32 %v2713, %v2729
    %v2740 = vmul.f32 %v2715, %v2730
    %v2741 = vmul.f32 %v2717, %v2731
    %v2742 = vmul.f32 %v2719, %v2732
    %v2743 = vmul.f32 %v2721, %v2733
    %v2744 = vmul.f32 %v2723, %v2734
    %v2745 = vmul.f32 %v2725, %v2735
    %2746 = vst [vmem:[#allocation2 + $0x50] sm:$0xff] %v2736
    %2747 = vst [vmem:[#allocation2 + $0x58] sm:$0xff] %v2737
    %2748 = vst [vmem:[#allocation2 + $0x60] sm:$0xff] %v2738
    %2749 = vst [vmem:[#allocation2 + $0x68] sm:$0xff] %v2739
    %2750 = vst [vmem:[#allocation2 + $0x70] sm:$0xff] %v2740
    %2751 = vst [vmem:[#allocation2 + $0x78] sm:$0xff] %v2741
    %2752 = vst [vmem:[#allocation2 + $0x80] sm:$0xff] %v2742
    %2753 = vst [vmem:[#allocation2 + $0x88] sm:$0xff] %v2743
    %2754 = vst [vmem:[#allocation2 + $0x90] sm:$0xff] %v2744
    %2755 = vst [vmem:[#allocation2 + $0x98] sm:$0xff] %v2745
    %v2756 = vld [vmem:[%s5 + $0xa0] sm:$0xff]
    %v2757 = vld [vmem:[%s5 + $0xa8] sm:$0xff]
    %v2758 = vld [vmem:[%s5 + $0xb0] sm:$0xff]
    %v2759 = vld [vmem:[%s5 + $0xb8] sm:$0xff]
    %v2760 = vld [vmem:[%s5 + $0xc0] sm:$0xff]
    %v2761 = vld [vmem:[%s5 + $0xc8] sm:$0xff]
    %v2762 = vld [vmem:[%s5 + $0xd0] sm:$0xff]
    %v2763 = vld [vmem:[%s5 + $0xd8] sm:$0xff]
    %v2764 = vld [vmem:[%s5 + $0xe0] sm:$0xff]
    %v2765 = vld [vmem:[%s5 + $0xe8] sm:$0xff]
    %v2766 = vmul.f32 %v2646, %v2756
    %v2767 = vmul.f32 %v2647, %v2757
    %v2768 = vmul.f32 %v2648, %v2758
    %v2769 = vmul.f32 %v2649, %v2759
    %v2770 = vmul.f32 %v2650, %v2760
    %v2771 = vmul.f32 %v2651, %v2761
    %v2772 = vmul.f32 %v2652, %v2762
    %v2773 = vmul.f32 %v2653, %v2763
    %v2774 = vmul.f32 %v2654, %v2764
    %v2775 = vmul.f32 %v2655, %v2765
    %2776 = vst [vmem:[#allocation2 + $0xa0] sm:$0xff] %v2766
    %2777 = vst [vmem:[#allocation2 + $0xa8] sm:$0xff] %v2767
    %2778 = vst [vmem:[#allocation2 + $0xb0] sm:$0xff] %v2768
    %2779 = vst [vmem:[#allocation2 + $0xb8] sm:$0xff] %v2769
    %2780 = vst [vmem:[#allocation2 + $0xc0] sm:$0xff] %v2770
    %2781 = vst [vmem:[#allocation2 + $0xc8] sm:$0xff] %v2771
    %2782 = vst [vmem:[#allocation2 + $0xd0] sm:$0xff] %v2772
    %2783 = vst [vmem:[#allocation2 + $0xd8] sm:$0xff] %v2773
    %2784 = vst [vmem:[#allocation2 + $0xe0] sm:$0xff] %v2774
    %2785 = vst [vmem:[#allocation2 + $0xe8] sm:$0xff] %v2775
    %2786 = vrot.lane.b32.xlu0 %v2646, 127
    %v2787 = vpop.permute.xlu0 %2786
    %2788 = vrot.lane.b32.xlu0 %v2647, 127
    %v2789 = vpop.permute.xlu0 %2788
    %2790 = vrot.lane.b32.xlu0 %v2648, 127
    %v2791 = vpop.permute.xlu0 %2790
    %2792 = vrot.lane.b32.xlu0 %v2649, 127
    %v2793 = vpop.permute.xlu0 %2792
    %2794 = vrot.lane.b32.xlu0 %v2650, 127
    %v2795 = vpop.permute.xlu0 %2794
    %2796 = vrot.lane.b32.xlu0 %v2651, 127
    %v2797 = vpop.permute.xlu0 %2796
    %2798 = vrot.lane.b32.xlu0 %v2652, 127
    %v2799 = vpop.permute.xlu0 %2798
    %2800 = vrot.lane.b32.xlu0 %v2653, 127
    %v2801 = vpop.permute.xlu0 %2800
    %2802 = vrot.lane.b32.xlu0 %v2654, 127
    %v2803 = vpop.permute.xlu0 %2802
    %2804 = vrot.lane.b32.xlu0 %v2655, 127
    %v2805 = vpop.permute.xlu0 %2804
    %v2806 = vld [vmem:[%s5 + $0xf0] sm:$0xff]
    %v2807 = vld [vmem:[%s5 + $0xf8] sm:$0xff]
    %v2808 = vld [vmem:[%s5 + $0x100] sm:$0xff]
    %v2809 = vld [vmem:[%s5 + $0x108] sm:$0xff]
    %v2810 = vld [vmem:[%s5 + $0x110] sm:$0xff]
    %v2811 = vld [vmem:[%s5 + $0x118] sm:$0xff]
    %v2812 = vld [vmem:[%s5 + $0x120] sm:$0xff]
    %v2813 = vld [vmem:[%s5 + $0x128] sm:$0xff]
    %v2814 = vld [vmem:[%s5 + $0x130] sm:$0xff]
    %v2815 = vld [vmem:[%s5 + $0x138] sm:$0xff]
    %v2816 = vmul.f32 %v2787, %v2806
    %v2817 = vmul.f32 %v2789, %v2807
    %v2818 = vmul.f32 %v2791, %v2808
    %v2819 = vmul.f32 %v2793, %v2809
    %v2820 = vmul.f32 %v2795, %v2810
    %v2821 = vmul.f32 %v2797, %v2811
    %v2822 = vmul.f32 %v2799, %v2812
    %v2823 = vmul.f32 %v2801, %v2813
    %v2824 = vmul.f32 %v2803, %v2814
    %v2825 = vmul.f32 %v2805, %v2815
    %2826 = vst [vmem:[#allocation2 + $0xf0] sm:$0xff] %v2816
    %2827 = vst [vmem:[#allocation2 + $0xf8] sm:$0xff] %v2817
    %2828 = vst [vmem:[#allocation2 + $0x100] sm:$0xff] %v2818
    %2829 = vst [vmem:[#allocation2 + $0x108] sm:$0xff] %v2819
    %2830 = vst [vmem:[#allocation2 + $0x110] sm:$0xff] %v2820
    %2831 = vst [vmem:[#allocation2 + $0x118] sm:$0xff] %v2821
    %2832 = vst [vmem:[#allocation2 + $0x120] sm:$0xff] %v2822
    %2833 = vst [vmem:[#allocation2 + $0x128] sm:$0xff] %v2823
    %2834 = vst [vmem:[#allocation2 + $0x130] sm:$0xff] %v2824
    %2835 = vst [vmem:[#allocation2 + $0x138] sm:$0xff] %v2825
    %2836 = vrot.lane.b32.xlu0 %v2646, 126
    %v2837 = vpop.permute.xlu0 %2836
    %2838 = vrot.lane.b32.xlu0 %v2647, 126
    %v2839 = vpop.permute.xlu0 %2838
    %2840 = vrot.lane.b32.xlu0 %v2648, 126
    %v2841 = vpop.permute.xlu0 %2840
    %2842 = vrot.lane.b32.xlu0 %v2649, 126
    %v2843 = vpop.permute.xlu0 %2842
    %2844 = vrot.lane.b32.xlu0 %v2650, 126
    %v2845 = vpop.permute.xlu0 %2844
    %2846 = vrot.lane.b32.xlu0 %v2651, 126
    %v2847 = vpop.permute.xlu0 %2846
    %2848 = vrot.lane.b32.xlu0 %v2652, 126
    %v2849 = vpop.permute.xlu0 %2848
    %2850 = vrot.lane.b32.xlu0 %v2653, 126
    %v2851 = vpop.permute.xlu0 %2850
    %2852 = vrot.lane.b32.xlu0 %v2654, 126
    %v2853 = vpop.permute.xlu0 %2852
    %2854 = vrot.lane.b32.xlu0 %v2655, 126
    %v2855 = vpop.permute.xlu0 %2854
    %v2856 = vld [vmem:[%s5 + $0x140] sm:$0xff]
    %v2857 = vld [vmem:[%s5 + $0x148] sm:$0xff]
    %v2858 = vld [vmem:[%s5 + $0x150] sm:$0xff]
    %v2859 = vld [vmem:[%s5 + $0x158] sm:$0xff]
    %v2860 = vld [vmem:[%s5 + $0x160] sm:$0xff]
    %v2861 = vld [vmem:[%s5 + $0x168] sm:$0xff]
    %v2862 = vld [vmem:[%s5 + $0x170] sm:$0xff]
    %v2863 = vld [vmem:[%s5 + $0x178] sm:$0xff]
    %v2864 = vld [vmem:[%s5 + $0x180] sm:$0xff]
    %v2865 = vld [vmem:[%s5 + $0x188] sm:$0xff]
    %v2866 = vmul.f32 %v2837, %v2856
    %v2867 = vmul.f32 %v2839, %v2857
    %v2868 = vmul.f32 %v2841, %v2858
    %v2869 = vmul.f32 %v2843, %v2859
    %v2870 = vmul.f32 %v2845, %v2860
    %v2871 = vmul.f32 %v2847, %v2861
    %v2872 = vmul.f32 %v2849, %v2862
    %v2873 = vmul.f32 %v2851, %v2863
    %v2874 = vmul.f32 %v2853, %v2864
    %v2875 = vmul.f32 %v2855, %v2865
    %2876 = vst [vmem:[#allocation2 + $0x140] sm:$0xff] %v2866
    %2877 = vst [vmem:[#allocation2 + $0x148] sm:$0xff] %v2867
    %2878 = vst [vmem:[#allocation2 + $0x150] sm:$0xff] %v2868
    %2879 = vst [vmem:[#allocation2 + $0x158] sm:$0xff] %v2869
    %2880 = vst [vmem:[#allocation2 + $0x160] sm:$0xff] %v2870
    %2881 = vst [vmem:[#allocation2 + $0x168] sm:$0xff] %v2871
    %2882 = vst [vmem:[#allocation2 + $0x170] sm:$0xff] %v2872
    %2883 = vst [vmem:[#allocation2 + $0x178] sm:$0xff] %v2873
    %2884 = vst [vmem:[#allocation2 + $0x180] sm:$0xff] %v2874
    %2885 = vst [vmem:[#allocation2 + $0x188] sm:$0xff] %v2875
    %s2886 = scalar_lea.vmem [#allocation3], 960
    %v2887 = vld [vmem:[%s2886] sm:$0xff]
    %v2888 = vld [vmem:[%s2886 + $0x8] sm:$0xff]
    %v2889 = vld [vmem:[%s2886 + $0x10] sm:$0xff]
    %v2890 = vld [vmem:[%s2886 + $0x18] sm:$0xff]
    %v2891 = vld [vmem:[%s2886 + $0x20] sm:$0xff]
    %v2892 = vld [vmem:[%s2886 + $0x28] sm:$0xff]
    %v2893 = vld [vmem:[%s2886 + $0x30] sm:$0xff]
    %v2894 = vld [vmem:[%s2886 + $0x38] sm:$0xff]
    %v2895 = vld [vmem:[%s2886 + $0x40] sm:$0xff]
    %v2896 = vld [vmem:[%s2886 + $0x48] sm:$0xff]
    %v2897 = vld [vmem:[%s2886 + $0x50] sm:$0xff]
    %v2898 = vld [vmem:[%s2886 + $0x58] sm:$0xff]
    %v2899 = vld [vmem:[%s2886 + $0x60] sm:$0xff]
    %v2900 = vld [vmem:[%s2886 + $0x68] sm:$0xff]
    %v2901 = vld [vmem:[%s2886 + $0x70] sm:$0xff]
    %v2902 = vld [vmem:[%s2886 + $0x78] sm:$0xff]
    %v2903 = vld [vmem:[%s2886 + $0x80] sm:$0xff]
    %v2904 = vld [vmem:[%s2886 + $0x88] sm:$0xff]
    %v2905 = vld [vmem:[%s2886 + $0x90] sm:$0xff]
    %v2906 = vld [vmem:[%s2886 + $0x98] sm:$0xff]
    %v2907 = vld [vmem:[%s2886 + $0xa0] sm:$0xff]
    %v2908 = vld [vmem:[%s2886 + $0xa8] sm:$0xff]
    %v2909 = vld [vmem:[%s2886 + $0xb0] sm:$0xff]
    %v2910 = vld [vmem:[%s2886 + $0xb8] sm:$0xff]
    %v2911 = vld [vmem:[%s2886 + $0xc0] sm:$0xff]
    %v2912 = vld [vmem:[%s2886 + $0xc8] sm:$0xff]
    %v2913 = vld [vmem:[%s2886 + $0xd0] sm:$0xff]
    %v2914 = vld [vmem:[%s2886 + $0xd8] sm:$0xff]
    %v2915 = vld [vmem:[%s2886 + $0xe0] sm:$0xff]
    %v2916 = vld [vmem:[%s2886 + $0xe8] sm:$0xff]
    %v2917 = vld [vmem:[%s2886 + $0xf0] sm:$0xff]
    %v2918 = vld [vmem:[%s2886 + $0xf8] sm:$0xff]
    %v2919 = vld [vmem:[%s2886 + $0x100] sm:$0xff]
    %v2920 = vld [vmem:[%s2886 + $0x108] sm:$0xff]
    %v2921 = vld [vmem:[%s2886 + $0x110] sm:$0xff]
    %v2922 = vld [vmem:[%s2886 + $0x118] sm:$0xff]
    %v2923 = vld [vmem:[%s2886 + $0x120] sm:$0xff]
    %v2924 = vld [vmem:[%s2886 + $0x128] sm:$0xff]
    %v2925 = vld [vmem:[%s2886 + $0x130] sm:$0xff]
    %v2926 = vld [vmem:[%s2886 + $0x138] sm:$0xff]
    %v2927 = vld [vmem:[#allocation2] sm:$0xff]
    %v2928 = vld [vmem:[#allocation2 + $0x8] sm:$0xff]
    %v2929 = vld [vmem:[#allocation2 + $0x10] sm:$0xff]
    %v2930 = vld [vmem:[#allocation2 + $0x18] sm:$0xff]
    %v2931 = vld [vmem:[#allocation2 + $0x20] sm:$0xff]
    %v2932 = vld [vmem:[#allocation2 + $0x28] sm:$0xff]
    %v2933 = vld [vmem:[#allocation2 + $0x30] sm:$0xff]
    %v2934 = vld [vmem:[#allocation2 + $0x38] sm:$0xff]
    %v2935 = vld [vmem:[#allocation2 + $0x40] sm:$0xff]
    %v2936 = vld [vmem:[#allocation2 + $0x48] sm:$0xff]
    %v2937 = vld [vmem:[#allocation2 + $0x50] sm:$0xff]
    %v2938 = vld [vmem:[#allocation2 + $0x58] sm:$0xff]
    %v2939 = vld [vmem:[#allocation2 + $0x60] sm:$0xff]
    %v2940 = vld [vmem:[#allocation2 + $0x68] sm:$0xff]
    %v2941 = vld [vmem:[#allocation2 + $0x70] sm:$0xff]
    %v2942 = vld [vmem:[#allocation2 + $0x78] sm:$0xff]
    %v2943 = vld [vmem:[#allocation2 + $0x80] sm:$0xff]
    %v2944 = vld [vmem:[#allocation2 + $0x88] sm:$0xff]
    %v2945 = vld [vmem:[#allocation2 + $0x90] sm:$0xff]
    %v2946 = vld [vmem:[#allocation2 + $0x98] sm:$0xff]
    %v2947 = vld [vmem:[#allocation2 + $0xa0] sm:$0xff]
    %v2948 = vld [vmem:[#allocation2 + $0xa8] sm:$0xff]
    %v2949 = vld [vmem:[#allocation2 + $0xb0] sm:$0xff]
    %v2950 = vld [vmem:[#allocation2 + $0xb8] sm:$0xff]
    %v2951 = vld [vmem:[#allocation2 + $0xc0] sm:$0xff]
    %v2952 = vld [vmem:[#allocation2 + $0xc8] sm:$0xff]
    %v2953 = vld [vmem:[#allocation2 + $0xd0] sm:$0xff]
    %v2954 = vld [vmem:[#allocation2 + $0xd8] sm:$0xff]
    %v2955 = vld [vmem:[#allocation2 + $0xe0] sm:$0xff]
    %v2956 = vld [vmem:[#allocation2 + $0xe8] sm:$0xff]
    %v2957 = vld [vmem:[#allocation2 + $0xf0] sm:$0xff]
    %v2958 = vld [vmem:[#allocation2 + $0xf8] sm:$0xff]
    %v2959 = vld [vmem:[#allocation2 + $0x100] sm:$0xff]
    %v2960 = vld [vmem:[#allocation2 + $0x108] sm:$0xff]
    %v2961 = vld [vmem:[#allocation2 + $0x110] sm:$0xff]
    %v2962 = vld [vmem:[#allocation2 + $0x118] sm:$0xff]
    %v2963 = vld [vmem:[#allocation2 + $0x120] sm:$0xff]
    %v2964 = vld [vmem:[#allocation2 + $0x128] sm:$0xff]
    %v2965 = vld [vmem:[#allocation2 + $0x130] sm:$0xff]
    %v2966 = vld [vmem:[#allocation2 + $0x138] sm:$0xff]
    %v2967 = vld [vmem:[#allocation2 + $0x140] sm:$0xff]
    %v2968 = vld [vmem:[#allocation2 + $0x148] sm:$0xff]
    %v2969 = vld [vmem:[#allocation2 + $0x150] sm:$0xff]
    %v2970 = vld [vmem:[#allocation2 + $0x158] sm:$0xff]
    %v2971 = vld [vmem:[#allocation2 + $0x160] sm:$0xff]
    %v2972 = vld [vmem:[#allocation2 + $0x168] sm:$0xff]
    %v2973 = vld [vmem:[#allocation2 + $0x170] sm:$0xff]
    %v2974 = vld [vmem:[#allocation2 + $0x178] sm:$0xff]
    %v2975 = vld [vmem:[#allocation2 + $0x180] sm:$0xff]
    %v2976 = vld [vmem:[#allocation2 + $0x188] sm:$0xff]
    %v2978 = vsel %vm609, %v2890, 0
    %v2981 = vsel %vm609, %v2894, 0
    %v2984 = vsel %vm609, %v2898, 0
    %v2987 = vsel %vm609, %v2902, 0
    %v2990 = vsel %vm609, %v2906, 0
    %v2993 = vsel %vm609, %v2910, 0
    %v2996 = vsel %vm609, %v2914, 0
    %v2999 = vsel %vm609, %v2918, 0
    %v3002 = vsel %vm609, %v2922, 0
    %v3005 = vsel %vm609, %v2926, 0
    %3007 = vmatpush.msra.mxu0 %v2942
    %3008 = vmatpush.msra.mxu0 %v2941
    %3009 = vmatpush.msra.mxu0 %v2940
    %3010 = vmatpush.msra.mxu0 %v2939
    %3011 = vmatpush.msra.mxu0 %v2938
    %3012 = vmatpush.msra.mxu0 %v2937
    %3013 = vmatpush.msra.mxu0 %v2936
    %3014 = vmatpush.msra.mxu0 %v2935
    %3015 = vmatpush.msra.mxu0 %v2934
    %3016 = vmatpush.msra.mxu0 %v2933
    %3017 = vmatpush.msra.mxu0 %v2932
    %3018 = vmatpush.msra.mxu0 %v2931
    %3019 = vmatpush.msra.mxu0 %v2930
    %3020 = vmatpush.msra.mxu0 %v2929
    %3021 = vmatpush.msra.mxu0 %v2928
    %3022 = vmatpush.msra.mxu0 %v2927
    %3023 = vmatmul.f32.gmra.mxu0 %v2887
    %v3024 = vpop.f32.mrf.mxu0
    %v3025 = vadd.f32 0.0, %v3024
    %3026 = vmatmul.f32.gmra.mxu0 %v2891
    %v3027 = vpop.f32.mrf.mxu0
    %v3028 = vadd.f32 0.0, %v3027
    %3029 = vmatmul.f32.gmra.mxu0 %v2895
    %v3030 = vpop.f32.mrf.mxu0
    %v3031 = vadd.f32 0.0, %v3030
    %3032 = vmatmul.f32.gmra.mxu0 %v2899
    %v3033 = vpop.f32.mrf.mxu0
    %v3034 = vadd.f32 0.0, %v3033
    %3035 = vmatmul.f32.gmra.mxu0 %v2903
    %v3036 = vpop.f32.mrf.mxu0
    %v3037 = vadd.f32 0.0, %v3036
    %3038 = vmatmul.f32.gmra.mxu0 %v2907
    %v3039 = vpop.f32.mrf.mxu0
    %v3040 = vadd.f32 0.0, %v3039
    %3041 = vmatmul.f32.gmra.mxu0 %v2911
    %v3042 = vpop.f32.mrf.mxu0
    %v3043 = vadd.f32 0.0, %v3042
    %3044 = vmatmul.f32.gmra.mxu0 %v2915
    %v3045 = vpop.f32.mrf.mxu0
    %v3046 = vadd.f32 0.0, %v3045
    %3047 = vmatmul.f32.gmra.mxu0 %v2919
    %v3048 = vpop.f32.mrf.mxu0
    %v3049 = vadd.f32 0.0, %v3048
    %3050 = vmatmul.f32.gmra.mxu0 %v2923
    %v3051 = vpop.f32.mrf.mxu0
    %v3052 = vadd.f32 0.0, %v3051
    %3053 = vdwg.mxu0
    %3054 = vmatpush.msra.mxu0 %v2958
    %3055 = vmatpush.msra.mxu0 %v2957
    %3056 = vmatpush.msra.mxu0 %v2956
    %3057 = vmatpush.msra.mxu0 %v2955
    %3058 = vmatpush.msra.mxu0 %v2954
    %3059 = vmatpush.msra.mxu0 %v2953
    %3060 = vmatpush.msra.mxu0 %v2952
    %3061 = vmatpush.msra.mxu0 %v2951
    %3062 = vmatpush.msra.mxu0 %v2950
    %3063 = vmatpush.msra.mxu0 %v2949
    %3064 = vmatpush.msra.mxu0 %v2948
    %3065 = vmatpush.msra.mxu0 %v2947
    %3066 = vmatpush.msra.mxu0 %v2946
    %3067 = vmatpush.msra.mxu0 %v2945
    %3068 = vmatpush.msra.mxu0 %v2944
    %3069 = vmatpush.msra.mxu0 %v2943
    %3070 = vmatmul.f32.gmra.mxu0 %v2888
    %v3071 = vpop.f32.mrf.mxu0
    %v3072 = vadd.f32 %v3025, %v3071
    %3073 = vmatmul.f32.gmra.mxu0 %v2892
    %v3074 = vpop.f32.mrf.mxu0
    %v3075 = vadd.f32 %v3028, %v3074
    %3076 = vmatmul.f32.gmra.mxu0 %v2896
    %v3077 = vpop.f32.mrf.mxu0
    %v3078 = vadd.f32 %v3031, %v3077
    %3079 = vmatmul.f32.gmra.mxu0 %v2900
    %v3080 = vpop.f32.mrf.mxu0
    %v3081 = vadd.f32 %v3034, %v3080
    %3082 = vmatmul.f32.gmra.mxu0 %v2904
    %v3083 = vpop.f32.mrf.mxu0
    %v3084 = vadd.f32 %v3037, %v3083
    %3085 = vmatmul.f32.gmra.mxu0 %v2908
    %v3086 = vpop.f32.mrf.mxu0
    %v3087 = vadd.f32 %v3040, %v3086
    %3088 = vmatmul.f32.gmra.mxu0 %v2912
    %v3089 = vpop.f32.mrf.mxu0
    %v3090 = vadd.f32 %v3043, %v3089
    %3091 = vmatmul.f32.gmra.mxu0 %v2916
    %v3092 = vpop.f32.mrf.mxu0
    %v3093 = vadd.f32 %v3046, %v3092
    %3094 = vmatmul.f32.gmra.mxu0 %v2920
    %v3095 = vpop.f32.mrf.mxu0
    %v3096 = vadd.f32 %v3049, %v3095
    %3097 = vmatmul.f32.gmra.mxu0 %v2924
    %v3098 = vpop.f32.mrf.mxu0
    %v3099 = vadd.f32 %v3052, %v3098
    %3100 = vdwg.mxu0
    %3101 = vmatpush.msra.mxu0 %v2974
    %3102 = vmatpush.msra.mxu0 %v2973
    %3103 = vmatpush.msra.mxu0 %v2972
    %3104 = vmatpush.msra.mxu0 %v2971
    %3105 = vmatpush.msra.mxu0 %v2970
    %3106 = vmatpush.msra.mxu0 %v2969
    %3107 = vmatpush.msra.mxu0 %v2968
    %3108 = vmatpush.msra.mxu0 %v2967
    %3109 = vmatpush.msra.mxu0 %v2966
    %3110 = vmatpush.msra.mxu0 %v2965
    %3111 = vmatpush.msra.mxu0 %v2964
    %3112 = vmatpush.msra.mxu0 %v2963
    %3113 = vmatpush.msra.mxu0 %v2962
    %3114 = vmatpush.msra.mxu0 %v2961
    %3115 = vmatpush.msra.mxu0 %v2960
    %3116 = vmatpush.msra.mxu0 %v2959
    %3117 = vmatmul.f32.gmra.mxu0 %v2889
    %v3118 = vpop.f32.mrf.mxu0
    %v3119 = vadd.f32 %v3072, %v3118
    %3120 = vmatmul.f32.gmra.mxu0 %v2893
    %v3121 = vpop.f32.mrf.mxu0
    %v3122 = vadd.f32 %v3075, %v3121
    %3123 = vmatmul.f32.gmra.mxu0 %v2897
    %v3124 = vpop.f32.mrf.mxu0
    %v3125 = vadd.f32 %v3078, %v3124
    %3126 = vmatmul.f32.gmra.mxu0 %v2901
    %v3127 = vpop.f32.mrf.mxu0
    %v3128 = vadd.f32 %v3081, %v3127
    %3129 = vmatmul.f32.gmra.mxu0 %v2905
    %v3130 = vpop.f32.mrf.mxu0
    %v3131 = vadd.f32 %v3084, %v3130
    %3132 = vmatmul.f32.gmra.mxu0 %v2909
    %v3133 = vpop.f32.mrf.mxu0
    %v3134 = vadd.f32 %v3087, %v3133
    %3135 = vmatmul.f32.gmra.mxu0 %v2913
    %v3136 = vpop.f32.mrf.mxu0
    %v3137 = vadd.f32 %v3090, %v3136
    %3138 = vmatmul.f32.gmra.mxu0 %v2917
    %v3139 = vpop.f32.mrf.mxu0
    %v3140 = vadd.f32 %v3093, %v3139
    %3141 = vmatmul.f32.gmra.mxu0 %v2921
    %v3142 = vpop.f32.mrf.mxu0
    %v3143 = vadd.f32 %v3096, %v3142
    %3144 = vmatmul.f32.gmra.mxu0 %v2925
    %v3145 = vpop.f32.mrf.mxu0
    %v3146 = vadd.f32 %v3099, %v3145
    %3147 = vdwg.mxu0
    %3148 = vmatpush.msra.mxu0 0.0
    %3149 = vmatpush.msra.mxu0 0.0
    %3150 = vmatpush.msra.mxu0 0.0
    %3151 = vmatpush.msra.mxu0 0.0
    %3152 = vmatpush.msra.mxu0 0.0
    %3153 = vmatpush.msra.mxu0 0.0
    %3154 = vmatpush.msra.mxu0 0.0
    %3155 = vmatpush.msra.mxu0 0.0
    %3156 = vmatpush.msra.mxu0 0.0
    %3157 = vmatpush.msra.mxu0 0.0
    %3158 = vmatpush.msra.mxu0 0.0
    %3159 = vmatpush.msra.mxu0 0.0
    %3160 = vmatpush.msra.mxu0 0.0
    %3161 = vmatpush.msra.mxu0 0.0
    %3162 = vmatpush.msra.mxu0 %v2976
    %3163 = vmatpush.msra.mxu0 %v2975
    %3164 = vmatmul.f32.gmra.mxu0 %v2978
    %v3165 = vpop.f32.mrf.mxu0
    %v3166 = vadd.f32 %v3119, %v3165
    %3167 = vmatmul.f32.gmra.mxu0 %v2981
    %v3168 = vpop.f32.mrf.mxu0
    %v3169 = vadd.f32 %v3122, %v3168
    %3170 = vmatmul.f32.gmra.mxu0 %v2984
    %v3171 = vpop.f32.mrf.mxu0
    %v3172 = vadd.f32 %v3125, %v3171
    %3173 = vmatmul.f32.gmra.mxu0 %v2987
    %v3174 = vpop.f32.mrf.mxu0
    %v3175 = vadd.f32 %v3128, %v3174
    %3176 = vmatmul.f32.gmra.mxu0 %v2990
    %v3177 = vpop.f32.mrf.mxu0
    %v3178 = vadd.f32 %v3131, %v3177
    %3179 = vmatmul.f32.gmra.mxu0 %v2993
    %v3180 = vpop.f32.mrf.mxu0
    %v3181 = vadd.f32 %v3134, %v3180
    %3182 = vmatmul.f32.gmra.mxu0 %v2996
    %v3183 = vpop.f32.mrf.mxu0
    %v3184 = vadd.f32 %v3137, %v3183
    %3185 = vmatmul.f32.gmra.mxu0 %v2999
    %v3186 = vpop.f32.mrf.mxu0
    %v3187 = vadd.f32 %v3140, %v3186
    %3188 = vmatmul.f32.gmra.mxu0 %v3002
    %v3189 = vpop.f32.mrf.mxu0
    %v3190 = vadd.f32 %v3143, %v3189
    %3191 = vmatmul.f32.gmra.mxu0 %v3005
    %v3192 = vpop.f32.mrf.mxu0
    %v3193 = vadd.f32 %v3146, %v3192
    %3194 = vdwg.mxu0
    %v3195 = vadd.f32 %v2406, %v3166
    %v3196 = vadd.f32 %v2407, %v3169
    %v3197 = vadd.f32 %v2408, %v3172
    %v3198 = vadd.f32 %v2409, %v3175
    %v3199 = vadd.f32 %v2410, %v3178
    %v3200 = vadd.f32 %v2411, %v3181
    %v3201 = vadd.f32 %v2412, %v3184
    %v3202 = vadd.f32 %v2413, %v3187
    %v3203 = vadd.f32 %v2414, %v3190
    %v3204 = vadd.f32 %v2415, %v3193
    %v3205 = vmax.f32 %v3195, 0.0
    %v3206 = vmax.f32 %v3196, 0.0
    %v3207 = vmax.f32 %v3197, 0.0
    %v3208 = vmax.f32 %v3198, 0.0
    %v3209 = vmax.f32 %v3199, 0.0
    %v3210 = vmax.f32 %v3200, 0.0
    %v3211 = vmax.f32 %v3201, 0.0
    %v3212 = vmax.f32 %v3202, 0.0
    %v3213 = vmax.f32 %v3203, 0.0
    %v3214 = vmax.f32 %v3204, 0.0
    %v3215 = vmul.f32 %v3205, %v3205
    %v3216 = vmul.f32 %v3206, %v3206
    %v3217 = vmul.f32 %v3207, %v3207
    %v3218 = vmul.f32 %v3208, %v3208
    %v3219 = vmul.f32 %v3209, %v3209
    %v3220 = vmul.f32 %v3210, %v3210
    %v3221 = vmul.f32 %v3211, %v3211
    %v3222 = vmul.f32 %v3212, %v3212
    %v3223 = vmul.f32 %v3213, %v3213
    %v3224 = vmul.f32 %v3214, %v3214
    %3225 = vadd.xlane.f32.xlu0 %v3205
    %v3226 = vpop.xlane.xlu0 %3225
    %3227 = vadd.xlane.f32.xlu0 %v3206
    %v3228 = vpop.xlane.xlu0 %3227
    %3229 = vadd.xlane.f32.xlu0 %v3207
    %v3230 = vpop.xlane.xlu0 %3229
    %3231 = vadd.xlane.f32.xlu0 %v3208
    %v3232 = vpop.xlane.xlu0 %3231
    %3233 = vadd.xlane.f32.xlu0 %v3209
    %v3234 = vpop.xlane.xlu0 %3233
    %3235 = vadd.xlane.f32.xlu0 %v3210
    %v3236 = vpop.xlane.xlu0 %3235
    %3237 = vadd.xlane.f32.xlu0 %v3211
    %v3238 = vpop.xlane.xlu0 %3237
    %3239 = vadd.xlane.f32.xlu0 %v3212
    %v3240 = vpop.xlane.xlu0 %3239
    %3241 = vadd.xlane.f32.xlu0 %v3213
    %v3242 = vpop.xlane.xlu0 %3241
    %3243 = vadd.xlane.f32.xlu0 %v3214
    %v3244 = vpop.xlane.xlu0 %3243
    %3245 = vadd.xlane.f32.xlu0 %v3215
    %v3246 = vpop.xlane.xlu0 %3245
    %3247 = vadd.xlane.f32.xlu0 %v3216
    %v3248 = vpop.xlane.xlu0 %3247
    %3249 = vadd.xlane.f32.xlu0 %v3217
    %v3250 = vpop.xlane.xlu0 %3249
    %3251 = vadd.xlane.f32.xlu0 %v3218
    %v3252 = vpop.xlane.xlu0 %3251
    %3253 = vadd.xlane.f32.xlu0 %v3219
    %v3254 = vpop.xlane.xlu0 %3253
    %3255 = vadd.xlane.f32.xlu0 %v3220
    %v3256 = vpop.xlane.xlu0 %3255
    %3257 = vadd.xlane.f32.xlu0 %v3221
    %v3258 = vpop.xlane.xlu0 %3257
    %3259 = vadd.xlane.f32.xlu0 %v3222
    %v3260 = vpop.xlane.xlu0 %3259
    %3261 = vadd.xlane.f32.xlu0 %v3223
    %v3262 = vpop.xlane.xlu0 %3261
    %3263 = vadd.xlane.f32.xlu0 %v3224
    %v3264 = vpop.xlane.xlu0 %3263
    %v3265 = vmul.f32 %v3226, 0.0125
    %v3266 = vmul.f32 %v3228, 0.0125
    %v3267 = vmul.f32 %v3230, 0.0125
    %v3268 = vmul.f32 %v3232, 0.0125
    %v3269 = vmul.f32 %v3234, 0.0125
    %v3270 = vmul.f32 %v3236, 0.0125
    %v3271 = vmul.f32 %v3238, 0.0125
    %v3272 = vmul.f32 %v3240, 0.0125
    %v3273 = vmul.f32 %v3242, 0.0125
    %v3274 = vmul.f32 %v3244, 0.0125
    %v3275 = vmul.f32 %v3246, 0.0125
    %v3276 = vmul.f32 %v3248, 0.0125
    %v3277 = vmul.f32 %v3250, 0.0125
    %v3278 = vmul.f32 %v3252, 0.0125
    %v3279 = vmul.f32 %v3254, 0.0125
    %v3280 = vmul.f32 %v3256, 0.0125
    %v3281 = vmul.f32 %v3258, 0.0125
    %v3282 = vmul.f32 %v3260, 0.0125
    %v3283 = vmul.f32 %v3262, 0.0125
    %v3284 = vmul.f32 %v3264, 0.0125
    %v3285 = vmul.f32 %v3265, %v3265
    %v3286 = vmul.f32 %v3266, %v3266
    %v3287 = vmul.f32 %v3267, %v3267
    %v3288 = vmul.f32 %v3268, %v3268
    %v3289 = vmul.f32 %v3269, %v3269
    %v3290 = vmul.f32 %v3270, %v3270
    %v3291 = vmul.f32 %v3271, %v3271
    %v3292 = vmul.f32 %v3272, %v3272
    %v3293 = vmul.f32 %v3273, %v3273
    %v3294 = vmul.f32 %v3274, %v3274
    %v3295 = vsub.f32 %v3275, %v3285
    %v3296 = vsub.f32 %v3276, %v3286
    %v3297 = vsub.f32 %v3277, %v3287
    %v3298 = vsub.f32 %v3278, %v3288
    %v3299 = vsub.f32 %v3279, %v3289
    %v3300 = vsub.f32 %v3280, %v3290
    %v3301 = vsub.f32 %v3281, %v3291
    %v3302 = vsub.f32 %v3282, %v3292
    %v3303 = vsub.f32 %v3283, %v3293
    %v3304 = vsub.f32 %v3284, %v3294
    %v3305 = vmax.f32 %v3295, 0.0
    %v3306 = vmax.f32 %v3296, 0.0
    %v3307 = vmax.f32 %v3297, 0.0
    %v3308 = vmax.f32 %v3298, 0.0
    %v3309 = vmax.f32 %v3299, 0.0
    %v3310 = vmax.f32 %v3300, 0.0
    %v3311 = vmax.f32 %v3301, 0.0
    %v3312 = vmax.f32 %v3302, 0.0
    %v3313 = vmax.f32 %v3303, 0.0
    %v3314 = vmax.f32 %v3304, 0.0
    %v3315 = vsub.f32 %v3205, %v3265
    %v3316 = vsub.f32 %v3206, %v3266
    %v3317 = vsub.f32 %v3207, %v3267
    %v3318 = vsub.f32 %v3208, %v3268
    %v3319 = vsub.f32 %v3209, %v3269
    %v3320 = vsub.f32 %v3210, %v3270
    %v3321 = vsub.f32 %v3211, %v3271
    %v3322 = vsub.f32 %v3212, %v3272
    %v3323 = vsub.f32 %v3213, %v3273
    %v3324 = vsub.f32 %v3214, %v3274
    %v3325 = vadd.f32 %v3305, 1e-05
    %v3326 = vadd.f32 %v3306, 1e-05
    %v3327 = vadd.f32 %v3307, 1e-05
    %v3328 = vadd.f32 %v3308, 1e-05
    %v3329 = vadd.f32 %v3309, 1e-05
    %v3330 = vadd.f32 %v3310, 1e-05
    %v3331 = vadd.f32 %v3311, 1e-05
    %v3332 = vadd.f32 %v3312, 1e-05
    %v3333 = vadd.f32 %v3313, 1e-05
    %v3334 = vadd.f32 %v3314, 1e-05
    %v3335 = vrsqrt.pop %v3325
    %v3336 = vmul.f32 %v3335, %v3325
    %v3337 = vmul.f32 %v3336, %v3335
    %v3338 = vmul.f32 0.5, %v3337
    %v3339 = vsub.f32 1.5, %v3338
    %v3340 = vmul.f32 %v3335, %v3339
    %vm3341 = vweird.f32 %v3325
    %vm3342 = vweird.f32 %v3335
    %vm3343 = vmor %vm3341, %vm3342
    %v3344 = vsel %vm3343, %v3335, %v3340
    %v3345 = vrsqrt.pop %v3326
    %v3346 = vmul.f32 %v3345, %v3326
    %v3347 = vmul.f32 %v3346, %v3345
    %v3348 = vmul.f32 0.5, %v3347
    %v3349 = vsub.f32 1.5, %v3348
    %v3350 = vmul.f32 %v3345, %v3349
    %vm3351 = vweird.f32 %v3326
    %vm3352 = vweird.f32 %v3345
    %vm3353 = vmor %vm3351, %vm3352
    %v3354 = vsel %vm3353, %v3345, %v3350
    %v3355 = vrsqrt.pop %v3327
    %v3356 = vmul.f32 %v3355, %v3327
    %v3357 = vmul.f32 %v3356, %v3355
    %v3358 = vmul.f32 0.5, %v3357
    %v3359 = vsub.f32 1.5, %v3358
    %v3360 = vmul.f32 %v3355, %v3359
    %vm3361 = vweird.f32 %v3327
    %vm3362 = vweird.f32 %v3355
    %vm3363 = vmor %vm3361, %vm3362
    %v3364 = vsel %vm3363, %v3355, %v3360
    %v3365 = vrsqrt.pop %v3328
    %v3366 = vmul.f32 %v3365, %v3328
    %v3367 = vmul.f32 %v3366, %v3365
    %v3368 = vmul.f32 0.5, %v3367
    %v3369 = vsub.f32 1.5, %v3368
    %v3370 = vmul.f32 %v3365, %v3369
    %vm3371 = vweird.f32 %v3328
    %vm3372 = vweird.f32 %v3365
    %vm3373 = vmor %vm3371, %vm3372
    %v3374 = vsel %vm3373, %v3365, %v3370
    %v3375 = vrsqrt.pop %v3329
    %v3376 = vmul.f32 %v3375, %v3329
    %v3377 = vmul.f32 %v3376, %v3375
    %v3378 = vmul.f32 0.5, %v3377
    %v3379 = vsub.f32 1.5, %v3378
    %v3380 = vmul.f32 %v3375, %v3379
    %vm3381 = vweird.f32 %v3329
    %vm3382 = vweird.f32 %v3375
    %vm3383 = vmor %vm3381, %vm3382
    %v3384 = vsel %vm3383, %v3375, %v3380
    %v3385 = vrsqrt.pop %v3330
    %v3386 = vmul.f32 %v3385, %v3330
    %v3387 = vmul.f32 %v3386, %v3385
    %v3388 = vmul.f32 0.5, %v3387
    %v3389 = vsub.f32 1.5, %v3388
    %v3390 = vmul.f32 %v3385, %v3389
    %vm3391 = vweird.f32 %v3330
    %vm3392 = vweird.f32 %v3385
    %vm3393 = vmor %vm3391, %vm3392
    %v3394 = vsel %vm3393, %v3385, %v3390
    %v3395 = vrsqrt.pop %v3331
    %v3396 = vmul.f32 %v3395, %v3331
    %v3397 = vmul.f32 %v3396, %v3395
    %v3398 = vmul.f32 0.5, %v3397
    %v3399 = vsub.f32 1.5, %v3398
    %v3400 = vmul.f32 %v3395, %v3399
    %vm3401 = vweird.f32 %v3331
    %vm3402 = vweird.f32 %v3395
    %vm3403 = vmor %vm3401, %vm3402
    %v3404 = vsel %vm3403, %v3395, %v3400
    %v3405 = vrsqrt.pop %v3332
    %v3406 = vmul.f32 %v3405, %v3332
    %v3407 = vmul.f32 %v3406, %v3405
    %v3408 = vmul.f32 0.5, %v3407
    %v3409 = vsub.f32 1.5, %v3408
    %v3410 = vmul.f32 %v3405, %v3409
    %vm3411 = vweird.f32 %v3332
    %vm3412 = vweird.f32 %v3405
    %vm3413 = vmor %vm3411, %vm3412
    %v3414 = vsel %vm3413, %v3405, %v3410
    %v3415 = vrsqrt.pop %v3333
    %v3416 = vmul.f32 %v3415, %v3333
    %v3417 = vmul.f32 %v3416, %v3415
    %v3418 = vmul.f32 0.5, %v3417
    %v3419 = vsub.f32 1.5, %v3418
    %v3420 = vmul.f32 %v3415, %v3419
    %vm3421 = vweird.f32 %v3333
    %vm3422 = vweird.f32 %v3415
    %vm3423 = vmor %vm3421, %vm3422
    %v3424 = vsel %vm3423, %v3415, %v3420
    %v3425 = vrsqrt.pop %v3334
    %v3426 = vmul.f32 %v3425, %v3334
    %v3427 = vmul.f32 %v3426, %v3425
    %v3428 = vmul.f32 0.5, %v3427
    %v3429 = vsub.f32 1.5, %v3428
    %v3430 = vmul.f32 %v3425, %v3429
    %vm3431 = vweird.f32 %v3334
    %vm3432 = vweird.f32 %v3425
    %vm3433 = vmor %vm3431, %vm3432
    %v3434 = vsel %vm3433, %v3425, %v3430
    %v3435 = vmul.f32 %v3315, %v3344
    %v3436 = vmul.f32 %v3316, %v3354
    %v3437 = vmul.f32 %v3317, %v3364
    %v3438 = vmul.f32 %v3318, %v3374
    %v3439 = vmul.f32 %v3319, %v3384
    %v3440 = vmul.f32 %v3320, %v3394
    %v3441 = vmul.f32 %v3321, %v3404
    %v3442 = vmul.f32 %v3322, %v3414
    %v3443 = vmul.f32 %v3323, %v3424
    %v3444 = vmul.f32 %v3324, %v3434
    %3445 = vrot.lane.b32.xlu0 %v3435, 2
    %v3446 = vpop.permute.xlu0 %3445
    %3447 = vrot.lane.b32.xlu0 %v3436, 2
    %v3448 = vpop.permute.xlu0 %3447
    %3449 = vrot.lane.b32.xlu0 %v3437, 2
    %v3450 = vpop.permute.xlu0 %3449
    %3451 = vrot.lane.b32.xlu0 %v3438, 2
    %v3452 = vpop.permute.xlu0 %3451
    %3453 = vrot.lane.b32.xlu0 %v3439, 2
    %v3454 = vpop.permute.xlu0 %3453
    %3455 = vrot.lane.b32.xlu0 %v3440, 2
    %v3456 = vpop.permute.xlu0 %3455
    %3457 = vrot.lane.b32.xlu0 %v3441, 2
    %v3458 = vpop.permute.xlu0 %3457
    %3459 = vrot.lane.b32.xlu0 %v3442, 2
    %v3460 = vpop.permute.xlu0 %3459
    %3461 = vrot.lane.b32.xlu0 %v3443, 2
    %v3462 = vpop.permute.xlu0 %3461
    %3463 = vrot.lane.b32.xlu0 %v3444, 2
    %v3464 = vpop.permute.xlu0 %3463
    %v3465 = vld [vmem:[%s5] sm:$0xff]
    %v3466 = vld [vmem:[%s5 + $0x8] sm:$0xff]
    %v3467 = vld [vmem:[%s5 + $0x10] sm:$0xff]
    %v3468 = vld [vmem:[%s5 + $0x18] sm:$0xff]
    %v3469 = vld [vmem:[%s5 + $0x20] sm:$0xff]
    %v3470 = vld [vmem:[%s5 + $0x28] sm:$0xff]
    %v3471 = vld [vmem:[%s5 + $0x30] sm:$0xff]
    %v3472 = vld [vmem:[%s5 + $0x38] sm:$0xff]
    %v3473 = vld [vmem:[%s5 + $0x40] sm:$0xff]
    %v3474 = vld [vmem:[%s5 + $0x48] sm:$0xff]
    %v3475 = vmul.f32 %v3446, %v3465
    %v3476 = vmul.f32 %v3448, %v3466
    %v3477 = vmul.f32 %v3450, %v3467
    %v3478 = vmul.f32 %v3452, %v3468
    %v3479 = vmul.f32 %v3454, %v3469
    %v3480 = vmul.f32 %v3456, %v3470
    %v3481 = vmul.f32 %v3458, %v3471
    %v3482 = vmul.f32 %v3460, %v3472
    %v3483 = vmul.f32 %v3462, %v3473
    %v3484 = vmul.f32 %v3464, %v3474
    %3485 = vst [vmem:[#allocation2] sm:$0xff] %v3475
    %3486 = vst [vmem:[#allocation2 + $0x8] sm:$0xff] %v3476
    %3487 = vst [vmem:[#allocation2 + $0x10] sm:$0xff] %v3477
    %3488 = vst [vmem:[#allocation2 + $0x18] sm:$0xff] %v3478
    %3489 = vst [vmem:[#allocation2 + $0x20] sm:$0xff] %v3479
    %3490 = vst [vmem:[#allocation2 + $0x28] sm:$0xff] %v3480
    %3491 = vst [vmem:[#allocation2 + $0x30] sm:$0xff] %v3481
    %3492 = vst [vmem:[#allocation2 + $0x38] sm:$0xff] %v3482
    %3493 = vst [vmem:[#allocation2 + $0x40] sm:$0xff] %v3483
    %3494 = vst [vmem:[#allocation2 + $0x48] sm:$0xff] %v3484
    %3495 = vrot.lane.b32.xlu0 %v3435, 1
    %v3496 = vpop.permute.xlu0 %3495
    %3497 = vrot.lane.b32.xlu0 %v3436, 1
    %v3498 = vpop.permute.xlu0 %3497
    %3499 = vrot.lane.b32.xlu0 %v3437, 1
    %v3500 = vpop.permute.xlu0 %3499
    %3501 = vrot.lane.b32.xlu0 %v3438, 1
    %v3502 = vpop.permute.xlu0 %3501
    %3503 = vrot.lane.b32.xlu0 %v3439, 1
    %v3504 = vpop.permute.xlu0 %3503
    %3505 = vrot.lane.b32.xlu0 %v3440, 1
    %v3506 = vpop.permute.xlu0 %3505
    %3507 = vrot.lane.b32.xlu0 %v3441, 1
    %v3508 = vpop.permute.xlu0 %3507
    %3509 = vrot.lane.b32.xlu0 %v3442, 1
    %v3510 = vpop.permute.xlu0 %3509
    %3511 = vrot.lane.b32.xlu0 %v3443, 1
    %v3512 = vpop.permute.xlu0 %3511
    %3513 = vrot.lane.b32.xlu0 %v3444, 1
    %v3514 = vpop.permute.xlu0 %3513
    %v3515 = vld [vmem:[%s5 + $0x50] sm:$0xff]
    %v3516 = vld [vmem:[%s5 + $0x58] sm:$0xff]
    %v3517 = vld [vmem:[%s5 + $0x60] sm:$0xff]
    %v3518 = vld [vmem:[%s5 + $0x68] sm:$0xff]
    %v3519 = vld [vmem:[%s5 + $0x70] sm:$0xff]
    %v3520 = vld [vmem:[%s5 + $0x78] sm:$0xff]
    %v3521 = vld [vmem:[%s5 + $0x80] sm:$0xff]
    %v3522 = vld [vmem:[%s5 + $0x88] sm:$0xff]
    %v3523 = vld [vmem:[%s5 + $0x90] sm:$0xff]
    %v3524 = vld [vmem:[%s5 + $0x98] sm:$0xff]
    %v3525 = vmul.f32 %v3496, %v3515
    %v3526 = vmul.f32 %v3498, %v3516
    %v3527 = vmul.f32 %v3500, %v3517
    %v3528 = vmul.f32 %v3502, %v3518
    %v3529 = vmul.f32 %v3504, %v3519
    %v3530 = vmul.f32 %v3506, %v3520
    %v3531 = vmul.f32 %v3508, %v3521
    %v3532 = vmul.f32 %v3510, %v3522
    %v3533 = vmul.f32 %v3512, %v3523
    %v3534 = vmul.f32 %v3514, %v3524
    %3535 = vst [vmem:[#allocation2 + $0x50] sm:$0xff] %v3525
    %3536 = vst [vmem:[#allocation2 + $0x58] sm:$0xff] %v3526
    %3537 = vst [vmem:[#allocation2 + $0x60] sm:$0xff] %v3527
    %3538 = vst [vmem:[#allocation2 + $0x68] sm:$0xff] %v3528
    %3539 = vst [vmem:[#allocation2 + $0x70] sm:$0xff] %v3529
    %3540 = vst [vmem:[#allocation2 + $0x78] sm:$0xff] %v3530
    %3541 = vst [vmem:[#allocation2 + $0x80] sm:$0xff] %v3531
    %3542 = vst [vmem:[#allocation2 + $0x88] sm:$0xff] %v3532
    %3543 = vst [vmem:[#allocation2 + $0x90] sm:$0xff] %v3533
    %3544 = vst [vmem:[#allocation2 + $0x98] sm:$0xff] %v3534
    %v3545 = vld [vmem:[%s5 + $0xa0] sm:$0xff]
    %v3546 = vld [vmem:[%s5 + $0xa8] sm:$0xff]
    %v3547 = vld [vmem:[%s5 + $0xb0] sm:$0xff]
    %v3548 = vld [vmem:[%s5 + $0xb8] sm:$0xff]
    %v3549 = vld [vmem:[%s5 + $0xc0] sm:$0xff]
    %v3550 = vld [vmem:[%s5 + $0xc8] sm:$0xff]
    %v3551 = vld [vmem:[%s5 + $0xd0] sm:$0xff]
    %v3552 = vld [vmem:[%s5 + $0xd8] sm:$0xff]
    %v3553 = vld [vmem:[%s5 + $0xe0] sm:$0xff]
    %v3554 = vld [vmem:[%s5 + $0xe8] sm:$0xff]
    %v3555 = vmul.f32 %v3435, %v3545
    %v3556 = vmul.f32 %v3436, %v3546
    %v3557 = vmul.f32 %v3437, %v3547
    %v3558 = vmul.f32 %v3438, %v3548
    %v3559 = vmul.f32 %v3439, %v3549
    %v3560 = vmul.f32 %v3440, %v3550
    %v3561 = vmul.f32 %v3441, %v3551
    %v3562 = vmul.f32 %v3442, %v3552
    %v3563 = vmul.f32 %v3443, %v3553
    %v3564 = vmul.f32 %v3444, %v3554
    %3565 = vst [vmem:[#allocation2 + $0xa0] sm:$0xff] %v3555
    %3566 = vst [vmem:[#allocation2 + $0xa8] sm:$0xff] %v3556
    %3567 = vst [vmem:[#allocation2 + $0xb0] sm:$0xff] %v3557
    %3568 = vst [vmem:[#allocation2 + $0xb8] sm:$0xff] %v3558
    %3569 = vst [vmem:[#allocation2 + $0xc0] sm:$0xff] %v3559
    %3570 = vst [vmem:[#allocation2 + $0xc8] sm:$0xff] %v3560
    %3571 = vst [vmem:[#allocation2 + $0xd0] sm:$0xff] %v3561
    %3572 = vst [vmem:[#allocation2 + $0xd8] sm:$0xff] %v3562
    %3573 = vst [vmem:[#allocation2 + $0xe0] sm:$0xff] %v3563
    %3574 = vst [vmem:[#allocation2 + $0xe8] sm:$0xff] %v3564
    %3575 = vrot.lane.b32.xlu0 %v3435, 127
    %v3576 = vpop.permute.xlu0 %3575
    %3577 = vrot.lane.b32.xlu0 %v3436, 127
    %v3578 = vpop.permute.xlu0 %3577
    %3579 = vrot.lane.b32.xlu0 %v3437, 127
    %v3580 = vpop.permute.xlu0 %3579
    %3581 = vrot.lane.b32.xlu0 %v3438, 127
    %v3582 = vpop.permute.xlu0 %3581
    %3583 = vrot.lane.b32.xlu0 %v3439, 127
    %v3584 = vpop.permute.xlu0 %3583
    %3585 = vrot.lane.b32.xlu0 %v3440, 127
    %v3586 = vpop.permute.xlu0 %3585
    %3587 = vrot.lane.b32.xlu0 %v3441, 127
    %v3588 = vpop.permute.xlu0 %3587
    %3589 = vrot.lane.b32.xlu0 %v3442, 127
    %v3590 = vpop.permute.xlu0 %3589
    %3591 = vrot.lane.b32.xlu0 %v3443, 127
    %v3592 = vpop.permute.xlu0 %3591
    %3593 = vrot.lane.b32.xlu0 %v3444, 127
    %v3594 = vpop.permute.xlu0 %3593
    %v3595 = vld [vmem:[%s5 + $0xf0] sm:$0xff]
    %v3596 = vld [vmem:[%s5 + $0xf8] sm:$0xff]
    %v3597 = vld [vmem:[%s5 + $0x100] sm:$0xff]
    %v3598 = vld [vmem:[%s5 + $0x108] sm:$0xff]
    %v3599 = vld [vmem:[%s5 + $0x110] sm:$0xff]
    %v3600 = vld [vmem:[%s5 + $0x118] sm:$0xff]
    %v3601 = vld [vmem:[%s5 + $0x120] sm:$0xff]
    %v3602 = vld [vmem:[%s5 + $0x128] sm:$0xff]
    %v3603 = vld [vmem:[%s5 + $0x130] sm:$0xff]
    %v3604 = vld [vmem:[%s5 + $0x138] sm:$0xff]
    %v3605 = vmul.f32 %v3576, %v3595
    %v3606 = vmul.f32 %v3578, %v3596
    %v3607 = vmul.f32 %v3580, %v3597
    %v3608 = vmul.f32 %v3582, %v3598
    %v3609 = vmul.f32 %v3584, %v3599
    %v3610 = vmul.f32 %v3586, %v3600
    %v3611 = vmul.f32 %v3588, %v3601
    %v3612 = vmul.f32 %v3590, %v3602
    %v3613 = vmul.f32 %v3592, %v3603
    %v3614 = vmul.f32 %v3594, %v3604
    %3615 = vst [vmem:[#allocation2 + $0xf0] sm:$0xff] %v3605
    %3616 = vst [vmem:[#allocation2 + $0xf8] sm:$0xff] %v3606
    %3617 = vst [vmem:[#allocation2 + $0x100] sm:$0xff] %v3607
    %3618 = vst [vmem:[#allocation2 + $0x108] sm:$0xff] %v3608
    %3619 = vst [vmem:[#allocation2 + $0x110] sm:$0xff] %v3609
    %3620 = vst [vmem:[#allocation2 + $0x118] sm:$0xff] %v3610
    %3621 = vst [vmem:[#allocation2 + $0x120] sm:$0xff] %v3611
    %3622 = vst [vmem:[#allocation2 + $0x128] sm:$0xff] %v3612
    %3623 = vst [vmem:[#allocation2 + $0x130] sm:$0xff] %v3613
    %3624 = vst [vmem:[#allocation2 + $0x138] sm:$0xff] %v3614
    %3625 = vrot.lane.b32.xlu0 %v3435, 126
    %v3626 = vpop.permute.xlu0 %3625
    %3627 = vrot.lane.b32.xlu0 %v3436, 126
    %v3628 = vpop.permute.xlu0 %3627
    %3629 = vrot.lane.b32.xlu0 %v3437, 126
    %v3630 = vpop.permute.xlu0 %3629
    %3631 = vrot.lane.b32.xlu0 %v3438, 126
    %v3632 = vpop.permute.xlu0 %3631
    %3633 = vrot.lane.b32.xlu0 %v3439, 126
    %v3634 = vpop.permute.xlu0 %3633
    %3635 = vrot.lane.b32.xlu0 %v3440, 126
    %v3636 = vpop.permute.xlu0 %3635
    %3637 = vrot.lane.b32.xlu0 %v3441, 126
    %v3638 = vpop.permute.xlu0 %3637
    %3639 = vrot.lane.b32.xlu0 %v3442, 126
    %v3640 = vpop.permute.xlu0 %3639
    %3641 = vrot.lane.b32.xlu0 %v3443, 126
    %v3642 = vpop.permute.xlu0 %3641
    %3643 = vrot.lane.b32.xlu0 %v3444, 126
    %v3644 = vpop.permute.xlu0 %3643
    %v3645 = vld [vmem:[%s5 + $0x140] sm:$0xff]
    %v3646 = vld [vmem:[%s5 + $0x148] sm:$0xff]
    %v3647 = vld [vmem:[%s5 + $0x150] sm:$0xff]
    %v3648 = vld [vmem:[%s5 + $0x158] sm:$0xff]
    %v3649 = vld [vmem:[%s5 + $0x160] sm:$0xff]
    %v3650 = vld [vmem:[%s5 + $0x168] sm:$0xff]
    %v3651 = vld [vmem:[%s5 + $0x170] sm:$0xff]
    %v3652 = vld [vmem:[%s5 + $0x178] sm:$0xff]
    %v3653 = vld [vmem:[%s5 + $0x180] sm:$0xff]
    %v3654 = vld [vmem:[%s5 + $0x188] sm:$0xff]
    %v3655 = vmul.f32 %v3626, %v3645
    %v3656 = vmul.f32 %v3628, %v3646
    %v3657 = vmul.f32 %v3630, %v3647
    %v3658 = vmul.f32 %v3632, %v3648
    %v3659 = vmul.f32 %v3634, %v3649
    %v3660 = vmul.f32 %v3636, %v3650
    %v3661 = vmul.f32 %v3638, %v3651
    %v3662 = vmul.f32 %v3640, %v3652
    %v3663 = vmul.f32 %v3642, %v3653
    %v3664 = vmul.f32 %v3644, %v3654
    %3665 = vst [vmem:[#allocation2 + $0x140] sm:$0xff] %v3655
    %3666 = vst [vmem:[#allocation2 + $0x148] sm:$0xff] %v3656
    %3667 = vst [vmem:[#allocation2 + $0x150] sm:$0xff] %v3657
    %3668 = vst [vmem:[#allocation2 + $0x158] sm:$0xff] %v3658
    %3669 = vst [vmem:[#allocation2 + $0x160] sm:$0xff] %v3659
    %3670 = vst [vmem:[#allocation2 + $0x168] sm:$0xff] %v3660
    %3671 = vst [vmem:[#allocation2 + $0x170] sm:$0xff] %v3661
    %3672 = vst [vmem:[#allocation2 + $0x178] sm:$0xff] %v3662
    %3673 = vst [vmem:[#allocation2 + $0x180] sm:$0xff] %v3663
    %3674 = vst [vmem:[#allocation2 + $0x188] sm:$0xff] %v3664
    %s3675 = scalar_lea.vmem [#allocation3], 1280
    %v3676 = vld [vmem:[%s3675] sm:$0xff]
    %v3677 = vld [vmem:[%s3675 + $0x8] sm:$0xff]
    %v3678 = vld [vmem:[%s3675 + $0x10] sm:$0xff]
    %v3679 = vld [vmem:[%s3675 + $0x18] sm:$0xff]
    %v3680 = vld [vmem:[%s3675 + $0x20] sm:$0xff]
    %v3681 = vld [vmem:[%s3675 + $0x28] sm:$0xff]
    %v3682 = vld [vmem:[%s3675 + $0x30] sm:$0xff]
    %v3683 = vld [vmem:[%s3675 + $0x38] sm:$0xff]
    %v3684 = vld [vmem:[%s3675 + $0x40] sm:$0xff]
    %v3685 = vld [vmem:[%s3675 + $0x48] sm:$0xff]
    %v3686 = vld [vmem:[%s3675 + $0x50] sm:$0xff]
    %v3687 = vld [vmem:[%s3675 + $0x58] sm:$0xff]
    %v3688 = vld [vmem:[%s3675 + $0x60] sm:$0xff]
    %v3689 = vld [vmem:[%s3675 + $0x68] sm:$0xff]
    %v3690 = vld [vmem:[%s3675 + $0x70] sm:$0xff]
    %v3691 = vld [vmem:[%s3675 + $0x78] sm:$0xff]
    %v3692 = vld [vmem:[%s3675 + $0x80] sm:$0xff]
    %v3693 = vld [vmem:[%s3675 + $0x88] sm:$0xff]
    %v3694 = vld [vmem:[%s3675 + $0x90] sm:$0xff]
    %v3695 = vld [vmem:[%s3675 + $0x98] sm:$0xff]
    %v3696 = vld [vmem:[%s3675 + $0xa0] sm:$0xff]
    %v3697 = vld [vmem:[%s3675 + $0xa8] sm:$0xff]
    %v3698 = vld [vmem:[%s3675 + $0xb0] sm:$0xff]
    %v3699 = vld [vmem:[%s3675 + $0xb8] sm:$0xff]
    %v3700 = vld [vmem:[%s3675 + $0xc0] sm:$0xff]
    %v3701 = vld [vmem:[%s3675 + $0xc8] sm:$0xff]
    %v3702 = vld [vmem:[%s3675 + $0xd0] sm:$0xff]
    %v3703 = vld [vmem:[%s3675 + $0xd8] sm:$0xff]
    %v3704 = vld [vmem:[%s3675 + $0xe0] sm:$0xff]
    %v3705 = vld [vmem:[%s3675 + $0xe8] sm:$0xff]
    %v3706 = vld [vmem:[%s3675 + $0xf0] sm:$0xff]
    %v3707 = vld [vmem:[%s3675 + $0xf8] sm:$0xff]
    %v3708 = vld [vmem:[%s3675 + $0x100] sm:$0xff]
    %v3709 = vld [vmem:[%s3675 + $0x108] sm:$0xff]
    %v3710 = vld [vmem:[%s3675 + $0x110] sm:$0xff]
    %v3711 = vld [vmem:[%s3675 + $0x118] sm:$0xff]
    %v3712 = vld [vmem:[%s3675 + $0x120] sm:$0xff]
    %v3713 = vld [vmem:[%s3675 + $0x128] sm:$0xff]
    %v3714 = vld [vmem:[%s3675 + $0x130] sm:$0xff]
    %v3715 = vld [vmem:[%s3675 + $0x138] sm:$0xff]
    %v3716 = vld [vmem:[#allocation2] sm:$0xff]
    %v3717 = vld [vmem:[#allocation2 + $0x8] sm:$0xff]
    %v3718 = vld [vmem:[#allocation2 + $0x10] sm:$0xff]
    %v3719 = vld [vmem:[#allocation2 + $0x18] sm:$0xff]
    %v3720 = vld [vmem:[#allocation2 + $0x20] sm:$0xff]
    %v3721 = vld [vmem:[#allocation2 + $0x28] sm:$0xff]
    %v3722 = vld [vmem:[#allocation2 + $0x30] sm:$0xff]
    %v3723 = vld [vmem:[#allocation2 + $0x38] sm:$0xff]
    %v3724 = vld [vmem:[#allocation2 + $0x40] sm:$0xff]
    %v3725 = vld [vmem:[#allocation2 + $0x48] sm:$0xff]
    %v3726 = vld [vmem:[#allocation2 + $0x50] sm:$0xff]
    %v3727 = vld [vmem:[#allocation2 + $0x58] sm:$0xff]
    %v3728 = vld [vmem:[#allocation2 + $0x60] sm:$0xff]
    %v3729 = vld [vmem:[#allocation2 + $0x68] sm:$0xff]
    %v3730 = vld [vmem:[#allocation2 + $0x70] sm:$0xff]
    %v3731 = vld [vmem:[#allocation2 + $0x78] sm:$0xff]
    %v3732 = vld [vmem:[#allocation2 + $0x80] sm:$0xff]
    %v3733 = vld [vmem:[#allocation2 + $0x88] sm:$0xff]
    %v3734 = vld [vmem:[#allocation2 + $0x90] sm:$0xff]
    %v3735 = vld [vmem:[#allocation2 + $0x98] sm:$0xff]
    %v3736 = vld [vmem:[#allocation2 + $0xa0] sm:$0xff]
    %v3737 = vld [vmem:[#allocation2 + $0xa8] sm:$0xff]
    %v3738 = vld [vmem:[#allocation2 + $0xb0] sm:$0xff]
    %v3739 = vld [vmem:[#allocation2 + $0xb8] sm:$0xff]
    %v3740 = vld [vmem:[#allocation2 + $0xc0] sm:$0xff]
    %v3741 = vld [vmem:[#allocation2 + $0xc8] sm:$0xff]
    %v3742 = vld [vmem:[#allocation2 + $0xd0] sm:$0xff]
    %v3743 = vld [vmem:[#allocation2 + $0xd8] sm:$0xff]
    %v3744 = vld [vmem:[#allocation2 + $0xe0] sm:$0xff]
    %v3745 = vld [vmem:[#allocation2 + $0xe8] sm:$0xff]
    %v3746 = vld [vmem:[#allocation2 + $0xf0] sm:$0xff]
    %v3747 = vld [vmem:[#allocation2 + $0xf8] sm:$0xff]
    %v3748 = vld [vmem:[#allocation2 + $0x100] sm:$0xff]
    %v3749 = vld [vmem:[#allocation2 + $0x108] sm:$0xff]
    %v3750 = vld [vmem:[#allocation2 + $0x110] sm:$0xff]
    %v3751 = vld [vmem:[#allocation2 + $0x118] sm:$0xff]
    %v3752 = vld [vmem:[#allocation2 + $0x120] sm:$0xff]
    %v3753 = vld [vmem:[#allocation2 + $0x128] sm:$0xff]
    %v3754 = vld [vmem:[#allocation2 + $0x130] sm:$0xff]
    %v3755 = vld [vmem:[#allocation2 + $0x138] sm:$0xff]
    %v3756 = vld [vmem:[#allocation2 + $0x140] sm:$0xff]
    %v3757 = vld [vmem:[#allocation2 + $0x148] sm:$0xff]
    %v3758 = vld [vmem:[#allocation2 + $0x150] sm:$0xff]
    %v3759 = vld [vmem:[#allocation2 + $0x158] sm:$0xff]
    %v3760 = vld [vmem:[#allocation2 + $0x160] sm:$0xff]
    %v3761 = vld [vmem:[#allocation2 + $0x168] sm:$0xff]
    %v3762 = vld [vmem:[#allocation2 + $0x170] sm:$0xff]
    %v3763 = vld [vmem:[#allocation2 + $0x178] sm:$0xff]
    %v3764 = vld [vmem:[#allocation2 + $0x180] sm:$0xff]
    %v3765 = vld [vmem:[#allocation2 + $0x188] sm:$0xff]
    %v3767 = vsel %vm609, %v3679, 0
    %v3770 = vsel %vm609, %v3683, 0
    %v3773 = vsel %vm609, %v3687, 0
    %v3776 = vsel %vm609, %v3691, 0
    %v3779 = vsel %vm609, %v3695, 0
    %v3782 = vsel %vm609, %v3699, 0
    %v3785 = vsel %vm609, %v3703, 0
    %v3788 = vsel %vm609, %v3707, 0
    %v3791 = vsel %vm609, %v3711, 0
    %v3794 = vsel %vm609, %v3715, 0
    %3796 = vmatpush.msra.mxu0 %v3731
    %3797 = vmatpush.msra.mxu0 %v3730
    %3798 = vmatpush.msra.mxu0 %v3729
    %3799 = vmatpush.msra.mxu0 %v3728
    %3800 = vmatpush.msra.mxu0 %v3727
    %3801 = vmatpush.msra.mxu0 %v3726
    %3802 = vmatpush.msra.mxu0 %v3725
    %3803 = vmatpush.msra.mxu0 %v3724
    %3804 = vmatpush.msra.mxu0 %v3723
    %3805 = vmatpush.msra.mxu0 %v3722
    %3806 = vmatpush.msra.mxu0 %v3721
    %3807 = vmatpush.msra.mxu0 %v3720
    %3808 = vmatpush.msra.mxu0 %v3719
    %3809 = vmatpush.msra.mxu0 %v3718
    %3810 = vmatpush.msra.mxu0 %v3717
    %3811 = vmatpush.msra.mxu0 %v3716
    %3812 = vmatmul.f32.gmra.mxu0 %v3676
    %v3813 = vpop.f32.mrf.mxu0
    %v3814 = vadd.f32 0.0, %v3813
    %3815 = vmatmul.f32.gmra.mxu0 %v3680
    %v3816 = vpop.f32.mrf.mxu0
    %v3817 = vadd.f32 0.0, %v3816
    %3818 = vmatmul.f32.gmra.mxu0 %v3684
    %v3819 = vpop.f32.mrf.mxu0
    %v3820 = vadd.f32 0.0, %v3819
    %3821 = vmatmul.f32.gmra.mxu0 %v3688
    %v3822 = vpop.f32.mrf.mxu0
    %v3823 = vadd.f32 0.0, %v3822
    %3824 = vmatmul.f32.gmra.mxu0 %v3692
    %v3825 = vpop.f32.mrf.mxu0
    %v3826 = vadd.f32 0.0, %v3825
    %3827 = vmatmul.f32.gmra.mxu0 %v3696
    %v3828 = vpop.f32.mrf.mxu0
    %v3829 = vadd.f32 0.0, %v3828
    %3830 = vmatmul.f32.gmra.mxu0 %v3700
    %v3831 = vpop.f32.mrf.mxu0
    %v3832 = vadd.f32 0.0, %v3831
    %3833 = vmatmul.f32.gmra.mxu0 %v3704
    %v3834 = vpop.f32.mrf.mxu0
    %v3835 = vadd.f32 0.0, %v3834
    %3836 = vmatmul.f32.gmra.mxu0 %v3708
    %v3837 = vpop.f32.mrf.mxu0
    %v3838 = vadd.f32 0.0, %v3837
    %3839 = vmatmul.f32.gmra.mxu0 %v3712
    %v3840 = vpop.f32.mrf.mxu0
    %v3841 = vadd.f32 0.0, %v3840
    %3842 = vdwg.mxu0
    %3843 = vmatpush.msra.mxu0 %v3747
    %3844 = vmatpush.msra.mxu0 %v3746
    %3845 = vmatpush.msra.mxu0 %v3745
    %3846 = vmatpush.msra.mxu0 %v3744
    %3847 = vmatpush.msra.mxu0 %v3743
    %3848 = vmatpush.msra.mxu0 %v3742
    %3849 = vmatpush.msra.mxu0 %v3741
    %3850 = vmatpush.msra.mxu0 %v3740
    %3851 = vmatpush.msra.mxu0 %v3739
    %3852 = vmatpush.msra.mxu0 %v3738
    %3853 = vmatpush.msra.mxu0 %v3737
    %3854 = vmatpush.msra.mxu0 %v3736
    %3855 = vmatpush.msra.mxu0 %v3735
    %3856 = vmatpush.msra.mxu0 %v3734
    %3857 = vmatpush.msra.mxu0 %v3733
    %3858 = vmatpush.msra.mxu0 %v3732
    %3859 = vmatmul.f32.gmra.mxu0 %v3677
    %v3860 = vpop.f32.mrf.mxu0
    %v3861 = vadd.f32 %v3814, %v3860
    %3862 = vmatmul.f32.gmra.mxu0 %v3681
    %v3863 = vpop.f32.mrf.mxu0
    %v3864 = vadd.f32 %v3817, %v3863
    %3865 = vmatmul.f32.gmra.mxu0 %v3685
    %v3866 = vpop.f32.mrf.mxu0
    %v3867 = vadd.f32 %v3820, %v3866
    %3868 = vmatmul.f32.gmra.mxu0 %v3689
    %v3869 = vpop.f32.mrf.mxu0
    %v3870 = vadd.f32 %v3823, %v3869
    %3871 = vmatmul.f32.gmra.mxu0 %v3693
    %v3872 = vpop.f32.mrf.mxu0
    %v3873 = vadd.f32 %v3826, %v3872
    %3874 = vmatmul.f32.gmra.mxu0 %v3697
    %v3875 = vpop.f32.mrf.mxu0
    %v3876 = vadd.f32 %v3829, %v3875
    %3877 = vmatmul.f32.gmra.mxu0 %v3701
    %v3878 = vpop.f32.mrf.mxu0
    %v3879 = vadd.f32 %v3832, %v3878
    %3880 = vmatmul.f32.gmra.mxu0 %v3705
    %v3881 = vpop.f32.mrf.mxu0
    %v3882 = vadd.f32 %v3835, %v3881
    %3883 = vmatmul.f32.gmra.mxu0 %v3709
    %v3884 = vpop.f32.mrf.mxu0
    %v3885 = vadd.f32 %v3838, %v3884
    %3886 = vmatmul.f32.gmra.mxu0 %v3713
    %v3887 = vpop.f32.mrf.mxu0
    %v3888 = vadd.f32 %v3841, %v3887
    %3889 = vdwg.mxu0
    %3890 = vmatpush.msra.mxu0 %v3763
    %3891 = vmatpush.msra.mxu0 %v3762
    %3892 = vmatpush.msra.mxu0 %v3761
    %3893 = vmatpush.msra.mxu0 %v3760
    %3894 = vmatpush.msra.mxu0 %v3759
    %3895 = vmatpush.msra.mxu0 %v3758
    %3896 = vmatpush.msra.mxu0 %v3757
    %3897 = vmatpush.msra.mxu0 %v3756
    %3898 = vmatpush.msra.mxu0 %v3755
    %3899 = vmatpush.msra.mxu0 %v3754
    %3900 = vmatpush.msra.mxu0 %v3753
    %3901 = vmatpush.msra.mxu0 %v3752
    %3902 = vmatpush.msra.mxu0 %v3751
    %3903 = vmatpush.msra.mxu0 %v3750
    %3904 = vmatpush.msra.mxu0 %v3749
    %3905 = vmatpush.msra.mxu0 %v3748
    %3906 = vmatmul.f32.gmra.mxu0 %v3678
    %v3907 = vpop.f32.mrf.mxu0
    %v3908 = vadd.f32 %v3861, %v3907
    %3909 = vmatmul.f32.gmra.mxu0 %v3682
    %v3910 = vpop.f32.mrf.mxu0
    %v3911 = vadd.f32 %v3864, %v3910
    %3912 = vmatmul.f32.gmra.mxu0 %v3686
    %v3913 = vpop.f32.mrf.mxu0
    %v3914 = vadd.f32 %v3867, %v3913
    %3915 = vmatmul.f32.gmra.mxu0 %v3690
    %v3916 = vpop.f32.mrf.mxu0
    %v3917 = vadd.f32 %v3870, %v3916
    %3918 = vmatmul.f32.gmra.mxu0 %v3694
    %v3919 = vpop.f32.mrf.mxu0
    %v3920 = vadd.f32 %v3873, %v3919
    %3921 = vmatmul.f32.gmra.mxu0 %v3698
    %v3922 = vpop.f32.mrf.mxu0
    %v3923 = vadd.f32 %v3876, %v3922
    %3924 = vmatmul.f32.gmra.mxu0 %v3702
    %v3925 = vpop.f32.mrf.mxu0
    %v3926 = vadd.f32 %v3879, %v3925
    %3927 = vmatmul.f32.gmra.mxu0 %v3706
    %v3928 = vpop.f32.mrf.mxu0
    %v3929 = vadd.f32 %v3882, %v3928
    %3930 = vmatmul.f32.gmra.mxu0 %v3710
    %v3931 = vpop.f32.mrf.mxu0
    %v3932 = vadd.f32 %v3885, %v3931
    %3933 = vmatmul.f32.gmra.mxu0 %v3714
    %v3934 = vpop.f32.mrf.mxu0
    %v3935 = vadd.f32 %v3888, %v3934
    %3936 = vdwg.mxu0
    %3937 = vmatpush.msra.mxu0 0.0
    %3938 = vmatpush.msra.mxu0 0.0
    %3939 = vmatpush.msra.mxu0 0.0
    %3940 = vmatpush.msra.mxu0 0.0
    %3941 = vmatpush.msra.mxu0 0.0
    %3942 = vmatpush.msra.mxu0 0.0
    %3943 = vmatpush.msra.mxu0 0.0
    %3944 = vmatpush.msra.mxu0 0.0
    %3945 = vmatpush.msra.mxu0 0.0
    %3946 = vmatpush.msra.mxu0 0.0
    %3947 = vmatpush.msra.mxu0 0.0
    %3948 = vmatpush.msra.mxu0 0.0
    %3949 = vmatpush.msra.mxu0 0.0
    %3950 = vmatpush.msra.mxu0 0.0
    %3951 = vmatpush.msra.mxu0 %v3765
    %3952 = vmatpush.msra.mxu0 %v3764
    %3953 = vmatmul.f32.gmra.mxu0 %v3767
    %v3954 = vpop.f32.mrf.mxu0
    %v3955 = vadd.f32 %v3908, %v3954
    %3956 = vmatmul.f32.gmra.mxu0 %v3770
    %v3957 = vpop.f32.mrf.mxu0
    %v3958 = vadd.f32 %v3911, %v3957
    %3959 = vmatmul.f32.gmra.mxu0 %v3773
    %v3960 = vpop.f32.mrf.mxu0
    %v3961 = vadd.f32 %v3914, %v3960
    %3962 = vmatmul.f32.gmra.mxu0 %v3776
    %v3963 = vpop.f32.mrf.mxu0
    %v3964 = vadd.f32 %v3917, %v3963
    %3965 = vmatmul.f32.gmra.mxu0 %v3779
    %v3966 = vpop.f32.mrf.mxu0
    %v3967 = vadd.f32 %v3920, %v3966
    %3968 = vmatmul.f32.gmra.mxu0 %v3782
    %v3969 = vpop.f32.mrf.mxu0
    %v3970 = vadd.f32 %v3923, %v3969
    %3971 = vmatmul.f32.gmra.mxu0 %v3785
    %v3972 = vpop.f32.mrf.mxu0
    %v3973 = vadd.f32 %v3926, %v3972
    %3974 = vmatmul.f32.gmra.mxu0 %v3788
    %v3975 = vpop.f32.mrf.mxu0
    %v3976 = vadd.f32 %v3929, %v3975
    %3977 = vmatmul.f32.gmra.mxu0 %v3791
    %v3978 = vpop.f32.mrf.mxu0
    %v3979 = vadd.f32 %v3932, %v3978
    %3980 = vmatmul.f32.gmra.mxu0 %v3794
    %v3981 = vpop.f32.mrf.mxu0
    %v3982 = vadd.f32 %v3935, %v3981
    %3983 = vdwg.mxu0
    %v3984 = vadd.f32 %v3195, %v3955
    %v3985 = vadd.f32 %v3196, %v3958
    %v3986 = vadd.f32 %v3197, %v3961
    %v3987 = vadd.f32 %v3198, %v3964
    %v3988 = vadd.f32 %v3199, %v3967
    %v3989 = vadd.f32 %v3200, %v3970
    %v3990 = vadd.f32 %v3201, %v3973
    %v3991 = vadd.f32 %v3202, %v3976
    %v3992 = vadd.f32 %v3203, %v3979
    %v3993 = vadd.f32 %v3204, %v3982
    %v3994 = vmax.f32 %v3984, 0.0
    %v3995 = vmax.f32 %v3985, 0.0
    %v3996 = vmax.f32 %v3986, 0.0
    %v3997 = vmax.f32 %v3987, 0.0
    %v3998 = vmax.f32 %v3988, 0.0
    %v3999 = vmax.f32 %v3989, 0.0
    %v4000 = vmax.f32 %v3990, 0.0
    %v4001 = vmax.f32 %v3991, 0.0
    %v4002 = vmax.f32 %v3992, 0.0
    %v4003 = vmax.f32 %v3993, 0.0
    %v4004 = vmul.f32 %v3994, %v3994
    %v4005 = vmul.f32 %v3995, %v3995
    %v4006 = vmul.f32 %v3996, %v3996
    %v4007 = vmul.f32 %v3997, %v3997
    %v4008 = vmul.f32 %v3998, %v3998
    %v4009 = vmul.f32 %v3999, %v3999
    %v4010 = vmul.f32 %v4000, %v4000
    %v4011 = vmul.f32 %v4001, %v4001
    %v4012 = vmul.f32 %v4002, %v4002
    %v4013 = vmul.f32 %v4003, %v4003
    %4014 = vadd.xlane.f32.xlu0 %v3994
    %v4015 = vpop.xlane.xlu0 %4014
    %4016 = vadd.xlane.f32.xlu0 %v3995
    %v4017 = vpop.xlane.xlu0 %4016
    %4018 = vadd.xlane.f32.xlu0 %v3996
    %v4019 = vpop.xlane.xlu0 %4018
    %4020 = vadd.xlane.f32.xlu0 %v3997
    %v4021 = vpop.xlane.xlu0 %4020
    %4022 = vadd.xlane.f32.xlu0 %v3998
    %v4023 = vpop.xlane.xlu0 %4022
    %4024 = vadd.xlane.f32.xlu0 %v3999
    %v4025 = vpop.xlane.xlu0 %4024
    %4026 = vadd.xlane.f32.xlu0 %v4000
    %v4027 = vpop.xlane.xlu0 %4026
    %4028 = vadd.xlane.f32.xlu0 %v4001
    %v4029 = vpop.xlane.xlu0 %4028
    %4030 = vadd.xlane.f32.xlu0 %v4002
    %v4031 = vpop.xlane.xlu0 %4030
    %4032 = vadd.xlane.f32.xlu0 %v4003
    %v4033 = vpop.xlane.xlu0 %4032
    %4034 = vadd.xlane.f32.xlu0 %v4004
    %v4035 = vpop.xlane.xlu0 %4034
    %4036 = vadd.xlane.f32.xlu0 %v4005
    %v4037 = vpop.xlane.xlu0 %4036
    %4038 = vadd.xlane.f32.xlu0 %v4006
    %v4039 = vpop.xlane.xlu0 %4038
    %4040 = vadd.xlane.f32.xlu0 %v4007
    %v4041 = vpop.xlane.xlu0 %4040
    %4042 = vadd.xlane.f32.xlu0 %v4008
    %v4043 = vpop.xlane.xlu0 %4042
    %4044 = vadd.xlane.f32.xlu0 %v4009
    %v4045 = vpop.xlane.xlu0 %4044
    %4046 = vadd.xlane.f32.xlu0 %v4010
    %v4047 = vpop.xlane.xlu0 %4046
    %4048 = vadd.xlane.f32.xlu0 %v4011
    %v4049 = vpop.xlane.xlu0 %4048
    %4050 = vadd.xlane.f32.xlu0 %v4012
    %v4051 = vpop.xlane.xlu0 %4050
    %4052 = vadd.xlane.f32.xlu0 %v4013
    %v4053 = vpop.xlane.xlu0 %4052
    %v4054 = vmul.f32 %v4015, 0.0125
    %v4055 = vmul.f32 %v4017, 0.0125
    %v4056 = vmul.f32 %v4019, 0.0125
    %v4057 = vmul.f32 %v4021, 0.0125
    %v4058 = vmul.f32 %v4023, 0.0125
    %v4059 = vmul.f32 %v4025, 0.0125
    %v4060 = vmul.f32 %v4027, 0.0125
    %v4061 = vmul.f32 %v4029, 0.0125
    %v4062 = vmul.f32 %v4031, 0.0125
    %v4063 = vmul.f32 %v4033, 0.0125
    %v4064 = vmul.f32 %v4035, 0.0125
    %v4065 = vmul.f32 %v4037, 0.0125
    %v4066 = vmul.f32 %v4039, 0.0125
    %v4067 = vmul.f32 %v4041, 0.0125
    %v4068 = vmul.f32 %v4043, 0.0125
    %v4069 = vmul.f32 %v4045, 0.0125
    %v4070 = vmul.f32 %v4047, 0.0125
    %v4071 = vmul.f32 %v4049, 0.0125
    %v4072 = vmul.f32 %v4051, 0.0125
    %v4073 = vmul.f32 %v4053, 0.0125
    %v4074 = vmul.f32 %v4054, %v4054
    %v4075 = vmul.f32 %v4055, %v4055
    %v4076 = vmul.f32 %v4056, %v4056
    %v4077 = vmul.f32 %v4057, %v4057
    %v4078 = vmul.f32 %v4058, %v4058
    %v4079 = vmul.f32 %v4059, %v4059
    %v4080 = vmul.f32 %v4060, %v4060
    %v4081 = vmul.f32 %v4061, %v4061
    %v4082 = vmul.f32 %v4062, %v4062
    %v4083 = vmul.f32 %v4063, %v4063
    %v4084 = vsub.f32 %v4064, %v4074
    %v4085 = vsub.f32 %v4065, %v4075
    %v4086 = vsub.f32 %v4066, %v4076
    %v4087 = vsub.f32 %v4067, %v4077
    %v4088 = vsub.f32 %v4068, %v4078
    %v4089 = vsub.f32 %v4069, %v4079
    %v4090 = vsub.f32 %v4070, %v4080
    %v4091 = vsub.f32 %v4071, %v4081
    %v4092 = vsub.f32 %v4072, %v4082
    %v4093 = vsub.f32 %v4073, %v4083
    %v4094 = vmax.f32 %v4084, 0.0
    %v4095 = vmax.f32 %v4085, 0.0
    %v4096 = vmax.f32 %v4086, 0.0
    %v4097 = vmax.f32 %v4087, 0.0
    %v4098 = vmax.f32 %v4088, 0.0
    %v4099 = vmax.f32 %v4089, 0.0
    %v4100 = vmax.f32 %v4090, 0.0
    %v4101 = vmax.f32 %v4091, 0.0
    %v4102 = vmax.f32 %v4092, 0.0
    %v4103 = vmax.f32 %v4093, 0.0
    %v4104 = vsub.f32 %v3994, %v4054
    %v4105 = vsub.f32 %v3995, %v4055
    %v4106 = vsub.f32 %v3996, %v4056
    %v4107 = vsub.f32 %v3997, %v4057
    %v4108 = vsub.f32 %v3998, %v4058
    %v4109 = vsub.f32 %v3999, %v4059
    %v4110 = vsub.f32 %v4000, %v4060
    %v4111 = vsub.f32 %v4001, %v4061
    %v4112 = vsub.f32 %v4002, %v4062
    %v4113 = vsub.f32 %v4003, %v4063
    %v4114 = vadd.f32 %v4094, 1e-05
    %v4115 = vadd.f32 %v4095, 1e-05
    %v4116 = vadd.f32 %v4096, 1e-05
    %v4117 = vadd.f32 %v4097, 1e-05
    %v4118 = vadd.f32 %v4098, 1e-05
    %v4119 = vadd.f32 %v4099, 1e-05
    %v4120 = vadd.f32 %v4100, 1e-05
    %v4121 = vadd.f32 %v4101, 1e-05
    %v4122 = vadd.f32 %v4102, 1e-05
    %v4123 = vadd.f32 %v4103, 1e-05
    %v4124 = vrsqrt.pop %v4114
    %v4125 = vmul.f32 %v4124, %v4114
    %v4126 = vmul.f32 %v4125, %v4124
    %v4127 = vmul.f32 0.5, %v4126
    %v4128 = vsub.f32 1.5, %v4127
    %v4129 = vmul.f32 %v4124, %v4128
    %vm4130 = vweird.f32 %v4114
    %vm4131 = vweird.f32 %v4124
    %vm4132 = vmor %vm4130, %vm4131
    %v4133 = vsel %vm4132, %v4124, %v4129
    %v4134 = vrsqrt.pop %v4115
    %v4135 = vmul.f32 %v4134, %v4115
    %v4136 = vmul.f32 %v4135, %v4134
    %v4137 = vmul.f32 0.5, %v4136
    %v4138 = vsub.f32 1.5, %v4137
    %v4139 = vmul.f32 %v4134, %v4138
    %vm4140 = vweird.f32 %v4115
    %vm4141 = vweird.f32 %v4134
    %vm4142 = vmor %vm4140, %vm4141
    %v4143 = vsel %vm4142, %v4134, %v4139
    %v4144 = vrsqrt.pop %v4116
    %v4145 = vmul.f32 %v4144, %v4116
    %v4146 = vmul.f32 %v4145, %v4144
    %v4147 = vmul.f32 0.5, %v4146
    %v4148 = vsub.f32 1.5, %v4147
    %v4149 = vmul.f32 %v4144, %v4148
    %vm4150 = vweird.f32 %v4116
    %vm4151 = vweird.f32 %v4144
    %vm4152 = vmor %vm4150, %vm4151
    %v4153 = vsel %vm4152, %v4144, %v4149
    %v4154 = vrsqrt.pop %v4117
    %v4155 = vmul.f32 %v4154, %v4117
    %v4156 = vmul.f32 %v4155, %v4154
    %v4157 = vmul.f32 0.5, %v4156
    %v4158 = vsub.f32 1.5, %v4157
    %v4159 = vmul.f32 %v4154, %v4158
    %vm4160 = vweird.f32 %v4117
    %vm4161 = vweird.f32 %v4154
    %vm4162 = vmor %vm4160, %vm4161
    %v4163 = vsel %vm4162, %v4154, %v4159
    %v4164 = vrsqrt.pop %v4118
    %v4165 = vmul.f32 %v4164, %v4118
    %v4166 = vmul.f32 %v4165, %v4164
    %v4167 = vmul.f32 0.5, %v4166
    %v4168 = vsub.f32 1.5, %v4167
    %v4169 = vmul.f32 %v4164, %v4168
    %vm4170 = vweird.f32 %v4118
    %vm4171 = vweird.f32 %v4164
    %vm4172 = vmor %vm4170, %vm4171
    %v4173 = vsel %vm4172, %v4164, %v4169
    %v4174 = vrsqrt.pop %v4119
    %v4175 = vmul.f32 %v4174, %v4119
    %v4176 = vmul.f32 %v4175, %v4174
    %v4177 = vmul.f32 0.5, %v4176
    %v4178 = vsub.f32 1.5, %v4177
    %v4179 = vmul.f32 %v4174, %v4178
    %vm4180 = vweird.f32 %v4119
    %vm4181 = vweird.f32 %v4174
    %vm4182 = vmor %vm4180, %vm4181
    %v4183 = vsel %vm4182, %v4174, %v4179
    %v4184 = vrsqrt.pop %v4120
    %v4185 = vmul.f32 %v4184, %v4120
    %v4186 = vmul.f32 %v4185, %v4184
    %v4187 = vmul.f32 0.5, %v4186
    %v4188 = vsub.f32 1.5, %v4187
    %v4189 = vmul.f32 %v4184, %v4188
    %vm4190 = vweird.f32 %v4120
    %vm4191 = vweird.f32 %v4184
    %vm4192 = vmor %vm4190, %vm4191
    %v4193 = vsel %vm4192, %v4184, %v4189
    %v4194 = vrsqrt.pop %v4121
    %v4195 = vmul.f32 %v4194, %v4121
    %v4196 = vmul.f32 %v4195, %v4194
    %v4197 = vmul.f32 0.5, %v4196
    %v4198 = vsub.f32 1.5, %v4197
    %v4199 = vmul.f32 %v4194, %v4198
    %vm4200 = vweird.f32 %v4121
    %vm4201 = vweird.f32 %v4194
    %vm4202 = vmor %vm4200, %vm4201
    %v4203 = vsel %vm4202, %v4194, %v4199
    %v4204 = vrsqrt.pop %v4122
    %v4205 = vmul.f32 %v4204, %v4122
    %v4206 = vmul.f32 %v4205, %v4204
    %v4207 = vmul.f32 0.5, %v4206
    %v4208 = vsub.f32 1.5, %v4207
    %v4209 = vmul.f32 %v4204, %v4208
    %vm4210 = vweird.f32 %v4122
    %vm4211 = vweird.f32 %v4204
    %vm4212 = vmor %vm4210, %vm4211
    %v4213 = vsel %vm4212, %v4204, %v4209
    %v4214 = vrsqrt.pop %v4123
    %v4215 = vmul.f32 %v4214, %v4123
    %v4216 = vmul.f32 %v4215, %v4214
    %v4217 = vmul.f32 0.5, %v4216
    %v4218 = vsub.f32 1.5, %v4217
    %v4219 = vmul.f32 %v4214, %v4218
    %vm4220 = vweird.f32 %v4123
    %vm4221 = vweird.f32 %v4214
    %vm4222 = vmor %vm4220, %vm4221
    %v4223 = vsel %vm4222, %v4214, %v4219
    %v4224 = vmul.f32 %v4104, %v4133
    %v4225 = vmul.f32 %v4105, %v4143
    %v4226 = vmul.f32 %v4106, %v4153
    %v4227 = vmul.f32 %v4107, %v4163
    %v4228 = vmul.f32 %v4108, %v4173
    %v4229 = vmul.f32 %v4109, %v4183
    %v4230 = vmul.f32 %v4110, %v4193
    %v4231 = vmul.f32 %v4111, %v4203
    %v4232 = vmul.f32 %v4112, %v4213
    %v4233 = vmul.f32 %v4113, %v4223
    %4234 = vrot.lane.b32.xlu0 %v4224, 2
    %v4235 = vpop.permute.xlu0 %4234
    %4236 = vrot.lane.b32.xlu0 %v4225, 2
    %v4237 = vpop.permute.xlu0 %4236
    %4238 = vrot.lane.b32.xlu0 %v4226, 2
    %v4239 = vpop.permute.xlu0 %4238
    %4240 = vrot.lane.b32.xlu0 %v4227, 2
    %v4241 = vpop.permute.xlu0 %4240
    %4242 = vrot.lane.b32.xlu0 %v4228, 2
    %v4243 = vpop.permute.xlu0 %4242
    %4244 = vrot.lane.b32.xlu0 %v4229, 2
    %v4245 = vpop.permute.xlu0 %4244
    %4246 = vrot.lane.b32.xlu0 %v4230, 2
    %v4247 = vpop.permute.xlu0 %4246
    %4248 = vrot.lane.b32.xlu0 %v4231, 2
    %v4249 = vpop.permute.xlu0 %4248
    %4250 = vrot.lane.b32.xlu0 %v4232, 2
    %v4251 = vpop.permute.xlu0 %4250
    %4252 = vrot.lane.b32.xlu0 %v4233, 2
    %v4253 = vpop.permute.xlu0 %4252
    %v4254 = vld [vmem:[%s5] sm:$0xff]
    %v4255 = vld [vmem:[%s5 + $0x8] sm:$0xff]
    %v4256 = vld [vmem:[%s5 + $0x10] sm:$0xff]
    %v4257 = vld [vmem:[%s5 + $0x18] sm:$0xff]
    %v4258 = vld [vmem:[%s5 + $0x20] sm:$0xff]
    %v4259 = vld [vmem:[%s5 + $0x28] sm:$0xff]
    %v4260 = vld [vmem:[%s5 + $0x30] sm:$0xff]
    %v4261 = vld [vmem:[%s5 + $0x38] sm:$0xff]
    %v4262 = vld [vmem:[%s5 + $0x40] sm:$0xff]
    %v4263 = vld [vmem:[%s5 + $0x48] sm:$0xff]
    %v4264 = vmul.f32 %v4235, %v4254
    %v4265 = vmul.f32 %v4237, %v4255
    %v4266 = vmul.f32 %v4239, %v4256
    %v4267 = vmul.f32 %v4241, %v4257
    %v4268 = vmul.f32 %v4243, %v4258
    %v4269 = vmul.f32 %v4245, %v4259
    %v4270 = vmul.f32 %v4247, %v4260
    %v4271 = vmul.f32 %v4249, %v4261
    %v4272 = vmul.f32 %v4251, %v4262
    %v4273 = vmul.f32 %v4253, %v4263
    %4274 = vst [vmem:[#allocation2] sm:$0xff] %v4264
    %4275 = vst [vmem:[#allocation2 + $0x8] sm:$0xff] %v4265
    %4276 = vst [vmem:[#allocation2 + $0x10] sm:$0xff] %v4266
    %4277 = vst [vmem:[#allocation2 + $0x18] sm:$0xff] %v4267
    %4278 = vst [vmem:[#allocation2 + $0x20] sm:$0xff] %v4268
    %4279 = vst [vmem:[#allocation2 + $0x28] sm:$0xff] %v4269
    %4280 = vst [vmem:[#allocation2 + $0x30] sm:$0xff] %v4270
    %4281 = vst [vmem:[#allocation2 + $0x38] sm:$0xff] %v4271
    %4282 = vst [vmem:[#allocation2 + $0x40] sm:$0xff] %v4272
    %4283 = vst [vmem:[#allocation2 + $0x48] sm:$0xff] %v4273
    %4284 = vrot.lane.b32.xlu0 %v4224, 1
    %v4285 = vpop.permute.xlu0 %4284
    %4286 = vrot.lane.b32.xlu0 %v4225, 1
    %v4287 = vpop.permute.xlu0 %4286
    %4288 = vrot.lane.b32.xlu0 %v4226, 1
    %v4289 = vpop.permute.xlu0 %4288
    %4290 = vrot.lane.b32.xlu0 %v4227, 1
    %v4291 = vpop.permute.xlu0 %4290
    %4292 = vrot.lane.b32.xlu0 %v4228, 1
    %v4293 = vpop.permute.xlu0 %4292
    %4294 = vrot.lane.b32.xlu0 %v4229, 1
    %v4295 = vpop.permute.xlu0 %4294
    %4296 = vrot.lane.b32.xlu0 %v4230, 1
    %v4297 = vpop.permute.xlu0 %4296
    %4298 = vrot.lane.b32.xlu0 %v4231, 1
    %v4299 = vpop.permute.xlu0 %4298
    %4300 = vrot.lane.b32.xlu0 %v4232, 1
    %v4301 = vpop.permute.xlu0 %4300
    %4302 = vrot.lane.b32.xlu0 %v4233, 1
    %v4303 = vpop.permute.xlu0 %4302
    %v4304 = vld [vmem:[%s5 + $0x50] sm:$0xff]
    %v4305 = vld [vmem:[%s5 + $0x58] sm:$0xff]
    %v4306 = vld [vmem:[%s5 + $0x60] sm:$0xff]
    %v4307 = vld [vmem:[%s5 + $0x68] sm:$0xff]
    %v4308 = vld [vmem:[%s5 + $0x70] sm:$0xff]
    %v4309 = vld [vmem:[%s5 + $0x78] sm:$0xff]
    %v4310 = vld [vmem:[%s5 + $0x80] sm:$0xff]
    %v4311 = vld [vmem:[%s5 + $0x88] sm:$0xff]
    %v4312 = vld [vmem:[%s5 + $0x90] sm:$0xff]
    %v4313 = vld [vmem:[%s5 + $0x98] sm:$0xff]
    %v4314 = vmul.f32 %v4285, %v4304
    %v4315 = vmul.f32 %v4287, %v4305
    %v4316 = vmul.f32 %v4289, %v4306
    %v4317 = vmul.f32 %v4291, %v4307
    %v4318 = vmul.f32 %v4293, %v4308
    %v4319 = vmul.f32 %v4295, %v4309
    %v4320 = vmul.f32 %v4297, %v4310
    %v4321 = vmul.f32 %v4299, %v4311
    %v4322 = vmul.f32 %v4301, %v4312
    %v4323 = vmul.f32 %v4303, %v4313
    %4324 = vst [vmem:[#allocation2 + $0x50] sm:$0xff] %v4314
    %4325 = vst [vmem:[#allocation2 + $0x58] sm:$0xff] %v4315
    %4326 = vst [vmem:[#allocation2 + $0x60] sm:$0xff] %v4316
    %4327 = vst [vmem:[#allocation2 + $0x68] sm:$0xff] %v4317
    %4328 = vst [vmem:[#allocation2 + $0x70] sm:$0xff] %v4318
    %4329 = vst [vmem:[#allocation2 + $0x78] sm:$0xff] %v4319
    %4330 = vst [vmem:[#allocation2 + $0x80] sm:$0xff] %v4320
    %4331 = vst [vmem:[#allocation2 + $0x88] sm:$0xff] %v4321
    %4332 = vst [vmem:[#allocation2 + $0x90] sm:$0xff] %v4322
    %4333 = vst [vmem:[#allocation2 + $0x98] sm:$0xff] %v4323
    %v4334 = vld [vmem:[%s5 + $0xa0] sm:$0xff]
    %v4335 = vld [vmem:[%s5 + $0xa8] sm:$0xff]
    %v4336 = vld [vmem:[%s5 + $0xb0] sm:$0xff]
    %v4337 = vld [vmem:[%s5 + $0xb8] sm:$0xff]
    %v4338 = vld [vmem:[%s5 + $0xc0] sm:$0xff]
    %v4339 = vld [vmem:[%s5 + $0xc8] sm:$0xff]
    %v4340 = vld [vmem:[%s5 + $0xd0] sm:$0xff]
    %v4341 = vld [vmem:[%s5 + $0xd8] sm:$0xff]
    %v4342 = vld [vmem:[%s5 + $0xe0] sm:$0xff]
    %v4343 = vld [vmem:[%s5 + $0xe8] sm:$0xff]
    %v4344 = vmul.f32 %v4224, %v4334
    %v4345 = vmul.f32 %v4225, %v4335
    %v4346 = vmul.f32 %v4226, %v4336
    %v4347 = vmul.f32 %v4227, %v4337
    %v4348 = vmul.f32 %v4228, %v4338
    %v4349 = vmul.f32 %v4229, %v4339
    %v4350 = vmul.f32 %v4230, %v4340
    %v4351 = vmul.f32 %v4231, %v4341
    %v4352 = vmul.f32 %v4232, %v4342
    %v4353 = vmul.f32 %v4233, %v4343
    %4354 = vst [vmem:[#allocation2 + $0xa0] sm:$0xff] %v4344
    %4355 = vst [vmem:[#allocation2 + $0xa8] sm:$0xff] %v4345
    %4356 = vst [vmem:[#allocation2 + $0xb0] sm:$0xff] %v4346
    %4357 = vst [vmem:[#allocation2 + $0xb8] sm:$0xff] %v4347
    %4358 = vst [vmem:[#allocation2 + $0xc0] sm:$0xff] %v4348
    %4359 = vst [vmem:[#allocation2 + $0xc8] sm:$0xff] %v4349
    %4360 = vst [vmem:[#allocation2 + $0xd0] sm:$0xff] %v4350
    %4361 = vst [vmem:[#allocation2 + $0xd8] sm:$0xff] %v4351
    %4362 = vst [vmem:[#allocation2 + $0xe0] sm:$0xff] %v4352
    %4363 = vst [vmem:[#allocation2 + $0xe8] sm:$0xff] %v4353
    %4364 = vrot.lane.b32.xlu0 %v4224, 127
    %v4365 = vpop.permute.xlu0 %4364
    %4366 = vrot.lane.b32.xlu0 %v4225, 127
    %v4367 = vpop.permute.xlu0 %4366
    %4368 = vrot.lane.b32.xlu0 %v4226, 127
    %v4369 = vpop.permute.xlu0 %4368
    %4370 = vrot.lane.b32.xlu0 %v4227, 127
    %v4371 = vpop.permute.xlu0 %4370
    %4372 = vrot.lane.b32.xlu0 %v4228, 127
    %v4373 = vpop.permute.xlu0 %4372
    %4374 = vrot.lane.b32.xlu0 %v4229, 127
    %v4375 = vpop.permute.xlu0 %4374
    %4376 = vrot.lane.b32.xlu0 %v4230, 127
    %v4377 = vpop.permute.xlu0 %4376
    %4378 = vrot.lane.b32.xlu0 %v4231, 127
    %v4379 = vpop.permute.xlu0 %4378
    %4380 = vrot.lane.b32.xlu0 %v4232, 127
    %v4381 = vpop.permute.xlu0 %4380
    %4382 = vrot.lane.b32.xlu0 %v4233, 127
    %v4383 = vpop.permute.xlu0 %4382
    %v4384 = vld [vmem:[%s5 + $0xf0] sm:$0xff]
    %v4385 = vld [vmem:[%s5 + $0xf8] sm:$0xff]
    %v4386 = vld [vmem:[%s5 + $0x100] sm:$0xff]
    %v4387 = vld [vmem:[%s5 + $0x108] sm:$0xff]
    %v4388 = vld [vmem:[%s5 + $0x110] sm:$0xff]
    %v4389 = vld [vmem:[%s5 + $0x118] sm:$0xff]
    %v4390 = vld [vmem:[%s5 + $0x120] sm:$0xff]
    %v4391 = vld [vmem:[%s5 + $0x128] sm:$0xff]
    %v4392 = vld [vmem:[%s5 + $0x130] sm:$0xff]
    %v4393 = vld [vmem:[%s5 + $0x138] sm:$0xff]
    %v4394 = vmul.f32 %v4365, %v4384
    %v4395 = vmul.f32 %v4367, %v4385
    %v4396 = vmul.f32 %v4369, %v4386
    %v4397 = vmul.f32 %v4371, %v4387
    %v4398 = vmul.f32 %v4373, %v4388
    %v4399 = vmul.f32 %v4375, %v4389
    %v4400 = vmul.f32 %v4377, %v4390
    %v4401 = vmul.f32 %v4379, %v4391
    %v4402 = vmul.f32 %v4381, %v4392
    %v4403 = vmul.f32 %v4383, %v4393
    %4404 = vst [vmem:[#allocation2 + $0xf0] sm:$0xff] %v4394
    %4405 = vst [vmem:[#allocation2 + $0xf8] sm:$0xff] %v4395
    %4406 = vst [vmem:[#allocation2 + $0x100] sm:$0xff] %v4396
    %4407 = vst [vmem:[#allocation2 + $0x108] sm:$0xff] %v4397
    %4408 = vst [vmem:[#allocation2 + $0x110] sm:$0xff] %v4398
    %4409 = vst [vmem:[#allocation2 + $0x118] sm:$0xff] %v4399
    %4410 = vst [vmem:[#allocation2 + $0x120] sm:$0xff] %v4400
    %4411 = vst [vmem:[#allocation2 + $0x128] sm:$0xff] %v4401
    %4412 = vst [vmem:[#allocation2 + $0x130] sm:$0xff] %v4402
    %4413 = vst [vmem:[#allocation2 + $0x138] sm:$0xff] %v4403
    %4414 = vrot.lane.b32.xlu0 %v4224, 126
    %v4415 = vpop.permute.xlu0 %4414
    %4416 = vrot.lane.b32.xlu0 %v4225, 126
    %v4417 = vpop.permute.xlu0 %4416
    %4418 = vrot.lane.b32.xlu0 %v4226, 126
    %v4419 = vpop.permute.xlu0 %4418
    %4420 = vrot.lane.b32.xlu0 %v4227, 126
    %v4421 = vpop.permute.xlu0 %4420
    %4422 = vrot.lane.b32.xlu0 %v4228, 126
    %v4423 = vpop.permute.xlu0 %4422
    %4424 = vrot.lane.b32.xlu0 %v4229, 126
    %v4425 = vpop.permute.xlu0 %4424
    %4426 = vrot.lane.b32.xlu0 %v4230, 126
    %v4427 = vpop.permute.xlu0 %4426
    %4428 = vrot.lane.b32.xlu0 %v4231, 126
    %v4429 = vpop.permute.xlu0 %4428
    %4430 = vrot.lane.b32.xlu0 %v4232, 126
    %v4431 = vpop.permute.xlu0 %4430
    %4432 = vrot.lane.b32.xlu0 %v4233, 126
    %v4433 = vpop.permute.xlu0 %4432
    %v4434 = vld [vmem:[%s5 + $0x140] sm:$0xff]
    %v4435 = vld [vmem:[%s5 + $0x148] sm:$0xff]
    %v4436 = vld [vmem:[%s5 + $0x150] sm:$0xff]
    %v4437 = vld [vmem:[%s5 + $0x158] sm:$0xff]
    %v4438 = vld [vmem:[%s5 + $0x160] sm:$0xff]
    %v4439 = vld [vmem:[%s5 + $0x168] sm:$0xff]
    %v4440 = vld [vmem:[%s5 + $0x170] sm:$0xff]
    %v4441 = vld [vmem:[%s5 + $0x178] sm:$0xff]
    %v4442 = vld [vmem:[%s5 + $0x180] sm:$0xff]
    %v4443 = vld [vmem:[%s5 + $0x188] sm:$0xff]
    %v4444 = vmul.f32 %v4415, %v4434
    %v4445 = vmul.f32 %v4417, %v4435
    %v4446 = vmul.f32 %v4419, %v4436
    %v4447 = vmul.f32 %v4421, %v4437
    %v4448 = vmul.f32 %v4423, %v4438
    %v4449 = vmul.f32 %v4425, %v4439
    %v4450 = vmul.f32 %v4427, %v4440
    %v4451 = vmul.f32 %v4429, %v4441
    %v4452 = vmul.f32 %v4431, %v4442
    %v4453 = vmul.f32 %v4433, %v4443
    %4454 = vst [vmem:[#allocation2 + $0x140] sm:$0xff] %v4444
    %4455 = vst [vmem:[#allocation2 + $0x148] sm:$0xff] %v4445
    %4456 = vst [vmem:[#allocation2 + $0x150] sm:$0xff] %v4446
    %4457 = vst [vmem:[#allocation2 + $0x158] sm:$0xff] %v4447
    %4458 = vst [vmem:[#allocation2 + $0x160] sm:$0xff] %v4448
    %4459 = vst [vmem:[#allocation2 + $0x168] sm:$0xff] %v4449
    %4460 = vst [vmem:[#allocation2 + $0x170] sm:$0xff] %v4450
    %4461 = vst [vmem:[#allocation2 + $0x178] sm:$0xff] %v4451
    %4462 = vst [vmem:[#allocation2 + $0x180] sm:$0xff] %v4452
    %4463 = vst [vmem:[#allocation2 + $0x188] sm:$0xff] %v4453
    %s4464 = scalar_lea.vmem [#allocation3], 1600
    %v4465 = vld [vmem:[%s4464] sm:$0xff]
    %v4466 = vld [vmem:[%s4464 + $0x8] sm:$0xff]
    %v4467 = vld [vmem:[%s4464 + $0x10] sm:$0xff]
    %v4468 = vld [vmem:[%s4464 + $0x18] sm:$0xff]
    %v4469 = vld [vmem:[%s4464 + $0x20] sm:$0xff]
    %v4470 = vld [vmem:[%s4464 + $0x28] sm:$0xff]
    %v4471 = vld [vmem:[%s4464 + $0x30] sm:$0xff]
    %v4472 = vld [vmem:[%s4464 + $0x38] sm:$0xff]
    %v4473 = vld [vmem:[%s4464 + $0x40] sm:$0xff]
    %v4474 = vld [vmem:[%s4464 + $0x48] sm:$0xff]
    %v4475 = vld [vmem:[%s4464 + $0x50] sm:$0xff]
    %v4476 = vld [vmem:[%s4464 + $0x58] sm:$0xff]
    %v4477 = vld [vmem:[%s4464 + $0x60] sm:$0xff]
    %v4478 = vld [vmem:[%s4464 + $0x68] sm:$0xff]
    %v4479 = vld [vmem:[%s4464 + $0x70] sm:$0xff]
    %v4480 = vld [vmem:[%s4464 + $0x78] sm:$0xff]
    %v4481 = vld [vmem:[%s4464 + $0x80] sm:$0xff]
    %v4482 = vld [vmem:[%s4464 + $0x88] sm:$0xff]
    %v4483 = vld [vmem:[%s4464 + $0x90] sm:$0xff]
    %v4484 = vld [vmem:[%s4464 + $0x98] sm:$0xff]
    %v4485 = vld [vmem:[%s4464 + $0xa0] sm:$0xff]
    %v4486 = vld [vmem:[%s4464 + $0xa8] sm:$0xff]
    %v4487 = vld [vmem:[%s4464 + $0xb0] sm:$0xff]
    %v4488 = vld [vmem:[%s4464 + $0xb8] sm:$0xff]
    %v4489 = vld [vmem:[%s4464 + $0xc0] sm:$0xff]
    %v4490 = vld [vmem:[%s4464 + $0xc8] sm:$0xff]
    %v4491 = vld [vmem:[%s4464 + $0xd0] sm:$0xff]
    %v4492 = vld [vmem:[%s4464 + $0xd8] sm:$0xff]
    %v4493 = vld [vmem:[%s4464 + $0xe0] sm:$0xff]
    %v4494 = vld [vmem:[%s4464 + $0xe8] sm:$0xff]
    %v4495 = vld [vmem:[%s4464 + $0xf0] sm:$0xff]
    %v4496 = vld [vmem:[%s4464 + $0xf8] sm:$0xff]
    %v4497 = vld [vmem:[%s4464 + $0x100] sm:$0xff]
    %v4498 = vld [vmem:[%s4464 + $0x108] sm:$0xff]
    %v4499 = vld [vmem:[%s4464 + $0x110] sm:$0xff]
    %v4500 = vld [vmem:[%s4464 + $0x118] sm:$0xff]
    %v4501 = vld [vmem:[%s4464 + $0x120] sm:$0xff]
    %v4502 = vld [vmem:[%s4464 + $0x128] sm:$0xff]
    %v4503 = vld [vmem:[%s4464 + $0x130] sm:$0xff]
    %v4504 = vld [vmem:[%s4464 + $0x138] sm:$0xff]
    %v4505 = vld [vmem:[#allocation2] sm:$0xff]
    %v4506 = vld [vmem:[#allocation2 + $0x8] sm:$0xff]
    %v4507 = vld [vmem:[#allocation2 + $0x10] sm:$0xff]
    %v4508 = vld [vmem:[#allocation2 + $0x18] sm:$0xff]
    %v4509 = vld [vmem:[#allocation2 + $0x20] sm:$0xff]
    %v4510 = vld [vmem:[#allocation2 + $0x28] sm:$0xff]
    %v4511 = vld [vmem:[#allocation2 + $0x30] sm:$0xff]
    %v4512 = vld [vmem:[#allocation2 + $0x38] sm:$0xff]
    %v4513 = vld [vmem:[#allocation2 + $0x40] sm:$0xff]
    %v4514 = vld [vmem:[#allocation2 + $0x48] sm:$0xff]
    %v4515 = vld [vmem:[#allocation2 + $0x50] sm:$0xff]
    %v4516 = vld [vmem:[#allocation2 + $0x58] sm:$0xff]
    %v4517 = vld [vmem:[#allocation2 + $0x60] sm:$0xff]
    %v4518 = vld [vmem:[#allocation2 + $0x68] sm:$0xff]
    %v4519 = vld [vmem:[#allocation2 + $0x70] sm:$0xff]
    %v4520 = vld [vmem:[#allocation2 + $0x78] sm:$0xff]
    %v4521 = vld [vmem:[#allocation2 + $0x80] sm:$0xff]
    %v4522 = vld [vmem:[#allocation2 + $0x88] sm:$0xff]
    %v4523 = vld [vmem:[#allocation2 + $0x90] sm:$0xff]
    %v4524 = vld [vmem:[#allocation2 + $0x98] sm:$0xff]
    %v4525 = vld [vmem:[#allocation2 + $0xa0] sm:$0xff]
    %v4526 = vld [vmem:[#allocation2 + $0xa8] sm:$0xff]
    %v4527 = vld [vmem:[#allocation2 + $0xb0] sm:$0xff]
    %v4528 = vld [vmem:[#allocation2 + $0xb8] sm:$0xff]
    %v4529 = vld [vmem:[#allocation2 + $0xc0] sm:$0xff]
    %v4530 = vld [vmem:[#allocation2 + $0xc8] sm:$0xff]
    %v4531 = vld [vmem:[#allocation2 + $0xd0] sm:$0xff]
    %v4532 = vld [vmem:[#allocation2 + $0xd8] sm:$0xff]
    %v4533 = vld [vmem:[#allocation2 + $0xe0] sm:$0xff]
    %v4534 = vld [vmem:[#allocation2 + $0xe8] sm:$0xff]
    %v4535 = vld [vmem:[#allocation2 + $0xf0] sm:$0xff]
    %v4536 = vld [vmem:[#allocation2 + $0xf8] sm:$0xff]
    %v4537 = vld [vmem:[#allocation2 + $0x100] sm:$0xff]
    %v4538 = vld [vmem:[#allocation2 + $0x108] sm:$0xff]
    %v4539 = vld [vmem:[#allocation2 + $0x110] sm:$0xff]
    %v4540 = vld [vmem:[#allocation2 + $0x118] sm:$0xff]
    %v4541 = vld [vmem:[#allocation2 + $0x120] sm:$0xff]
    %v4542 = vld [vmem:[#allocation2 + $0x128] sm:$0xff]
    %v4543 = vld [vmem:[#allocation2 + $0x130] sm:$0xff]
    %v4544 = vld [vmem:[#allocation2 + $0x138] sm:$0xff]
    %v4545 = vld [vmem:[#allocation2 + $0x140] sm:$0xff]
    %v4546 = vld [vmem:[#allocation2 + $0x148] sm:$0xff]
    %v4547 = vld [vmem:[#allocation2 + $0x150] sm:$0xff]
    %v4548 = vld [vmem:[#allocation2 + $0x158] sm:$0xff]
    %v4549 = vld [vmem:[#allocation2 + $0x160] sm:$0xff]
    %v4550 = vld [vmem:[#allocation2 + $0x168] sm:$0xff]
    %v4551 = vld [vmem:[#allocation2 + $0x170] sm:$0xff]
    %v4552 = vld [vmem:[#allocation2 + $0x178] sm:$0xff]
    %v4553 = vld [vmem:[#allocation2 + $0x180] sm:$0xff]
    %v4554 = vld [vmem:[#allocation2 + $0x188] sm:$0xff]
    %v4556 = vsel %vm609, %v4468, 0
    %v4559 = vsel %vm609, %v4472, 0
    %v4562 = vsel %vm609, %v4476, 0
    %v4565 = vsel %vm609, %v4480, 0
    %v4568 = vsel %vm609, %v4484, 0
    %v4571 = vsel %vm609, %v4488, 0
    %v4574 = vsel %vm609, %v4492, 0
    %v4577 = vsel %vm609, %v4496, 0
    %v4580 = vsel %vm609, %v4500, 0
    %v4583 = vsel %vm609, %v4504, 0
    %4585 = vmatpush.msra.mxu0 %v4520
    %4586 = vmatpush.msra.mxu0 %v4519
    %4587 = vmatpush.msra.mxu0 %v4518
    %4588 = vmatpush.msra.mxu0 %v4517
    %4589 = vmatpush.msra.mxu0 %v4516
    %4590 = vmatpush.msra.mxu0 %v4515
    %4591 = vmatpush.msra.mxu0 %v4514
    %4592 = vmatpush.msra.mxu0 %v4513
    %4593 = vmatpush.msra.mxu0 %v4512
    %4594 = vmatpush.msra.mxu0 %v4511
    %4595 = vmatpush.msra.mxu0 %v4510
    %4596 = vmatpush.msra.mxu0 %v4509
    %4597 = vmatpush.msra.mxu0 %v4508
    %4598 = vmatpush.msra.mxu0 %v4507
    %4599 = vmatpush.msra.mxu0 %v4506
    %4600 = vmatpush.msra.mxu0 %v4505
    %4601 = vmatmul.f32.gmra.mxu0 %v4465
    %v4602 = vpop.f32.mrf.mxu0
    %v4603 = vadd.f32 0.0, %v4602
    %4604 = vmatmul.f32.gmra.mxu0 %v4469
    %v4605 = vpop.f32.mrf.mxu0
    %v4606 = vadd.f32 0.0, %v4605
    %4607 = vmatmul.f32.gmra.mxu0 %v4473
    %v4608 = vpop.f32.mrf.mxu0
    %v4609 = vadd.f32 0.0, %v4608
    %4610 = vmatmul.f32.gmra.mxu0 %v4477
    %v4611 = vpop.f32.mrf.mxu0
    %v4612 = vadd.f32 0.0, %v4611
    %4613 = vmatmul.f32.gmra.mxu0 %v4481
    %v4614 = vpop.f32.mrf.mxu0
    %v4615 = vadd.f32 0.0, %v4614
    %4616 = vmatmul.f32.gmra.mxu0 %v4485
    %v4617 = vpop.f32.mrf.mxu0
    %v4618 = vadd.f32 0.0, %v4617
    %4619 = vmatmul.f32.gmra.mxu0 %v4489
    %v4620 = vpop.f32.mrf.mxu0
    %v4621 = vadd.f32 0.0, %v4620
    %4622 = vmatmul.f32.gmra.mxu0 %v4493
    %v4623 = vpop.f32.mrf.mxu0
    %v4624 = vadd.f32 0.0, %v4623
    %4625 = vmatmul.f32.gmra.mxu0 %v4497
    %v4626 = vpop.f32.mrf.mxu0
    %v4627 = vadd.f32 0.0, %v4626
    %4628 = vmatmul.f32.gmra.mxu0 %v4501
    %v4629 = vpop.f32.mrf.mxu0
    %v4630 = vadd.f32 0.0, %v4629
    %4631 = vdwg.mxu0
    %4632 = vmatpush.msra.mxu0 %v4536
    %4633 = vmatpush.msra.mxu0 %v4535
    %4634 = vmatpush.msra.mxu0 %v4534
    %4635 = vmatpush.msra.mxu0 %v4533
    %4636 = vmatpush.msra.mxu0 %v4532
    %4637 = vmatpush.msra.mxu0 %v4531
    %4638 = vmatpush.msra.mxu0 %v4530
    %4639 = vmatpush.msra.mxu0 %v4529
    %4640 = vmatpush.msra.mxu0 %v4528
    %4641 = vmatpush.msra.mxu0 %v4527
    %4642 = vmatpush.msra.mxu0 %v4526
    %4643 = vmatpush.msra.mxu0 %v4525
    %4644 = vmatpush.msra.mxu0 %v4524
    %4645 = vmatpush.msra.mxu0 %v4523
    %4646 = vmatpush.msra.mxu0 %v4522
    %4647 = vmatpush.msra.mxu0 %v4521
    %4648 = vmatmul.f32.gmra.mxu0 %v4466
    %v4649 = vpop.f32.mrf.mxu0
    %v4650 = vadd.f32 %v4603, %v4649
    %4651 = vmatmul.f32.gmra.mxu0 %v4470
    %v4652 = vpop.f32.mrf.mxu0
    %v4653 = vadd.f32 %v4606, %v4652
    %4654 = vmatmul.f32.gmra.mxu0 %v4474
    %v4655 = vpop.f32.mrf.mxu0
    %v4656 = vadd.f32 %v4609, %v4655
    %4657 = vmatmul.f32.gmra.mxu0 %v4478
    %v4658 = vpop.f32.mrf.mxu0
    %v4659 = vadd.f32 %v4612, %v4658
    %4660 = vmatmul.f32.gmra.mxu0 %v4482
    %v4661 = vpop.f32.mrf.mxu0
    %v4662 = vadd.f32 %v4615, %v4661
    %4663 = vmatmul.f32.gmra.mxu0 %v4486
    %v4664 = vpop.f32.mrf.mxu0
    %v4665 = vadd.f32 %v4618, %v4664
    %4666 = vmatmul.f32.gmra.mxu0 %v4490
    %v4667 = vpop.f32.mrf.mxu0
    %v4668 = vadd.f32 %v4621, %v4667
    %4669 = vmatmul.f32.gmra.mxu0 %v4494
    %v4670 = vpop.f32.mrf.mxu0
    %v4671 = vadd.f32 %v4624, %v4670
    %4672 = vmatmul.f32.gmra.mxu0 %v4498
    %v4673 = vpop.f32.mrf.mxu0
    %v4674 = vadd.f32 %v4627, %v4673
    %4675 = vmatmul.f32.gmra.mxu0 %v4502
    %v4676 = vpop.f32.mrf.mxu0
    %v4677 = vadd.f32 %v4630, %v4676
    %4678 = vdwg.mxu0
    %4679 = vmatpush.msra.mxu0 %v4552
    %4680 = vmatpush.msra.mxu0 %v4551
    %4681 = vmatpush.msra.mxu0 %v4550
    %4682 = vmatpush.msra.mxu0 %v4549
    %4683 = vmatpush.msra.mxu0 %v4548
    %4684 = vmatpush.msra.mxu0 %v4547
    %4685 = vmatpush.msra.mxu0 %v4546
    %4686 = vmatpush.msra.mxu0 %v4545
    %4687 = vmatpush.msra.mxu0 %v4544
    %4688 = vmatpush.msra.mxu0 %v4543
    %4689 = vmatpush.msra.mxu0 %v4542
    %4690 = vmatpush.msra.mxu0 %v4541
    %4691 = vmatpush.msra.mxu0 %v4540
    %4692 = vmatpush.msra.mxu0 %v4539
    %4693 = vmatpush.msra.mxu0 %v4538
    %4694 = vmatpush.msra.mxu0 %v4537
    %4695 = vmatmul.f32.gmra.mxu0 %v4467
    %v4696 = vpop.f32.mrf.mxu0
    %v4697 = vadd.f32 %v4650, %v4696
    %4698 = vmatmul.f32.gmra.mxu0 %v4471
    %v4699 = vpop.f32.mrf.mxu0
    %v4700 = vadd.f32 %v4653, %v4699
    %4701 = vmatmul.f32.gmra.mxu0 %v4475
    %v4702 = vpop.f32.mrf.mxu0
    %v4703 = vadd.f32 %v4656, %v4702
    %4704 = vmatmul.f32.gmra.mxu0 %v4479
    %v4705 = vpop.f32.mrf.mxu0
    %v4706 = vadd.f32 %v4659, %v4705
    %4707 = vmatmul.f32.gmra.mxu0 %v4483
    %v4708 = vpop.f32.mrf.mxu0
    %v4709 = vadd.f32 %v4662, %v4708
    %4710 = vmatmul.f32.gmra.mxu0 %v4487
    %v4711 = vpop.f32.mrf.mxu0
    %v4712 = vadd.f32 %v4665, %v4711
    %4713 = vmatmul.f32.gmra.mxu0 %v4491
    %v4714 = vpop.f32.mrf.mxu0
    %v4715 = vadd.f32 %v4668, %v4714
    %4716 = vmatmul.f32.gmra.mxu0 %v4495
    %v4717 = vpop.f32.mrf.mxu0
    %v4718 = vadd.f32 %v4671, %v4717
    %4719 = vmatmul.f32.gmra.mxu0 %v4499
    %v4720 = vpop.f32.mrf.mxu0
    %v4721 = vadd.f32 %v4674, %v4720
    %4722 = vmatmul.f32.gmra.mxu0 %v4503
    %v4723 = vpop.f32.mrf.mxu0
    %v4724 = vadd.f32 %v4677, %v4723
    %4725 = vdwg.mxu0
    %4726 = vmatpush.msra.mxu0 0.0
    %4727 = vmatpush.msra.mxu0 0.0
    %4728 = vmatpush.msra.mxu0 0.0
    %4729 = vmatpush.msra.mxu0 0.0
    %4730 = vmatpush.msra.mxu0 0.0
    %4731 = vmatpush.msra.mxu0 0.0
    %4732 = vmatpush.msra.mxu0 0.0
    %4733 = vmatpush.msra.mxu0 0.0
    %4734 = vmatpush.msra.mxu0 0.0
    %4735 = vmatpush.msra.mxu0 0.0
    %4736 = vmatpush.msra.mxu0 0.0
    %4737 = vmatpush.msra.mxu0 0.0
    %4738 = vmatpush.msra.mxu0 0.0
    %4739 = vmatpush.msra.mxu0 0.0
    %4740 = vmatpush.msra.mxu0 %v4554
    %4741 = vmatpush.msra.mxu0 %v4553
    %4742 = vmatmul.f32.gmra.mxu0 %v4556
    %v4743 = vpop.f32.mrf.mxu0
    %v4744 = vadd.f32 %v4697, %v4743
    %4745 = vmatmul.f32.gmra.mxu0 %v4559
    %v4746 = vpop.f32.mrf.mxu0
    %v4747 = vadd.f32 %v4700, %v4746
    %4748 = vmatmul.f32.gmra.mxu0 %v4562
    %v4749 = vpop.f32.mrf.mxu0
    %v4750 = vadd.f32 %v4703, %v4749
    %4751 = vmatmul.f32.gmra.mxu0 %v4565
    %v4752 = vpop.f32.mrf.mxu0
    %v4753 = vadd.f32 %v4706, %v4752
    %4754 = vmatmul.f32.gmra.mxu0 %v4568
    %v4755 = vpop.f32.mrf.mxu0
    %v4756 = vadd.f32 %v4709, %v4755
    %4757 = vmatmul.f32.gmra.mxu0 %v4571
    %v4758 = vpop.f32.mrf.mxu0
    %v4759 = vadd.f32 %v4712, %v4758
    %4760 = vmatmul.f32.gmra.mxu0 %v4574
    %v4761 = vpop.f32.mrf.mxu0
    %v4762 = vadd.f32 %v4715, %v4761
    %4763 = vmatmul.f32.gmra.mxu0 %v4577
    %v4764 = vpop.f32.mrf.mxu0
    %v4765 = vadd.f32 %v4718, %v4764
    %4766 = vmatmul.f32.gmra.mxu0 %v4580
    %v4767 = vpop.f32.mrf.mxu0
    %v4768 = vadd.f32 %v4721, %v4767
    %4769 = vmatmul.f32.gmra.mxu0 %v4583
    %v4770 = vpop.f32.mrf.mxu0
    %v4771 = vadd.f32 %v4724, %v4770
    %4772 = vdwg.mxu0
    %v4773 = vadd.f32 %v3984, %v4744
    %v4774 = vadd.f32 %v3985, %v4747
    %v4775 = vadd.f32 %v3986, %v4750
    %v4776 = vadd.f32 %v3987, %v4753
    %v4777 = vadd.f32 %v3988, %v4756
    %v4778 = vadd.f32 %v3989, %v4759
    %v4779 = vadd.f32 %v3990, %v4762
    %v4780 = vadd.f32 %v3991, %v4765
    %v4781 = vadd.f32 %v3992, %v4768
    %v4782 = vadd.f32 %v3993, %v4771
    %v4783 = vld [vmem:[%s3] sm:$0xff]
    %v4784 = vld [vmem:[%s3 + $0x8] sm:$0xff]
    %v4785 = vld [vmem:[%s3 + $0x10] sm:$0xff]
    %v4786 = vld [vmem:[%s3 + $0x18] sm:$0xff]
    %v4787 = vld [vmem:[%s3 + $0x20] sm:$0xff]
    %v4788 = vld [vmem:[%s3 + $0x28] sm:$0xff]
    %v4789 = vld [vmem:[%s3 + $0x30] sm:$0xff]
    %v4790 = vld [vmem:[%s3 + $0x38] sm:$0xff]
    %v4791 = vld [vmem:[%s3 + $0x40] sm:$0xff]
    %v4792 = vld [vmem:[%s3 + $0x48] sm:$0xff]
    %v4793 = vld [vmem:[%s3 + $0x50] sm:$0xff]
    %v4794 = vld [vmem:[%s3 + $0x58] sm:$0xff]
    %v4795 = vld [vmem:[%s3 + $0x60] sm:$0xff]
    %v4796 = vld [vmem:[%s3 + $0x68] sm:$0xff]
    %v4797 = vld [vmem:[%s3 + $0x70] sm:$0xff]
    %v4798 = vld [vmem:[%s3 + $0x78] sm:$0xff]
    %v4799 = vld [vmem:[%s4] sm:$0x1]
    %v4801 = vperm.slane %v4799, 0
    %4803 = vmatpush.msra.mxu0 %v4798
    %4804 = vmatpush.msra.mxu0 %v4797
    %4805 = vmatpush.msra.mxu0 %v4796
    %4806 = vmatpush.msra.mxu0 %v4795
    %4807 = vmatpush.msra.mxu0 %v4794
    %4808 = vmatpush.msra.mxu0 %v4793
    %4809 = vmatpush.msra.mxu0 %v4792
    %4810 = vmatpush.msra.mxu0 %v4791
    %4811 = vmatpush.msra.mxu0 %v4790
    %4812 = vmatpush.msra.mxu0 %v4789
    %4813 = vmatpush.msra.mxu0 %v4788
    %4814 = vmatpush.msra.mxu0 %v4787
    %4815 = vmatpush.msra.mxu0 %v4786
    %4816 = vmatpush.msra.mxu0 %v4785
    %4817 = vmatpush.msra.mxu0 %v4784
    %4818 = vmatpush.msra.mxu0 %v4783
    %4819 = vmatmul.f32.gmra.mxu0 %v4773
    %v4820 = vpop.f32.mrf.mxu0
    %v4821 = vadd.f32 %v4801, %v4820
    %4822 = vmatmul.f32.gmra.mxu0 %v4774
    %v4823 = vpop.f32.mrf.mxu0
    %v4824 = vadd.f32 %v4801, %v4823
    %4825 = vmatmul.f32.gmra.mxu0 %v4775
    %v4826 = vpop.f32.mrf.mxu0
    %v4827 = vadd.f32 %v4801, %v4826
    %4828 = vmatmul.f32.gmra.mxu0 %v4776
    %v4829 = vpop.f32.mrf.mxu0
    %v4830 = vadd.f32 %v4801, %v4829
    %4831 = vmatmul.f32.gmra.mxu0 %v4777
    %v4832 = vpop.f32.mrf.mxu0
    %v4833 = vadd.f32 %v4801, %v4832
    %4834 = vmatmul.f32.gmra.mxu0 %v4778
    %v4835 = vpop.f32.mrf.mxu0
    %v4836 = vadd.f32 %v4801, %v4835
    %4837 = vmatmul.f32.gmra.mxu0 %v4779
    %v4838 = vpop.f32.mrf.mxu0
    %v4839 = vadd.f32 %v4801, %v4838
    %4840 = vmatmul.f32.gmra.mxu0 %v4780
    %v4841 = vpop.f32.mrf.mxu0
    %v4842 = vadd.f32 %v4801, %v4841
    %4843 = vmatmul.f32.gmra.mxu0 %v4781
    %v4844 = vpop.f32.mrf.mxu0
    %v4845 = vadd.f32 %v4801, %v4844
    %4846 = vmatmul.f32.gmra.mxu0 %v4782
    %v4847 = vpop.f32.mrf.mxu0
    %v4848 = vadd.f32 %v4801, %v4847
    %4849 = vdwg.mxu0
    %v4850 = vld [vmem:[%s1] sm:$0xff]
    %v4851 = vld [vmem:[%s1 + $0x8] sm:$0xff]
    %v4852 = vld [vmem:[%s1 + $0x10] sm:$0xff]
    %v4853 = vld [vmem:[%s1 + $0x18] sm:$0xff]
    %v4854 = vld [vmem:[%s1 + $0x20] sm:$0xff]
    %v4855 = vld [vmem:[%s1 + $0x28] sm:$0xff]
    %v4856 = vld [vmem:[%s1 + $0x30] sm:$0xff]
    %v4857 = vld [vmem:[%s1 + $0x38] sm:$0xff]
    %v4858 = vld [vmem:[%s1 + $0x40] sm:$0xff]
    %v4859 = vld [vmem:[%s1 + $0x48] sm:$0xff]
    %v4860 = vadd.f32 %v4821, %v4850
    %v4861 = vadd.f32 %v4824, %v4851
    %v4862 = vadd.f32 %v4827, %v4852
    %v4863 = vadd.f32 %v4830, %v4853
    %v4864 = vadd.f32 %v4833, %v4854
    %v4865 = vadd.f32 %v4836, %v4855
    %v4866 = vadd.f32 %v4839, %v4856
    %v4867 = vadd.f32 %v4842, %v4857
    %v4868 = vadd.f32 %v4845, %v4858
    %v4869 = vadd.f32 %v4848, %v4859
    %v4870 = vmul.f32 %v4860, %v4860
    %v4871 = vmul.f32 %v4861, %v4861
    %v4872 = vmul.f32 %v4862, %v4862
    %v4873 = vmul.f32 %v4863, %v4863
    %v4874 = vmul.f32 %v4864, %v4864
    %v4875 = vmul.f32 %v4865, %v4865
    %v4876 = vmul.f32 %v4866, %v4866
    %v4877 = vmul.f32 %v4867, %v4867
    %v4878 = vmul.f32 %v4868, %v4868
    %v4879 = vmul.f32 %v4869, %v4869
    %v4880 = vadd.f32 %v4870, %v4871
    %v4881 = vadd.f32 %v4880, %v4872
    %v4882 = vadd.f32 %v4881, %v4873
    %v4883 = vadd.f32 %v4882, %v4874
    %v4884 = vadd.f32 %v4883, %v4875
    %v4885 = vadd.f32 %v4884, %v4876
    %v4886 = vadd.f32 %v4885, %v4877
    %v4887 = vadd.f32 %v4886, %v4878
    %v4888 = vadd.f32 %v4887, %v4879
    %v4889 = vrot.slane %v4888, 4
    %v4890 = vadd.f32 %v4888, %v4889
    %v4891 = vrot.slane %v4890, 2
    %v4892 = vadd.f32 %v4890, %v4891
    %v4893 = vrot.slane %v4892, 1
    %v4894 = vadd.f32 %v4892, %v4893
    %vm4895 = vcmp.gt.f32.partialorder %v4894, 0.0
    %v4896 = vsel %vm4895, %v4894, 1.0
    %v4897 = vrsqrt.pop %v4896
    %v4898 = vmul.f32 %v4897, %v4896
    %v4899 = vmul.f32 %v4898, %v4897
    %v4900 = vmul.f32 0.5, %v4899
    %v4901 = vsub.f32 1.5, %v4900
    %v4902 = vmul.f32 %v4897, %v4901
    %vm4903 = vweird.f32 %v4896
    %vm4904 = vweird.f32 %v4897
    %vm4905 = vmor %vm4903, %vm4904
    %v4906 = vsel %vm4905, %v4897, %v4902
    %v4907 = vmul.f32 %v4860, %v4906
    %v4908 = vmul.f32 %v4861, %v4906
    %v4909 = vmul.f32 %v4862, %v4906
    %v4910 = vmul.f32 %v4863, %v4906
    %v4911 = vmul.f32 %v4864, %v4906
    %v4912 = vmul.f32 %v4865, %v4906
    %v4913 = vmul.f32 %v4866, %v4906
    %v4914 = vmul.f32 %v4867, %v4906
    %v4915 = vmul.f32 %v4868, %v4906
    %v4916 = vmul.f32 %v4869, %v4906
    %4917 = vst [vmem:[%s6] sm:$0xff] %v4907
    %4918 = vst [vmem:[%s6 + $0x8] sm:$0xff] %v4908
    %4919 = vst [vmem:[%s6 + $0x10] sm:$0xff] %v4909
    %4920 = vst [vmem:[%s6 + $0x18] sm:$0xff] %v4910
    %4921 = vst [vmem:[%s6 + $0x20] sm:$0xff] %v4911
    %4922 = vst [vmem:[%s6 + $0x28] sm:$0xff] %v4912
    %4923 = vst [vmem:[%s6 + $0x30] sm:$0xff] %v4913
    %4924 = vst [vmem:[%s6 + $0x38] sm:$0xff] %v4914
    %4925 = vst [vmem:[%s6 + $0x40] sm:$0xff] %v4915
    %4926 = vst [vmem:[%s6 + $0x48] sm:$0xff] %v4916
    // Predicated region
    $region30: #{phase_subnet_forward.1} parent=1 // pred_check
      _
    $region31: #{phase_subnet_forward.1} parent=1 // pred_check_branch
      %4928 = sbr.rel (0) target = $region33
    $region32: #{phase_subnet_forward.1} parent=1 // pred_region
      _
    $region33: #{phase_subnet_forward.1} parent=1 // pred_fallthru
      _
    // Predicated region
    $region34: #{phase_subnet_forward.1} parent=1 // pred_check
      _
    $region35: #{phase_subnet_forward.1} parent=1 // pred_check_branch
      %4930 = sbr.rel (0) target = $region37
    $region36: #{phase_subnet_forward.1} parent=1 // pred_region
      _
    $region37: #{phase_subnet_forward.1} parent=1 // pred_fallthru
      _
    %4931 = vsyncpa [#allocation4], 1

</llo_original>
